<compile_context>
chip_gen: v7x
topology: tpu7x:2x2x1
jax: 0.10.0
libtpu: 0.0.40
codegen_flags: <defaults>
</compile_context>

<pallas_src>
import jax
import jax.numpy as jnp
from jax import lax
from jax.experimental import pallas as pl
from jax.experimental.pallas import tpu as pltpu


B_TILE = 8          # batch tile (sublane-aligned); one grid step per tile
OUT_PAD = 128       # fc2 output padded to a full lane width


# ------------------------------- fused kernel ------------------------------ #

def _fused_net_kernel(p1_ref, w1_ref, b1_ref, w2_ref, b2_ref,
                      wfc1_ref, bfc1_ref, wfc2_ref, bfc2_ref,
                      o_ref, pooled_ref):
    """Whole Net forward for one batch tile.

    p1_ref    : (4*16*Bt, 27)  conv1 im2col patches, row = d*(16*Bt)+s*Bt+b
                                (d = 2x2 pool-window offset, s = pooled 4x4 pos)
    w1_ref    : (27, 256)      conv1 weight as im2col matrix (kh,kw,cin ordered)
    w2_ref    : (2304, 256)    conv2 weight; rows [t*256:(t+1)*256] = tap t=(kh*3+kw)
    wfc1_ref  : (256, 64)      fc1
    wfc2_ref  : (64, 128)      fc2, padded with zeros beyond num_actions
    o_ref     : (Bt, 128)      padded logits
    pooled_ref: (16*Bt, 256)   VMEM scratch holding maxpool1 output
    """
    bt = o_ref.shape[0]
    rows = 16 * bt

    # ---- conv1 (3x3 valid) + ReLU + maxpool1 (2x2), fused --------------------
    w1 = w1_ref[...]
    b1 = b1_ref[...]
    for d in range(4):                                   # 4 pool-window positions
        y = jnp.dot(p1_ref[d * rows:(d + 1) * rows, :], w1,
                    preferred_element_type=jnp.float32) + b1
        y = jnp.maximum(y, 0.0)
        if d == 0:
            pooled_ref[...] = y
        else:
            pooled_ref[...] = jnp.maximum(pooled_ref[...], y)
    # pooled_ref row = s*bt + b,  s = pi*4 + pj  (4x4 pooled spatial grid)

    # ---- conv2 (3x3 valid, no ReLU) as 9 accumulated K=256 matmuls -----------
    # For each tap (kh,kw), the 4 conv2 output positions read pooled rows
    # s in {base, base+1, base+4, base+5}; stack them into one (4*bt,256) LHS.
    acc = None
    for kh in range(3):
        for kw in range(3):
            base = kh * 4 + kw
            lhs = jnp.concatenate(
                [pooled_ref[base * bt:(base + 2) * bt, :],
                 pooled_ref[(base + 4) * bt:(base + 6) * bt, :]], axis=0)
            w2t = w2_ref[(kh * 3 + kw) * 256:(kh * 3 + kw + 1) * 256, :]
            prod = jnp.dot(lhs, w2t, preferred_element_type=jnp.float32)
            acc = prod if acc is None else acc + prod
    y2 = acc + b2_ref[...]                               # (4*bt, 256)

    # ---- maxpool2 (2x2 -> 1x1): max over the 4 output-position row blocks ----
    feat = jnp.maximum(jnp.maximum(y2[0:bt, :], y2[bt:2 * bt, :]),
                       jnp.maximum(y2[2 * bt:3 * bt, :], y2[3 * bt:4 * bt, :]))

    # ---- fc1 -> fc2 (lane-padded output) -------------------------------------
    h = jnp.dot(feat, wfc1_ref[...],
                preferred_element_type=jnp.float32) + bfc1_ref[...]
    o = jnp.dot(h, wfc2_ref[...],
                preferred_element_type=jnp.float32) + bfc2_ref[...]
    o_ref[...] = o.astype(o_ref.dtype)


# ------------------------------ host-side glue ------------------------------ #

def conv_weight_to_matrix(w):
    """PyTorch OIHW (Cout, Cin, kh, kw) -> im2col matrix (kh*kw*Cin, Cout)."""
    cout, cin, kh, kw = w.shape
    return jnp.transpose(w, (2, 3, 1, 0)).reshape(kh * kw * cin, cout)


def prepare_params(params):
    """One-time weight re-layout, hoisted OUT of the jitted forward."""
    a = params["wfc2"].shape[1]
    return {
        "w1m":   conv_weight_to_matrix(params["w1"]),                       # (27, 256)
        "b1":    params["b1"].reshape(1, -1),                               # (1, 256)
        "w2m":   conv_weight_to_matrix(params["w2"]),                       # (2304, 256)
        "b2":    params["b2"].reshape(1, -1),                               # (1, 256)
        "wfc1":  params["wfc1"],                                            # (256, 64)
        "bfc1":  params["bfc1"].reshape(1, -1),                             # (1, 64)
        "wfc2p": jnp.pad(params["wfc2"], ((0, 0), (0, OUT_PAD - a))),       # (64, 128)
        "bfc2p": jnp.pad(params["bfc2"], (0, OUT_PAD - a)).reshape(1, -1),  # (1, 128)
    }


def _build_conv1_patches(x_nhwc, b_tile):
    """x: (Bp, 10, 10, 3) -> (G, 4*16*b_tile, 27) conv1 patches grouped as
    (batch-tile g, pool-window offset d, pooled position s, local batch b)."""
    bp, h, w, c = x_nhwc.shape
    k = 3
    ho, wo = h - k + 1, w - k + 1                              # 8, 8
    cols = [x_nhwc[:, i:i + ho, j:j + wo, :] for i in range(k) for j in range(k)]
    p = jnp.stack(cols, axis=3).reshape(bp, ho, wo, k * k * c)  # (Bp,8,8,27) (kh,kw,cin)
    p = p.reshape(bp, 4, 2, 4, 2, k * k * c)                    # (b, pi, di, pj, dj, f)
    p = jnp.transpose(p, (2, 4, 1, 3, 0, 5))                    # (di, dj, pi, pj, b, f)
    p = p.reshape(4, 16, bp, k * k * c)                         # (d, s, b, f)
    g = bp // b_tile
    p = p.reshape(4, 16, g, b_tile, k * k * c)
    p = jnp.transpose(p, (2, 0, 1, 3, 4))                       # (g, d, s, b_local, f)
    return p.reshape(g, 4 * 16 * b_tile, k * k * c)


def net_forward(x_nchw, prepped):
    b = x_nchw.shape[0]
    bp = ((b + B_TILE - 1) // B_TILE) * B_TILE
    num_groups = bp // B_TILE

    x = jnp.transpose(x_nchw, (0, 2, 3, 1))                     # NCHW -> NHWC
    if bp != b:
        x = jnp.pad(x, ((0, bp - b), (0, 0), (0, 0), (0, 0)))
    p1 = _build_conv1_patches(x, B_TILE)                        # (G, 512, 27)

    full = lambda _g: (0, 0)
    out = pl.pallas_call(
        _fused_net_kernel,
        out_shape=jax.ShapeDtypeStruct((bp, OUT_PAD), jnp.float32),
        grid_spec=pltpu.PrefetchScalarGridSpec(
            num_scalar_prefetch=0,
            grid=(num_groups,),
            in_specs=[
                pl.BlockSpec((None, 4 * 16 * B_TILE, 27), lambda g: (g, 0, 0)),
                pl.BlockSpec((27, 256), full),
                pl.BlockSpec((1, 256), full),
                pl.BlockSpec((2304, 256), full),
                pl.BlockSpec((1, 256), full),
                pl.BlockSpec((256, 64), full),
                pl.BlockSpec((1, 64), full),
                pl.BlockSpec((64, OUT_PAD), full),
                pl.BlockSpec((1, OUT_PAD), full),
            ],
            out_specs=pl.BlockSpec((B_TILE, OUT_PAD), lambda g: (g, 0)),
            scratch_shapes=[pltpu.VMEM((16 * B_TILE, 256), jnp.float32)],
        ),
        compiler_params=pltpu.CompilerParams(
            dimension_semantics=("parallel",)),   # shard batch tiles across TCs (v7x)
    )(p1, prepped["w1m"], prepped["b1"], prepped["w2m"], prepped["b2"],
      prepped["wfc1"], prepped["bfc1"], prepped["wfc2p"], prepped["bfc2p"])

    num_actions = 4
    return out[:b, :num_actions]


# --------------------------- params / reference ----------------------------- #

def init_params(key):
    ks = jax.random.split(key, 8)
    scale = 0.05
    return {
        "w1":   scale * jax.random.normal(ks[0], (256, 3, 3, 3),   jnp.float32),  # OIHW
        "b1":   scale * jax.random.normal(ks[1], (256,),           jnp.float32),
        "w2":   scale * jax.random.normal(ks[2], (256, 256, 3, 3), jnp.float32),  # OIHW
        "b2":   scale * jax.random.normal(ks[3], (256,),           jnp.float32),
        "wfc1": scale * jax.random.normal(ks[4], (256, 64),        jnp.float32),  # (in, out)
        "bfc1": scale * jax.random.normal(ks[5], (64,),            jnp.float32),
        "wfc2": scale * jax.random.normal(ks[6], (64, 4),          jnp.float32),  # (in, out)
        "bfc2": scale * jax.random.normal(ks[7], (4,),             jnp.float32),
    }


def reference_forward(x_nchw, params):
    """Plain-JAX reference mirroring the PyTorch forward (eval mode)."""
    dn = ("NCHW", "OIHW", "NCHW")
    y = lax.conv_general_dilated(x_nchw, params["w1"], (1, 1), "VALID",
                                 dimension_numbers=dn)
    y = jnp.maximum(y + params["b1"][None, :, None, None], 0.0)
    y = lax.reduce_window(y, -jnp.inf, lax.max, (1, 1, 2, 2), (1, 1, 2, 2), "VALID")
    y = lax.conv_general_dilated(y, params["w2"], (1, 1), "VALID",
                                 dimension_numbers=dn)
    y = y + params["b2"][None, :, None, None]
    y = lax.reduce_window(y, -jnp.inf, lax.max, (1, 1, 2, 2), (1, 1, 2, 2), "VALID")
    y = y.reshape(y.shape[0], -1)                      # (B, 256)
    y = y @ params["wfc1"] + params["bfc1"]
    return y @ params["wfc2"] + params["bfc2"]


# ----------------------------------- main ------------------------------------ #

if __name__ == "__main__":
    key = jax.random.PRNGKey(0)
    kx, kp = jax.random.split(key)

    B = 2
    x = jax.random.uniform(kx, (B, 3, 10, 10), dtype=jnp.float32)  # NCHW like PyTorch
    params = init_params(kp)
    prepped = prepare_params(params)        # weight re-layout hoisted out of the jit

    fwd = jax.jit(net_forward)
    out = jax.block_until_ready(fwd(x, prepped))
    assert out.shape == (B, 4), out.shape

    ref = reference_forward(x, params)
    if not jnp.allclose(out, ref, rtol=1e-3, atol=1e-3):
        raise AssertionError(f"Pallas output mismatch vs reference:\n{out}\n{ref}")

    print("KERNEL_OK")
</pallas_src>

<mosaic_0001>
module attributes {stable_mosaic.version = 11 : i64} {
  func.func @_fused_net_kernel(%arg0: i32, %arg1: memref<1x512x27xf32, #tpu.memory_space<vmem>>, %arg2: memref<27x256xf32, #tpu.memory_space<vmem>>, %arg3: memref<1x256xf32, #tpu.memory_space<vmem>>, %arg4: memref<2304x256xf32, #tpu.memory_space<vmem>>, %arg5: memref<1x256xf32, #tpu.memory_space<vmem>>, %arg6: memref<256x64xf32, #tpu.memory_space<vmem>>, %arg7: memref<1x64xf32, #tpu.memory_space<vmem>>, %arg8: memref<64x128xf32, #tpu.memory_space<vmem>>, %arg9: memref<1x128xf32, #tpu.memory_space<vmem>>, %arg10: memref<8x128xf32, #tpu.memory_space<vmem>>, %arg11: memref<128x256xf32, #tpu.memory_space<vmem>>) attributes {dimension_semantics = [#tpu.dimension_semantics<parallel>], iteration_bounds = array<i64: 1>, scalar_prefetch = 0 : i64, scratch_operands = 1 : i64, tpu.core_type = #tpu.core_type<tc>, window_params = [{transform_indices = @transform_0, window_bounds = array<i64: 1, 512, 27>}, {pipeline_mode = #tpu.pipeline_mode<synchronous>, transform_indices = @transform_1, window_bounds = array<i64: 27, 256>}, {pipeline_mode = #tpu.pipeline_mode<synchronous>, transform_indices = @transform_2, window_bounds = array<i64: 1, 256>}, {pipeline_mode = #tpu.pipeline_mode<synchronous>, transform_indices = @transform_3, window_bounds = array<i64: 2304, 256>}, {pipeline_mode = #tpu.pipeline_mode<synchronous>, transform_indices = @transform_4, window_bounds = array<i64: 1, 256>}, {pipeline_mode = #tpu.pipeline_mode<synchronous>, transform_indices = @transform_5, window_bounds = array<i64: 256, 64>}, {pipeline_mode = #tpu.pipeline_mode<synchronous>, transform_indices = @transform_6, window_bounds = array<i64: 1, 64>}, {pipeline_mode = #tpu.pipeline_mode<synchronous>, transform_indices = @transform_7, window_bounds = array<i64: 64, 128>}, {pipeline_mode = #tpu.pipeline_mode<synchronous>, transform_indices = @transform_8, window_bounds = array<i64: 1, 128>}, {transform_indices = @transform_9, window_bounds = array<i64: 8, 128>}]} {
    %c0 = arith.constant 0 : index
    %c0_0 = arith.constant 0 : index
    %0 = vector.load %arg2[%c0, %c0_0] : memref<27x256xf32, #tpu.memory_space<vmem>>, vector<27x256xf32>
    %c0_1 = arith.constant 0 : index
    %c0_2 = arith.constant 0 : index
    %1 = vector.load %arg3[%c0_1, %c0_2] : memref<1x256xf32, #tpu.memory_space<vmem>>, vector<1x256xf32>
    %c0_3 = arith.constant 0 : index
    %c0_4 = arith.constant 0 : index
    %c0_5 = arith.constant 0 : index
    %2 = vector.load %arg1[%c0_3, %c0_4, %c0_5] : memref<1x512x27xf32, #tpu.memory_space<vmem>>, vector<1x128x27xf32>
    %3 = vector.shape_cast %2 : vector<1x128x27xf32> to vector<128x27xf32>
    %cst = arith.constant dense<0.000000e+00> : vector<128x256xf32>
    %4 = tpu.matmul %3, %0, %cst {dimension_numbers = #tpu.dot_dimension_numbers<[1], [0], [0], [1], [0, 0, 1, 1], [], []>} : vector<128x27xf32>, vector<27x256xf32>, vector<128x256xf32> -> vector<128x256xf32>
    %5 = vector.broadcast %1 : vector<1x256xf32> to vector<128x256xf32>
    %6 = arith.addf %4, %5 : vector<128x256xf32>
    %cst_6 = arith.constant 0.000000e+00 : f32
    %7 = vector.broadcast %cst_6 : f32 to vector<128x256xf32>
    %8 = arith.maximumf %6, %7 : vector<128x256xf32>
    %c0_7 = arith.constant 0 : index
    %c0_8 = arith.constant 0 : index
    %9 = vector.load %arg11[%c0_7, %c0_8] : memref<128x256xf32, #tpu.memory_space<vmem>>, vector<128x256xf32>
    tpu.vector_store %arg11[%c0_7, %c0_8], %8 {strides = array<i32>} : memref<128x256xf32, #tpu.memory_space<vmem>>, vector<128x256xf32>,
    %c0_9 = arith.constant 0 : index
    %c128 = arith.constant 128 : index
    %c0_10 = arith.constant 0 : index
    %10 = vector.load %arg1[%c0_9, %c128, %c0_10] : memref<1x512x27xf32, #tpu.memory_space<vmem>>, vector<1x128x27xf32>
    %11 = vector.shape_cast %10 : vector<1x128x27xf32> to vector<128x27xf32>
    %cst_11 = arith.constant dense<0.000000e+00> : vector<128x256xf32>
    %12 = tpu.matmul %11, %0, %cst_11 {dimension_numbers = #tpu.dot_dimension_numbers<[1], [0], [0], [1], [0, 0, 1, 1], [], []>} : vector<128x27xf32>, vector<27x256xf32>, vector<128x256xf32> -> vector<128x256xf32>
    %13 = vector.broadcast %1 : vector<1x256xf32> to vector<128x256xf32>
    %14 = arith.addf %12, %13 : vector<128x256xf32>
    %cst_12 = arith.constant 0.000000e+00 : f32
    %15 = vector.broadcast %cst_12 : f32 to vector<128x256xf32>
    %16 = arith.maximumf %14, %15 : vector<128x256xf32>
    %c0_13 = arith.constant 0 : index
    %c0_14 = arith.constant 0 : index
    %17 = vector.load %arg11[%c0_13, %c0_14] : memref<128x256xf32, #tpu.memory_space<vmem>>, vector<128x256xf32>
    %18 = arith.maximumf %17, %16 : vector<128x256xf32>
    %c0_15 = arith.constant 0 : index
    %c0_16 = arith.constant 0 : index
    %19 = vector.load %arg11[%c0_15, %c0_16] : memref<128x256xf32, #tpu.memory_space<vmem>>, vector<128x256xf32>
    tpu.vector_store %arg11[%c0_15, %c0_16], %18 {strides = array<i32>} : memref<128x256xf32, #tpu.memory_space<vmem>>, vector<128x256xf32>,
    %c0_17 = arith.constant 0 : index
    %c256 = arith.constant 256 : index
    %c0_18 = arith.constant 0 : index
    %20 = vector.load %arg1[%c0_17, %c256, %c0_18] : memref<1x512x27xf32, #tpu.memory_space<vmem>>, vector<1x128x27xf32>
    %21 = vector.shape_cast %20 : vector<1x128x27xf32> to vector<128x27xf32>
    %cst_19 = arith.constant dense<0.000000e+00> : vector<128x256xf32>
    %22 = tpu.matmul %21, %0, %cst_19 {dimension_numbers = #tpu.dot_dimension_numbers<[1], [0], [0], [1], [0, 0, 1, 1], [], []>} : vector<128x27xf32>, vector<27x256xf32>, vector<128x256xf32> -> vector<128x256xf32>
    %23 = vector.broadcast %1 : vector<1x256xf32> to vector<128x256xf32>
    %24 = arith.addf %22, %23 : vector<128x256xf32>
    %cst_20 = arith.constant 0.000000e+00 : f32
    %25 = vector.broadcast %cst_20 : f32 to vector<128x256xf32>
    %26 = arith.maximumf %24, %25 : vector<128x256xf32>
    %c0_21 = arith.constant 0 : index
    %c0_22 = arith.constant 0 : index
    %27 = vector.load %arg11[%c0_21, %c0_22] : memref<128x256xf32, #tpu.memory_space<vmem>>, vector<128x256xf32>
    %28 = arith.maximumf %27, %26 : vector<128x256xf32>
    %c0_23 = arith.constant 0 : index
    %c0_24 = arith.constant 0 : index
    %29 = vector.load %arg11[%c0_23, %c0_24] : memref<128x256xf32, #tpu.memory_space<vmem>>, vector<128x256xf32>
    tpu.vector_store %arg11[%c0_23, %c0_24], %28 {strides = array<i32>} : memref<128x256xf32, #tpu.memory_space<vmem>>, vector<128x256xf32>,
    %c0_25 = arith.constant 0 : index
    %c384 = arith.constant 384 : index
    %c0_26 = arith.constant 0 : index
    %30 = vector.load %arg1[%c0_25, %c384, %c0_26] : memref<1x512x27xf32, #tpu.memory_space<vmem>>, vector<1x128x27xf32>
    %31 = vector.shape_cast %30 : vector<1x128x27xf32> to vector<128x27xf32>
    %cst_27 = arith.constant dense<0.000000e+00> : vector<128x256xf32>
    %32 = tpu.matmul %31, %0, %cst_27 {dimension_numbers = #tpu.dot_dimension_numbers<[1], [0], [0], [1], [0, 0, 1, 1], [], []>} : vector<128x27xf32>, vector<27x256xf32>, vector<128x256xf32> -> vector<128x256xf32>
    %33 = vector.broadcast %1 : vector<1x256xf32> to vector<128x256xf32>
    %34 = arith.addf %32, %33 : vector<128x256xf32>
    %cst_28 = arith.constant 0.000000e+00 : f32
    %35 = vector.broadcast %cst_28 : f32 to vector<128x256xf32>
    %36 = arith.maximumf %34, %35 : vector<128x256xf32>
    %c0_29 = arith.constant 0 : index
    %c0_30 = arith.constant 0 : index
    %37 = vector.load %arg11[%c0_29, %c0_30] : memref<128x256xf32, #tpu.memory_space<vmem>>, vector<128x256xf32>
    %38 = arith.maximumf %37, %36 : vector<128x256xf32>
    %c0_31 = arith.constant 0 : index
    %c0_32 = arith.constant 0 : index
    %39 = vector.load %arg11[%c0_31, %c0_32] : memref<128x256xf32, #tpu.memory_space<vmem>>, vector<128x256xf32>
    tpu.vector_store %arg11[%c0_31, %c0_32], %38 {strides = array<i32>} : memref<128x256xf32, #tpu.memory_space<vmem>>, vector<128x256xf32>,
    %c0_33 = arith.constant 0 : index
    %c0_34 = arith.constant 0 : index
    %40 = vector.load %arg11[%c0_33, %c0_34] : memref<128x256xf32, #tpu.memory_space<vmem>>, vector<16x256xf32>
    %c32 = arith.constant 32 : index
    %c0_35 = arith.constant 0 : index
    %41 = vector.load %arg11[%c32, %c0_35] : memref<128x256xf32, #tpu.memory_space<vmem>>, vector<16x256xf32>
    %42 = tpu.concatenate %40, %41 in 0 : vector<16x256xf32>, vector<16x256xf32> -> vector<32x256xf32>
    %c0_36 = arith.constant 0 : index
    %c0_37 = arith.constant 0 : index
    %43 = vector.load %arg4[%c0_36, %c0_37] : memref<2304x256xf32, #tpu.memory_space<vmem>>, vector<256x256xf32>
    %cst_38 = arith.constant dense<0.000000e+00> : vector<32x256xf32>
    %44 = tpu.matmul %42, %43, %cst_38 {dimension_numbers = #tpu.dot_dimension_numbers<[1], [0], [0], [1], [0, 0, 1, 1], [], []>} : vector<32x256xf32>, vector<256x256xf32>, vector<32x256xf32> -> vector<32x256xf32>
    %c8 = arith.constant 8 : index
    %c0_39 = arith.constant 0 : index
    %45 = vector.load %arg11[%c8, %c0_39] : memref<128x256xf32, #tpu.memory_space<vmem>>, vector<16x256xf32>
    %c40 = arith.constant 40 : index
    %c0_40 = arith.constant 0 : index
    %46 = vector.load %arg11[%c40, %c0_40] : memref<128x256xf32, #tpu.memory_space<vmem>>, vector<16x256xf32>
    %47 = tpu.concatenate %45, %46 in 0 : vector<16x256xf32>, vector<16x256xf32> -> vector<32x256xf32>
    %c256_41 = arith.constant 256 : index
    %c0_42 = arith.constant 0 : index
    %48 = vector.load %arg4[%c256_41, %c0_42] : memref<2304x256xf32, #tpu.memory_space<vmem>>, vector<256x256xf32>
    %cst_43 = arith.constant dense<0.000000e+00> : vector<32x256xf32>
    %49 = tpu.matmul %47, %48, %cst_43 {dimension_numbers = #tpu.dot_dimension_numbers<[1], [0], [0], [1], [0, 0, 1, 1], [], []>} : vector<32x256xf32>, vector<256x256xf32>, vector<32x256xf32> -> vector<32x256xf32>
    %50 = arith.addf %44, %49 : vector<32x256xf32>
    %c16 = arith.constant 16 : index
    %c0_44 = arith.constant 0 : index
    %51 = vector.load %arg11[%c16, %c0_44] : memref<128x256xf32, #tpu.memory_space<vmem>>, vector<16x256xf32>
    %c48 = arith.constant 48 : index
    %c0_45 = arith.constant 0 : index
    %52 = vector.load %arg11[%c48, %c0_45] : memref<128x256xf32, #tpu.memory_space<vmem>>, vector<16x256xf32>
    %53 = tpu.concatenate %51, %52 in 0 : vector<16x256xf32>, vector<16x256xf32> -> vector<32x256xf32>
    %c512 = arith.constant 512 : index
    %c0_46 = arith.constant 0 : index
    %54 = vector.load %arg4[%c512, %c0_46] : memref<2304x256xf32, #tpu.memory_space<vmem>>, vector<256x256xf32>
    %cst_47 = arith.constant dense<0.000000e+00> : vector<32x256xf32>
    %55 = tpu.matmul %53, %54, %cst_47 {dimension_numbers = #tpu.dot_dimension_numbers<[1], [0], [0], [1], [0, 0, 1, 1], [], []>} : vector<32x256xf32>, vector<256x256xf32>, vector<32x256xf32> -> vector<32x256xf32>
    %56 = arith.addf %50, %55 : vector<32x256xf32>
    %c32_48 = arith.constant 32 : index
    %c0_49 = arith.constant 0 : index
    %57 = vector.load %arg11[%c32_48, %c0_49] : memref<128x256xf32, #tpu.memory_space<vmem>>, vector<16x256xf32>
    %c64 = arith.constant 64 : index
    %c0_50 = arith.constant 0 : index
    %58 = vector.load %arg11[%c64, %c0_50] : memref<128x256xf32, #tpu.memory_space<vmem>>, vector<16x256xf32>
    %59 = tpu.concatenate %57, %58 in 0 : vector<16x256xf32>, vector<16x256xf32> -> vector<32x256xf32>
    %c768 = arith.constant 768 : index
    %c0_51 = arith.constant 0 : index
    %60 = vector.load %arg4[%c768, %c0_51] : memref<2304x256xf32, #tpu.memory_space<vmem>>, vector<256x256xf32>
    %cst_52 = arith.constant dense<0.000000e+00> : vector<32x256xf32>
    %61 = tpu.matmul %59, %60, %cst_52 {dimension_numbers = #tpu.dot_dimension_numbers<[1], [0], [0], [1], [0, 0, 1, 1], [], []>} : vector<32x256xf32>, vector<256x256xf32>, vector<32x256xf32> -> vector<32x256xf32>
    %62 = arith.addf %56, %61 : vector<32x256xf32>
    %c40_53 = arith.constant 40 : index
    %c0_54 = arith.constant 0 : index
    %63 = vector.load %arg11[%c40_53, %c0_54] : memref<128x256xf32, #tpu.memory_space<vmem>>, vector<16x256xf32>
    %c72 = arith.constant 72 : index
    %c0_55 = arith.constant 0 : index
    %64 = vector.load %arg11[%c72, %c0_55] : memref<128x256xf32, #tpu.memory_space<vmem>>, vector<16x256xf32>
    %65 = tpu.concatenate %63, %64 in 0 : vector<16x256xf32>, vector<16x256xf32> -> vector<32x256xf32>
    %c1024 = arith.constant 1024 : index
    %c0_56 = arith.constant 0 : index
    %66 = vector.load %arg4[%c1024, %c0_56] : memref<2304x256xf32, #tpu.memory_space<vmem>>, vector<256x256xf32>
    %cst_57 = arith.constant dense<0.000000e+00> : vector<32x256xf32>
    %67 = tpu.matmul %65, %66, %cst_57 {dimension_numbers = #tpu.dot_dimension_numbers<[1], [0], [0], [1], [0, 0, 1, 1], [], []>} : vector<32x256xf32>, vector<256x256xf32>, vector<32x256xf32> -> vector<32x256xf32>
    %68 = arith.addf %62, %67 : vector<32x256xf32>
    %c48_58 = arith.constant 48 : index
    %c0_59 = arith.constant 0 : index
    %69 = vector.load %arg11[%c48_58, %c0_59] : memref<128x256xf32, #tpu.memory_space<vmem>>, vector<16x256xf32>
    %c80 = arith.constant 80 : index
    %c0_60 = arith.constant 0 : index
    %70 = vector.load %arg11[%c80, %c0_60] : memref<128x256xf32, #tpu.memory_space<vmem>>, vector<16x256xf32>
    %71 = tpu.concatenate %69, %70 in 0 : vector<16x256xf32>, vector<16x256xf32> -> vector<32x256xf32>
    %c1280 = arith.constant 1280 : index
    %c0_61 = arith.constant 0 : index
    %72 = vector.load %arg4[%c1280, %c0_61] : memref<2304x256xf32, #tpu.memory_space<vmem>>, vector<256x256xf32>
    %cst_62 = arith.constant dense<0.000000e+00> : vector<32x256xf32>
    %73 = tpu.matmul %71, %72, %cst_62 {dimension_numbers = #tpu.dot_dimension_numbers<[1], [0], [0], [1], [0, 0, 1, 1], [], []>} : vector<32x256xf32>, vector<256x256xf32>, vector<32x256xf32> -> vector<32x256xf32>
    %74 = arith.addf %68, %73 : vector<32x256xf32>
    %c64_63 = arith.constant 64 : index
    %c0_64 = arith.constant 0 : index
    %75 = vector.load %arg11[%c64_63, %c0_64] : memref<128x256xf32, #tpu.memory_space<vmem>>, vector<16x256xf32>
    %c96 = arith.constant 96 : index
    %c0_65 = arith.constant 0 : index
    %76 = vector.load %arg11[%c96, %c0_65] : memref<128x256xf32, #tpu.memory_space<vmem>>, vector<16x256xf32>
    %77 = tpu.concatenate %75, %76 in 0 : vector<16x256xf32>, vector<16x256xf32> -> vector<32x256xf32>
    %c1536 = arith.constant 1536 : index
    %c0_66 = arith.constant 0 : index
    %78 = vector.load %arg4[%c1536, %c0_66] : memref<2304x256xf32, #tpu.memory_space<vmem>>, vector<256x256xf32>
    %cst_67 = arith.constant dense<0.000000e+00> : vector<32x256xf32>
    %79 = tpu.matmul %77, %78, %cst_67 {dimension_numbers = #tpu.dot_dimension_numbers<[1], [0], [0], [1], [0, 0, 1, 1], [], []>} : vector<32x256xf32>, vector<256x256xf32>, vector<32x256xf32> -> vector<32x256xf32>
    %80 = arith.addf %74, %79 : vector<32x256xf32>
    %c72_68 = arith.constant 72 : index
    %c0_69 = arith.constant 0 : index
    %81 = vector.load %arg11[%c72_68, %c0_69] : memref<128x256xf32, #tpu.memory_space<vmem>>, vector<16x256xf32>
    %c104 = arith.constant 104 : index
    %c0_70 = arith.constant 0 : index
    %82 = vector.load %arg11[%c104, %c0_70] : memref<128x256xf32, #tpu.memory_space<vmem>>, vector<16x256xf32>
    %83 = tpu.concatenate %81, %82 in 0 : vector<16x256xf32>, vector<16x256xf32> -> vector<32x256xf32>
    %c1792 = arith.constant 1792 : index
    %c0_71 = arith.constant 0 : index
    %84 = vector.load %arg4[%c1792, %c0_71] : memref<2304x256xf32, #tpu.memory_space<vmem>>, vector<256x256xf32>
    %cst_72 = arith.constant dense<0.000000e+00> : vector<32x256xf32>
    %85 = tpu.matmul %83, %84, %cst_72 {dimension_numbers = #tpu.dot_dimension_numbers<[1], [0], [0], [1], [0, 0, 1, 1], [], []>} : vector<32x256xf32>, vector<256x256xf32>, vector<32x256xf32> -> vector<32x256xf32>
    %86 = arith.addf %80, %85 : vector<32x256xf32>
    %c80_73 = arith.constant 80 : index
    %c0_74 = arith.constant 0 : index
    %87 = vector.load %arg11[%c80_73, %c0_74] : memref<128x256xf32, #tpu.memory_space<vmem>>, vector<16x256xf32>
    %c112 = arith.constant 112 : index
    %c0_75 = arith.constant 0 : index
    %88 = vector.load %arg11[%c112, %c0_75] : memref<128x256xf32, #tpu.memory_space<vmem>>, vector<16x256xf32>
    %89 = tpu.concatenate %87, %88 in 0 : vector<16x256xf32>, vector<16x256xf32> -> vector<32x256xf32>
    %c2048 = arith.constant 2048 : index
    %c0_76 = arith.constant 0 : index
    %90 = vector.load %arg4[%c2048, %c0_76] : memref<2304x256xf32, #tpu.memory_space<vmem>>, vector<256x256xf32>
    %cst_77 = arith.constant dense<0.000000e+00> : vector<32x256xf32>
    %91 = tpu.matmul %89, %90, %cst_77 {dimension_numbers = #tpu.dot_dimension_numbers<[1], [0], [0], [1], [0, 0, 1, 1], [], []>} : vector<32x256xf32>, vector<256x256xf32>, vector<32x256xf32> -> vector<32x256xf32>
    %92 = arith.addf %86, %91 : vector<32x256xf32>
    %c0_78 = arith.constant 0 : index
    %c0_79 = arith.constant 0 : index
    %93 = vector.load %arg5[%c0_78, %c0_79] : memref<1x256xf32, #tpu.memory_space<vmem>>, vector<1x256xf32>
    %94 = vector.broadcast %93 : vector<1x256xf32> to vector<32x256xf32>
    %95 = arith.addf %92, %94 : vector<32x256xf32>
    %96 = vector.extract_strided_slice %95 {offsets = [0, 0], sizes = [8, 256], strides = [1, 1]} : vector<32x256xf32> to vector<8x256xf32>
    %97 = vector.extract_strided_slice %95 {offsets = [8, 0], sizes = [8, 256], strides = [1, 1]} : vector<32x256xf32> to vector<8x256xf32>
    %98 = arith.maximumf %96, %97 : vector<8x256xf32>
    %99 = vector.extract_strided_slice %95 {offsets = [16, 0], sizes = [8, 256], strides = [1, 1]} : vector<32x256xf32> to vector<8x256xf32>
    %100 = vector.extract_strided_slice %95 {offsets = [24, 0], sizes = [8, 256], strides = [1, 1]} : vector<32x256xf32> to vector<8x256xf32>
    %101 = arith.maximumf %99, %100 : vector<8x256xf32>
    %102 = arith.maximumf %98, %101 : vector<8x256xf32>
    %c0_80 = arith.constant 0 : index
    %c0_81 = arith.constant 0 : index
    %103 = vector.load %arg6[%c0_80, %c0_81] : memref<256x64xf32, #tpu.memory_space<vmem>>, vector<256x64xf32>
    %cst_82 = arith.constant dense<0.000000e+00> : vector<8x64xf32>
    %104 = tpu.matmul %102, %103, %cst_82 {dimension_numbers = #tpu.dot_dimension_numbers<[1], [0], [0], [1], [0, 0, 1, 1], [], []>} : vector<8x256xf32>, vector<256x64xf32>, vector<8x64xf32> -> vector<8x64xf32>
    %c0_83 = arith.constant 0 : index
    %c0_84 = arith.constant 0 : index
    %105 = vector.load %arg7[%c0_83, %c0_84] : memref<1x64xf32, #tpu.memory_space<vmem>>, vector<1x64xf32>
    %106 = vector.broadcast %105 : vector<1x64xf32> to vector<8x64xf32>
    %107 = arith.addf %104, %106 : vector<8x64xf32>
    %c0_85 = arith.constant 0 : index
    %c0_86 = arith.constant 0 : index
    %108 = vector.load %arg8[%c0_85, %c0_86] : memref<64x128xf32, #tpu.memory_space<vmem>>, vector<64x128xf32>
    %cst_87 = arith.constant dense<0.000000e+00> : vector<8x128xf32>
    %109 = tpu.matmul %107, %108, %cst_87 {dimension_numbers = #tpu.dot_dimension_numbers<[1], [0], [0], [1], [0, 0, 1, 1], [], []>} : vector<8x64xf32>, vector<64x128xf32>, vector<8x128xf32> -> vector<8x128xf32>
    %c0_88 = arith.constant 0 : index
    %c0_89 = arith.constant 0 : index
    %110 = vector.load %arg9[%c0_88, %c0_89] : memref<1x128xf32, #tpu.memory_space<vmem>>, vector<1x128xf32>
    %111 = vector.broadcast %110 : vector<1x128xf32> to vector<8x128xf32>
    %112 = arith.addf %109, %111 : vector<8x128xf32>
    %c0_90 = arith.constant 0 : index
    %c0_91 = arith.constant 0 : index
    %113 = vector.load %arg10[%c0_90, %c0_91] : memref<8x128xf32, #tpu.memory_space<vmem>>, vector<8x128xf32>
    tpu.vector_store %arg10[%c0_90, %c0_91], %112 {strides = array<i32>} : memref<8x128xf32, #tpu.memory_space<vmem>>, vector<8x128xf32>,
    return
  }
  func.func @transform_0(%arg0: i32) -> (i32, i32, i32) {
    %c0_i32 = arith.constant 0 : i32
    %c0_i32_0 = arith.constant 0 : i32
    %c0_i32_1 = arith.constant 0 : i32
    return %arg0, %c0_i32, %c0_i32_0 : i32, i32, i32
  }
  func.func @transform_1(%arg0: i32) -> (i32, i32) {
    %c0_i32 = arith.constant 0 : i32
    %c0_i32_0 = arith.constant 0 : i32
    %c0_i32_1 = arith.constant 0 : i32
    return %c0_i32, %c0_i32_0 : i32, i32
  }
  func.func @transform_2(%arg0: i32) -> (i32, i32) {
    %c0_i32 = arith.constant 0 : i32
    %c0_i32_0 = arith.constant 0 : i32
    %c0_i32_1 = arith.constant 0 : i32
    return %c0_i32, %c0_i32_0 : i32, i32
  }
  func.func @transform_3(%arg0: i32) -> (i32, i32) {
    %c0_i32 = arith.constant 0 : i32
    %c0_i32_0 = arith.constant 0 : i32
    %c0_i32_1 = arith.constant 0 : i32
    return %c0_i32, %c0_i32_0 : i32, i32
  }
  func.func @transform_4(%arg0: i32) -> (i32, i32) {
    %c0_i32 = arith.constant 0 : i32
    %c0_i32_0 = arith.constant 0 : i32
    %c0_i32_1 = arith.constant 0 : i32
    return %c0_i32, %c0_i32_0 : i32, i32
  }
  func.func @transform_5(%arg0: i32) -> (i32, i32) {
    %c0_i32 = arith.constant 0 : i32
    %c0_i32_0 = arith.constant 0 : i32
    %c0_i32_1 = arith.constant 0 : i32
    return %c0_i32, %c0_i32_0 : i32, i32
  }
  func.func @transform_6(%arg0: i32) -> (i32, i32) {
    %c0_i32 = arith.constant 0 : i32
    %c0_i32_0 = arith.constant 0 : i32
    %c0_i32_1 = arith.constant 0 : i32
    return %c0_i32, %c0_i32_0 : i32, i32
  }
  func.func @transform_7(%arg0: i32) -> (i32, i32) {
    %c0_i32 = arith.constant 0 : i32
    %c0_i32_0 = arith.constant 0 : i32
    %c0_i32_1 = arith.constant 0 : i32
    return %c0_i32, %c0_i32_0 : i32, i32
  }
  func.func @transform_8(%arg0: i32) -> (i32, i32) {
    %c0_i32 = arith.constant 0 : i32
    %c0_i32_0 = arith.constant 0 : i32
    %c0_i32_1 = arith.constant 0 : i32
    return %c0_i32, %c0_i32_0 : i32, i32
  }
  func.func @transform_9(%arg0: i32) -> (i32, i32) {
    %c0_i32 = arith.constant 0 : i32
    %c0_i32_0 = arith.constant 0 : i32
    return %arg0, %c0_i32 : i32, i32
  }
}

</mosaic_0001>

<llo_original>
// kernel: net_forward.1
$region0: #{net_forward.1}
  #allocation0 [shape = 'u32[]', space=smem, size = 0x4, offset = 0x4, fixed_abs, tag = 'smem constant byte address 0x4 - core index']
  #allocation1 [shape = 'u32[144,128]{1,0:T(1,128)}', space=vmem, size = 0x12000, scoped, tag = 'internal scratch']
  #allocation2 [shape = 'f32[128,256]{1,0:T(8,128)}', space=vmem, size = 0x20000, scoped, tag = 'scratch operand']
  %s0 = inlined_call_operand.vmem [shape: f32[1,512,27], index: 0, kind: input, shape index: {}]
  %s1 = inlined_call_operand.vmem [shape: f32[27,256], index: 1, kind: input, shape index: {}]
  %s2 = inlined_call_operand.vmem [shape: f32[1,256], index: 2, kind: input, shape index: {}]
  %s3 = inlined_call_operand.vmem [shape: f32[2304,256], index: 3, kind: input, shape index: {}]
  %s4 = inlined_call_operand.vmem [shape: f32[1,256], index: 4, kind: input, shape index: {}]
  %s5 = inlined_call_operand.vmem [shape: f32[256,64], index: 5, kind: input, shape index: {}]
  %s6 = inlined_call_operand.vmem [shape: f32[1,64], index: 6, kind: input, shape index: {}]
  %s7 = inlined_call_operand.vmem [shape: f32[64,128], index: 7, kind: input, shape index: {}]
  %s8 = inlined_call_operand.vmem [shape: f32[1,128], index: 8, kind: input, shape index: {}]
  %s9 = inlined_call_operand.vmem [shape: f32[8,128], index: 9, kind: output, shape index: {}]
  %s10 = sld [smem:[#allocation0]]
  $region46: #{net_forward.1} parent=0
    _
  %s12 = ssub.s32 1, %s10
  %s13 = scalar_select 0, %s12, %s10
  // Predicated region
  $region2: #{net_forward.1} parent=0 // pred_check
    _
  $region3: #{net_forward.1} parent=0 // pred_check_branch
    %15 = sbr.rel (0) target = $region5
  $region4: #{net_forward.1} parent=0 // pred_region
    _
  $region5: #{net_forward.1} parent=0 // pred_fallthru
    _
  // Predicated region
  $region6: #{net_forward.1} parent=0 // pred_check
    _
  $region7: #{net_forward.1} parent=0 // pred_check_branch
    %17 = sbr.rel (0) target = $region9
  $region8: #{net_forward.1} parent=0 // pred_region
    _
  $region9: #{net_forward.1} parent=0 // pred_fallthru
    _
  // Predicated region
  $region10: #{net_forward.1} parent=0 // pred_check
    _
  $region11: #{net_forward.1} parent=0 // pred_check_branch
    %19 = sbr.rel (0) target = $region13
  $region12: #{net_forward.1} parent=0 // pred_region
    _
  $region13: #{net_forward.1} parent=0 // pred_fallthru
    _
  // Predicated region
  $region14: #{net_forward.1} parent=0 // pred_check
    _
  $region15: #{net_forward.1} parent=0 // pred_check_branch
    %21 = sbr.rel (0) target = $region17
  $region16: #{net_forward.1} parent=0 // pred_region
    _
  $region17: #{net_forward.1} parent=0 // pred_fallthru
    _
  // Predicated region
  $region18: #{net_forward.1} parent=0 // pred_check
    _
  $region19: #{net_forward.1} parent=0 // pred_check_branch
    %23 = sbr.rel (0) target = $region21
  $region20: #{net_forward.1} parent=0 // pred_region
    _
  $region21: #{net_forward.1} parent=0 // pred_fallthru
    _
  // Predicated region
  $region22: #{net_forward.1} parent=0 // pred_check
    _
  $region23: #{net_forward.1} parent=0 // pred_check_branch
    %25 = sbr.rel (0) target = $region25
  $region24: #{net_forward.1} parent=0 // pred_region
    _
  $region25: #{net_forward.1} parent=0 // pred_fallthru
    _
  // Predicated region
  $region26: #{net_forward.1} parent=0 // pred_check
    _
  $region27: #{net_forward.1} parent=0 // pred_check_branch
    %27 = sbr.rel (0) target = $region29
  $region28: #{net_forward.1} parent=0 // pred_region
    _
  $region29: #{net_forward.1} parent=0 // pred_fallthru
    _
  // Predicated region
  $region30: #{net_forward.1} parent=0 // pred_check
    _
  $region31: #{net_forward.1} parent=0 // pred_check_branch
    %29 = sbr.rel (0) target = $region33
  $region32: #{net_forward.1} parent=0 // pred_region
    _
  $region33: #{net_forward.1} parent=0 // pred_fallthru
    _
  // Predicated region
  $region34: #{net_forward.1} parent=0 // pred_check
    _
  $region35: #{net_forward.1} parent=0 // pred_check_branch
    %31 = sbr.rel (0) target = $region37
  $region36: #{net_forward.1} parent=0 // pred_region
    _
  $region37: #{net_forward.1} parent=0 // pred_fallthru
    _
  %v32 = vld [vmem:[%s1] sm:$0xff]
  %v33 = vld [vmem:[%s1 + $0x8] sm:$0xff]
  %v34 = vld [vmem:[%s1 + $0x10] sm:$0xff]
  %v35 = vld [vmem:[%s1 + $0x18] sm:$0xff]
  %v36 = vld [vmem:[%s1 + $0x20] sm:$0xff]
  %v37 = vld [vmem:[%s1 + $0x28] sm:$0xff]
  %v38 = vld [vmem:[%s1 + $0x30] sm:$0x7]
  %v39 = vld [vmem:[%s1 + $0x38] sm:$0x7]
  %v40 = vld [vmem:[%s2] sm:$0x3]
  %v41 = vld [vmem:[%s0] sm:$0xff]
  %v42 = vld [vmem:[%s0 + $0x8] sm:$0xff]
  %v43 = vld [vmem:[%s0 + $0x10] sm:$0xff]
  %v44 = vld [vmem:[%s0 + $0x18] sm:$0xff]
  %v45 = vld [vmem:[%s0 + $0x20] sm:$0xff]
  %v46 = vld [vmem:[%s0 + $0x28] sm:$0xff]
  %v47 = vld [vmem:[%s0 + $0x30] sm:$0xff]
  %v48 = vld [vmem:[%s0 + $0x38] sm:$0xff]
  %v49 = vld [vmem:[%s0 + $0x40] sm:$0xff]
  %v50 = vld [vmem:[%s0 + $0x48] sm:$0xff]
  %v51 = vld [vmem:[%s0 + $0x50] sm:$0xff]
  %v52 = vld [vmem:[%s0 + $0x58] sm:$0xff]
  %v53 = vld [vmem:[%s0 + $0x60] sm:$0xff]
  %v54 = vld [vmem:[%s0 + $0x68] sm:$0xff]
  %v55 = vld [vmem:[%s0 + $0x70] sm:$0xff]
  %v56 = vld [vmem:[%s0 + $0x78] sm:$0xff]
  %v58 = vlaneseq
  %v59 = vshrl.u32 %v58, 7
  %v60 = vsub.s32 0, %v59
  %v61 = vrot.slane %v40, %v60
  %v62 = vlaneseq
  %v63 = vshrl.u32 %v62, 7
  %v64 = vsub.s32 1, %v63
  %v65 = vrot.slane %v40, %v64
  %vm68 = vcmask 220160
  %v70 = vsel %vm68, %v41, 0
  %v73 = vsel %vm68, %v42, 0
  %v76 = vsel %vm68, %v43, 0
  %v79 = vsel %vm68, %v44, 0
  %v82 = vsel %vm68, %v45, 0
  %v85 = vsel %vm68, %v46, 0
  %v88 = vsel %vm68, %v47, 0
  %v91 = vsel %vm68, %v48, 0
  %v94 = vsel %vm68, %v49, 0
  %v97 = vsel %vm68, %v50, 0
  %v100 = vsel %vm68, %v51, 0
  %v103 = vsel %vm68, %v52, 0
  %v106 = vsel %vm68, %v53, 0
  %v109 = vsel %vm68, %v54, 0
  %v112 = vsel %vm68, %v55, 0
  %v115 = vsel %vm68, %v56, 0
  %vm117 = vcmask 1042432
  %v119 = vsel %vm117, %v38, 0
  %v122 = vsel %vm117, %v39, 0
  %124 = vmatprep.subr.mxu0 %v33
  %125 = vmatpush1.msra.mxu0 %v32
  %126 = vmatprep.subr.mxu0 %v35
  %127 = vmatpush1.msra.mxu0 %v34
  %128 = vmatprep.subr.mxu0 %v37
  %129 = vmatpush1.msra.mxu0 %v36
  %130 = vmatprep.subr.mxu0 %v122
  %131 = vmatpush1.msra.mxu0 %v119
  %132 = vmatprep.subr.mxu0 0.0
  %133 = vmatpush1.msra.mxu0 0.0
  %134 = vmatprep.subr.mxu0 0.0
  %135 = vmatpush1.msra.mxu0 0.0
  %136 = vmatprep.subr.mxu0 0.0
  %137 = vmatpush1.msra.mxu0 0.0
  %138 = vmatprep.subr.mxu0 0.0
  %139 = vmatpush1.msra.mxu0 0.0
  %140 = vmatprep.subr.mxu0 0.0
  %141 = vmatpush1.msra.mxu0 0.0
  %142 = vmatprep.subr.mxu0 0.0
  %143 = vmatpush1.msra.mxu0 0.0
  %144 = vmatprep.subr.mxu0 0.0
  %145 = vmatpush1.msra.mxu0 0.0
  %146 = vmatprep.subr.mxu0 0.0
  %147 = vmatpush1.msra.mxu0 0.0
  %148 = vmatprep.subr.mxu0 0.0
  %149 = vmatpush1.msra.mxu0 0.0
  %150 = vmatprep.subr.mxu0 0.0
  %151 = vmatpush1.msra.mxu0 0.0
  %152 = vmatprep.subr.mxu0 0.0
  %153 = vmatpush1.msra.mxu0 0.0
  %154 = vmatprep.subr.mxu0 0.0
  %155 = vmatpush1.msra.mxu0 0.0
  %156 = vmatprep.subr.mxu0 0.0
  %157 = vmatpush1.msra.mxu0 0.0
  %158 = vmatprep.subr.mxu0 0.0
  %159 = vmatpush1.msra.mxu0 0.0
  %160 = vmatprep.subr.mxu0 0.0
  %161 = vmatpush1.msra.mxu0 0.0
  %162 = vmatprep.subr.mxu0 0.0
  %163 = vmatpush1.msra.mxu0 0.0
  %164 = vmatprep.subr.mxu0 0.0
  %165 = vmatpush1.msra.mxu0 0.0
  %166 = vmatprep.subr.mxu0 0.0
  %167 = vmatpush1.msra.mxu0 0.0
  %168 = vmatprep.subr.mxu0 0.0
  %169 = vmatpush1.msra.mxu0 0.0
  %170 = vmatprep.subr.mxu0 0.0
  %171 = vmatpush1.msra.mxu0 0.0
  %172 = vmatprep.subr.mxu0 0.0
  %173 = vmatpush1.msra.mxu0 0.0
  %174 = vmatprep.subr.mxu0 0.0
  %175 = vmatpush1.msra.mxu0 0.0
  %176 = vmatprep.subr.mxu0 0.0
  %177 = vmatpush1.msra.mxu0 0.0
  %178 = vmatprep.subr.mxu0 0.0
  %179 = vmatpush1.msra.mxu0 0.0
  %180 = vmatprep.subr.mxu0 0.0
  %181 = vmatpush1.msra.mxu0 0.0
  %182 = vmatprep.subr.mxu0 0.0
  %183 = vmatpush1.msra.mxu0 0.0
  %184 = vmatprep.subr.mxu0 0.0
  %185 = vmatpush1.msra.mxu0 0.0
  %186 = vmatprep.subr.mxu0 0.0
  %187 = vmatpush1.msra.mxu0 0.0
  %188 = vmatprep.mubr.f32.mxu0 0.0
  %189 = vmatmul.mubr.f32.gmra.mrb[0].mxu0 %v70
  %v190 = vpop.f32.mrb[0].mxu0
  %v191 = vadd.f32 %v61, %v190
  %v192 = vpop.f32.mrb[0].mxu0
  %v193 = vadd.f32 %v65, %v192
  %194 = vmatprep.mubr.f32.mxu0 0.0
  %195 = vmatmul.mubr.f32.gmra.mrb[0].mxu0 %v73
  %v196 = vpop.f32.mrb[0].mxu0
  %v197 = vadd.f32 %v61, %v196
  %v198 = vpop.f32.mrb[0].mxu0
  %v199 = vadd.f32 %v65, %v198
  %200 = vmatprep.mubr.f32.mxu0 0.0
  %201 = vmatmul.mubr.f32.gmra.mrb[0].mxu0 %v76
  %v202 = vpop.f32.mrb[0].mxu0
  %v203 = vadd.f32 %v61, %v202
  %v204 = vpop.f32.mrb[0].mxu0
  %v205 = vadd.f32 %v65, %v204
  %206 = vmatprep.mubr.f32.mxu0 0.0
  %207 = vmatmul.mubr.f32.gmra.mrb[0].mxu0 %v79
  %v208 = vpop.f32.mrb[0].mxu0
  %v209 = vadd.f32 %v61, %v208
  %v210 = vpop.f32.mrb[0].mxu0
  %v211 = vadd.f32 %v65, %v210
  %212 = vmatprep.mubr.f32.mxu0 0.0
  %213 = vmatmul.mubr.f32.gmra.mrb[0].mxu0 %v82
  %v214 = vpop.f32.mrb[0].mxu0
  %v215 = vadd.f32 %v61, %v214
  %v216 = vpop.f32.mrb[0].mxu0
  %v217 = vadd.f32 %v65, %v216
  %218 = vmatprep.mubr.f32.mxu0 0.0
  %219 = vmatmul.mubr.f32.gmra.mrb[0].mxu0 %v85
  %v220 = vpop.f32.mrb[0].mxu0
  %v221 = vadd.f32 %v61, %v220
  %v222 = vpop.f32.mrb[0].mxu0
  %v223 = vadd.f32 %v65, %v222
  %224 = vmatprep.mubr.f32.mxu0 0.0
  %225 = vmatmul.mubr.f32.gmra.mrb[0].mxu0 %v88
  %v226 = vpop.f32.mrb[0].mxu0
  %v227 = vadd.f32 %v61, %v226
  %v228 = vpop.f32.mrb[0].mxu0
  %v229 = vadd.f32 %v65, %v228
  %230 = vmatprep.mubr.f32.mxu0 0.0
  %231 = vmatmul.mubr.f32.gmra.mrb[0].mxu0 %v91
  %v232 = vpop.f32.mrb[0].mxu0
  %v233 = vadd.f32 %v61, %v232
  %v234 = vpop.f32.mrb[0].mxu0
  %v235 = vadd.f32 %v65, %v234
  %236 = vmatprep.mubr.f32.mxu0 0.0
  %237 = vmatmul.mubr.f32.gmra.mrb[0].mxu0 %v94
  %v238 = vpop.f32.mrb[0].mxu0
  %v239 = vadd.f32 %v61, %v238
  %v240 = vpop.f32.mrb[0].mxu0
  %v241 = vadd.f32 %v65, %v240
  %242 = vmatprep.mubr.f32.mxu0 0.0
  %243 = vmatmul.mubr.f32.gmra.mrb[0].mxu0 %v97
  %v244 = vpop.f32.mrb[0].mxu0
  %v245 = vadd.f32 %v61, %v244
  %v246 = vpop.f32.mrb[0].mxu0
  %v247 = vadd.f32 %v65, %v246
  %248 = vmatprep.mubr.f32.mxu0 0.0
  %249 = vmatmul.mubr.f32.gmra.mrb[0].mxu0 %v100
  %v250 = vpop.f32.mrb[0].mxu0
  %v251 = vadd.f32 %v61, %v250
  %v252 = vpop.f32.mrb[0].mxu0
  %v253 = vadd.f32 %v65, %v252
  %254 = vmatprep.mubr.f32.mxu0 0.0
  %255 = vmatmul.mubr.f32.gmra.mrb[0].mxu0 %v103
  %v256 = vpop.f32.mrb[0].mxu0
  %v257 = vadd.f32 %v61, %v256
  %v258 = vpop.f32.mrb[0].mxu0
  %v259 = vadd.f32 %v65, %v258
  %260 = vmatprep.mubr.f32.mxu0 0.0
  %261 = vmatmul.mubr.f32.gmra.mrb[0].mxu0 %v106
  %v262 = vpop.f32.mrb[0].mxu0
  %v263 = vadd.f32 %v61, %v262
  %v264 = vpop.f32.mrb[0].mxu0
  %v265 = vadd.f32 %v65, %v264
  %266 = vmatprep.mubr.f32.mxu0 0.0
  %267 = vmatmul.mubr.f32.gmra.mrb[0].mxu0 %v109
  %v268 = vpop.f32.mrb[0].mxu0
  %v269 = vadd.f32 %v61, %v268
  %v270 = vpop.f32.mrb[0].mxu0
  %v271 = vadd.f32 %v65, %v270
  %272 = vmatprep.mubr.f32.mxu0 0.0
  %273 = vmatmul.mubr.f32.gmra.mrb[0].mxu0 %v112
  %v274 = vpop.f32.mrb[0].mxu0
  %v275 = vadd.f32 %v61, %v274
  %v276 = vpop.f32.mrb[0].mxu0
  %v277 = vadd.f32 %v65, %v276
  %278 = vmatprep.mubr.f32.mxu0 0.0
  %279 = vmatmul.mubr.f32.gmra.mrb[0].mxu0 %v115
  %v280 = vpop.f32.mrb[0].mxu0
  %v281 = vadd.f32 %v61, %v280
  %v282 = vpop.f32.mrb[0].mxu0
  %v283 = vadd.f32 %v65, %v282
  %284 = vdwg.mxu0
  %v285 = vmax.f32 %v191, 0.0
  %v286 = vmax.f32 %v193, 0.0
  %v287 = vmax.f32 %v197, 0.0
  %v288 = vmax.f32 %v199, 0.0
  %v289 = vmax.f32 %v203, 0.0
  %v290 = vmax.f32 %v205, 0.0
  %v291 = vmax.f32 %v209, 0.0
  %v292 = vmax.f32 %v211, 0.0
  %v293 = vmax.f32 %v215, 0.0
  %v294 = vmax.f32 %v217, 0.0
  %v295 = vmax.f32 %v221, 0.0
  %v296 = vmax.f32 %v223, 0.0
  %v297 = vmax.f32 %v227, 0.0
  %v298 = vmax.f32 %v229, 0.0
  %v299 = vmax.f32 %v233, 0.0
  %v300 = vmax.f32 %v235, 0.0
  %v301 = vmax.f32 %v239, 0.0
  %v302 = vmax.f32 %v241, 0.0
  %v303 = vmax.f32 %v245, 0.0
  %v304 = vmax.f32 %v247, 0.0
  %v305 = vmax.f32 %v251, 0.0
  %v306 = vmax.f32 %v253, 0.0
  %v307 = vmax.f32 %v257, 0.0
  %v308 = vmax.f32 %v259, 0.0
  %v309 = vmax.f32 %v263, 0.0
  %v310 = vmax.f32 %v265, 0.0
  %v311 = vmax.f32 %v269, 0.0
  %v312 = vmax.f32 %v271, 0.0
  %v313 = vmax.f32 %v275, 0.0
  %v314 = vmax.f32 %v277, 0.0
  %v315 = vmax.f32 %v281, 0.0
  %v316 = vmax.f32 %v283, 0.0
  %317 = vst [vmem:[#allocation2] sm:$0xff] %v285
  %318 = vst [vmem:[#allocation2 + $0x8] sm:$0xff] %v286
  %319 = vst [vmem:[#allocation2 + $0x10] sm:$0xff] %v287
  %320 = vst [vmem:[#allocation2 + $0x18] sm:$0xff] %v288
  %321 = vst [vmem:[#allocation2 + $0x20] sm:$0xff] %v289
  %322 = vst [vmem:[#allocation2 + $0x28] sm:$0xff] %v290
  %323 = vst [vmem:[#allocation2 + $0x30] sm:$0xff] %v291
  %324 = vst [vmem:[#allocation2 + $0x38] sm:$0xff] %v292
  %325 = vst [vmem:[#allocation2 + $0x40] sm:$0xff] %v293
  %326 = vst [vmem:[#allocation2 + $0x48] sm:$0xff] %v294
  %327 = vst [vmem:[#allocation2 + $0x50] sm:$0xff] %v295
  %328 = vst [vmem:[#allocation2 + $0x58] sm:$0xff] %v296
  %329 = vst [vmem:[#allocation2 + $0x60] sm:$0xff] %v297
  %330 = vst [vmem:[#allocation2 + $0x68] sm:$0xff] %v298
  %331 = vst [vmem:[#allocation2 + $0x70] sm:$0xff] %v299
  %332 = vst [vmem:[#allocation2 + $0x78] sm:$0xff] %v300
  %333 = vst [vmem:[#allocation2 + $0x80] sm:$0xff] %v301
  %334 = vst [vmem:[#allocation2 + $0x88] sm:$0xff] %v302
  %335 = vst [vmem:[#allocation2 + $0x90] sm:$0xff] %v303
  %336 = vst [vmem:[#allocation2 + $0x98] sm:$0xff] %v304
  %337 = vst [vmem:[#allocation2 + $0xa0] sm:$0xff] %v305
  %338 = vst [vmem:[#allocation2 + $0xa8] sm:$0xff] %v306
  %339 = vst [vmem:[#allocation2 + $0xb0] sm:$0xff] %v307
  %340 = vst [vmem:[#allocation2 + $0xb8] sm:$0xff] %v308
  %341 = vst [vmem:[#allocation2 + $0xc0] sm:$0xff] %v309
  %342 = vst [vmem:[#allocation2 + $0xc8] sm:$0xff] %v310
  %343 = vst [vmem:[#allocation2 + $0xd0] sm:$0xff] %v311
  %344 = vst [vmem:[#allocation2 + $0xd8] sm:$0xff] %v312
  %345 = vst [vmem:[#allocation2 + $0xe0] sm:$0xff] %v313
  %346 = vst [vmem:[#allocation2 + $0xe8] sm:$0xff] %v314
  %347 = vst [vmem:[#allocation2 + $0xf0] sm:$0xff] %v315
  %348 = vst [vmem:[#allocation2 + $0xf8] sm:$0xff] %v316
  %v349 = vld [vmem:[%s0 + $0x80] sm:$0xff]
  %v350 = vld [vmem:[%s0 + $0x88] sm:$0xff]
  %v351 = vld [vmem:[%s0 + $0x90] sm:$0xff]
  %v352 = vld [vmem:[%s0 + $0x98] sm:$0xff]
  %v353 = vld [vmem:[%s0 + $0xa0] sm:$0xff]
  %v354 = vld [vmem:[%s0 + $0xa8] sm:$0xff]
  %v355 = vld [vmem:[%s0 + $0xb0] sm:$0xff]
  %v356 = vld [vmem:[%s0 + $0xb8] sm:$0xff]
  %v357 = vld [vmem:[%s0 + $0xc0] sm:$0xff]
  %v358 = vld [vmem:[%s0 + $0xc8] sm:$0xff]
  %v359 = vld [vmem:[%s0 + $0xd0] sm:$0xff]
  %v360 = vld [vmem:[%s0 + $0xd8] sm:$0xff]
  %v361 = vld [vmem:[%s0 + $0xe0] sm:$0xff]
  %v362 = vld [vmem:[%s0 + $0xe8] sm:$0xff]
  %v363 = vld [vmem:[%s0 + $0xf0] sm:$0xff]
  %v364 = vld [vmem:[%s0 + $0xf8] sm:$0xff]
  %v366 = vsel %vm68, %v349, 0
  %v369 = vsel %vm68, %v350, 0
  %v372 = vsel %vm68, %v351, 0
  %v375 = vsel %vm68, %v352, 0
  %v378 = vsel %vm68, %v353, 0
  %v381 = vsel %vm68, %v354, 0
  %v384 = vsel %vm68, %v355, 0
  %v387 = vsel %vm68, %v356, 0
  %v390 = vsel %vm68, %v357, 0
  %v393 = vsel %vm68, %v358, 0
  %v396 = vsel %vm68, %v359, 0
  %v399 = vsel %vm68, %v360, 0
  %v402 = vsel %vm68, %v361, 0
  %v405 = vsel %vm68, %v362, 0
  %v408 = vsel %vm68, %v363, 0
  %v411 = vsel %vm68, %v364, 0
  %413 = vmatprep.subr.mxu0 %v33
  %414 = vmatpush1.msra.mxu0 %v32
  %415 = vmatprep.subr.mxu0 %v35
  %416 = vmatpush1.msra.mxu0 %v34
  %417 = vmatprep.subr.mxu0 %v37
  %418 = vmatpush1.msra.mxu0 %v36
  %419 = vmatprep.subr.mxu0 %v122
  %420 = vmatpush1.msra.mxu0 %v119
  %421 = vmatprep.subr.mxu0 0.0
  %422 = vmatpush1.msra.mxu0 0.0
  %423 = vmatprep.subr.mxu0 0.0
  %424 = vmatpush1.msra.mxu0 0.0
  %425 = vmatprep.subr.mxu0 0.0
  %426 = vmatpush1.msra.mxu0 0.0
  %427 = vmatprep.subr.mxu0 0.0
  %428 = vmatpush1.msra.mxu0 0.0
  %429 = vmatprep.subr.mxu0 0.0
  %430 = vmatpush1.msra.mxu0 0.0
  %431 = vmatprep.subr.mxu0 0.0
  %432 = vmatpush1.msra.mxu0 0.0
  %433 = vmatprep.subr.mxu0 0.0
  %434 = vmatpush1.msra.mxu0 0.0
  %435 = vmatprep.subr.mxu0 0.0
  %436 = vmatpush1.msra.mxu0 0.0
  %437 = vmatprep.subr.mxu0 0.0
  %438 = vmatpush1.msra.mxu0 0.0
  %439 = vmatprep.subr.mxu0 0.0
  %440 = vmatpush1.msra.mxu0 0.0
  %441 = vmatprep.subr.mxu0 0.0
  %442 = vmatpush1.msra.mxu0 0.0
  %443 = vmatprep.subr.mxu0 0.0
  %444 = vmatpush1.msra.mxu0 0.0
  %445 = vmatprep.subr.mxu0 0.0
  %446 = vmatpush1.msra.mxu0 0.0
  %447 = vmatprep.subr.mxu0 0.0
  %448 = vmatpush1.msra.mxu0 0.0
  %449 = vmatprep.subr.mxu0 0.0
  %450 = vmatpush1.msra.mxu0 0.0
  %451 = vmatprep.subr.mxu0 0.0
  %452 = vmatpush1.msra.mxu0 0.0
  %453 = vmatprep.subr.mxu0 0.0
  %454 = vmatpush1.msra.mxu0 0.0
  %455 = vmatprep.subr.mxu0 0.0
  %456 = vmatpush1.msra.mxu0 0.0
  %457 = vmatprep.subr.mxu0 0.0
  %458 = vmatpush1.msra.mxu0 0.0
  %459 = vmatprep.subr.mxu0 0.0
  %460 = vmatpush1.msra.mxu0 0.0
  %461 = vmatprep.subr.mxu0 0.0
  %462 = vmatpush1.msra.mxu0 0.0
  %463 = vmatprep.subr.mxu0 0.0
  %464 = vmatpush1.msra.mxu0 0.0
  %465 = vmatprep.subr.mxu0 0.0
  %466 = vmatpush1.msra.mxu0 0.0
  %467 = vmatprep.subr.mxu0 0.0
  %468 = vmatpush1.msra.mxu0 0.0
  %469 = vmatprep.subr.mxu0 0.0
  %470 = vmatpush1.msra.mxu0 0.0
  %471 = vmatprep.subr.mxu0 0.0
  %472 = vmatpush1.msra.mxu0 0.0
  %473 = vmatprep.subr.mxu0 0.0
  %474 = vmatpush1.msra.mxu0 0.0
  %475 = vmatprep.subr.mxu0 0.0
  %476 = vmatpush1.msra.mxu0 0.0
  %477 = vmatprep.mubr.f32.mxu0 0.0
  %478 = vmatmul.mubr.f32.gmra.mrb[0].mxu0 %v366
  %v479 = vpop.f32.mrb[0].mxu0
  %v480 = vadd.f32 %v61, %v479
  %v481 = vpop.f32.mrb[0].mxu0
  %v482 = vadd.f32 %v65, %v481
  %483 = vmatprep.mubr.f32.mxu0 0.0
  %484 = vmatmul.mubr.f32.gmra.mrb[0].mxu0 %v369
  %v485 = vpop.f32.mrb[0].mxu0
  %v486 = vadd.f32 %v61, %v485
  %v487 = vpop.f32.mrb[0].mxu0
  %v488 = vadd.f32 %v65, %v487
  %489 = vmatprep.mubr.f32.mxu0 0.0
  %490 = vmatmul.mubr.f32.gmra.mrb[0].mxu0 %v372
  %v491 = vpop.f32.mrb[0].mxu0
  %v492 = vadd.f32 %v61, %v491
  %v493 = vpop.f32.mrb[0].mxu0
  %v494 = vadd.f32 %v65, %v493
  %495 = vmatprep.mubr.f32.mxu0 0.0
  %496 = vmatmul.mubr.f32.gmra.mrb[0].mxu0 %v375
  %v497 = vpop.f32.mrb[0].mxu0
  %v498 = vadd.f32 %v61, %v497
  %v499 = vpop.f32.mrb[0].mxu0
  %v500 = vadd.f32 %v65, %v499
  %501 = vmatprep.mubr.f32.mxu0 0.0
  %502 = vmatmul.mubr.f32.gmra.mrb[0].mxu0 %v378
  %v503 = vpop.f32.mrb[0].mxu0
  %v504 = vadd.f32 %v61, %v503
  %v505 = vpop.f32.mrb[0].mxu0
  %v506 = vadd.f32 %v65, %v505
  %507 = vmatprep.mubr.f32.mxu0 0.0
  %508 = vmatmul.mubr.f32.gmra.mrb[0].mxu0 %v381
  %v509 = vpop.f32.mrb[0].mxu0
  %v510 = vadd.f32 %v61, %v509
  %v511 = vpop.f32.mrb[0].mxu0
  %v512 = vadd.f32 %v65, %v511
  %513 = vmatprep.mubr.f32.mxu0 0.0
  %514 = vmatmul.mubr.f32.gmra.mrb[0].mxu0 %v384
  %v515 = vpop.f32.mrb[0].mxu0
  %v516 = vadd.f32 %v61, %v515
  %v517 = vpop.f32.mrb[0].mxu0
  %v518 = vadd.f32 %v65, %v517
  %519 = vmatprep.mubr.f32.mxu0 0.0
  %520 = vmatmul.mubr.f32.gmra.mrb[0].mxu0 %v387
  %v521 = vpop.f32.mrb[0].mxu0
  %v522 = vadd.f32 %v61, %v521
  %v523 = vpop.f32.mrb[0].mxu0
  %v524 = vadd.f32 %v65, %v523
  %525 = vmatprep.mubr.f32.mxu0 0.0
  %526 = vmatmul.mubr.f32.gmra.mrb[0].mxu0 %v390
  %v527 = vpop.f32.mrb[0].mxu0
  %v528 = vadd.f32 %v61, %v527
  %v529 = vpop.f32.mrb[0].mxu0
  %v530 = vadd.f32 %v65, %v529
  %531 = vmatprep.mubr.f32.mxu0 0.0
  %532 = vmatmul.mubr.f32.gmra.mrb[0].mxu0 %v393
  %v533 = vpop.f32.mrb[0].mxu0
  %v534 = vadd.f32 %v61, %v533
  %v535 = vpop.f32.mrb[0].mxu0
  %v536 = vadd.f32 %v65, %v535
  %537 = vmatprep.mubr.f32.mxu0 0.0
  %538 = vmatmul.mubr.f32.gmra.mrb[0].mxu0 %v396
  %v539 = vpop.f32.mrb[0].mxu0
  %v540 = vadd.f32 %v61, %v539
  %v541 = vpop.f32.mrb[0].mxu0
  %v542 = vadd.f32 %v65, %v541
  %543 = vmatprep.mubr.f32.mxu0 0.0
  %544 = vmatmul.mubr.f32.gmra.mrb[0].mxu0 %v399
  %v545 = vpop.f32.mrb[0].mxu0
  %v546 = vadd.f32 %v61, %v545
  %v547 = vpop.f32.mrb[0].mxu0
  %v548 = vadd.f32 %v65, %v547
  %549 = vmatprep.mubr.f32.mxu0 0.0
  %550 = vmatmul.mubr.f32.gmra.mrb[0].mxu0 %v402
  %v551 = vpop.f32.mrb[0].mxu0
  %v552 = vadd.f32 %v61, %v551
  %v553 = vpop.f32.mrb[0].mxu0
  %v554 = vadd.f32 %v65, %v553
  %555 = vmatprep.mubr.f32.mxu0 0.0
  %556 = vmatmul.mubr.f32.gmra.mrb[0].mxu0 %v405
  %v557 = vpop.f32.mrb[0].mxu0
  %v558 = vadd.f32 %v61, %v557
  %v559 = vpop.f32.mrb[0].mxu0
  %v560 = vadd.f32 %v65, %v559
  %561 = vmatprep.mubr.f32.mxu0 0.0
  %562 = vmatmul.mubr.f32.gmra.mrb[0].mxu0 %v408
  %v563 = vpop.f32.mrb[0].mxu0
  %v564 = vadd.f32 %v61, %v563
  %v565 = vpop.f32.mrb[0].mxu0
  %v566 = vadd.f32 %v65, %v565
  %567 = vmatprep.mubr.f32.mxu0 0.0
  %568 = vmatmul.mubr.f32.gmra.mrb[0].mxu0 %v411
  %v569 = vpop.f32.mrb[0].mxu0
  %v570 = vadd.f32 %v61, %v569
  %v571 = vpop.f32.mrb[0].mxu0
  %v572 = vadd.f32 %v65, %v571
  %573 = vdwg.mxu0
  %v574 = vmax.f32 %v480, 0.0
  %v575 = vmax.f32 %v482, 0.0
  %v576 = vmax.f32 %v486, 0.0
  %v577 = vmax.f32 %v488, 0.0
  %v578 = vmax.f32 %v492, 0.0
  %v579 = vmax.f32 %v494, 0.0
  %v580 = vmax.f32 %v498, 0.0
  %v581 = vmax.f32 %v500, 0.0
  %v582 = vmax.f32 %v504, 0.0
  %v583 = vmax.f32 %v506, 0.0
  %v584 = vmax.f32 %v510, 0.0
  %v585 = vmax.f32 %v512, 0.0
  %v586 = vmax.f32 %v516, 0.0
  %v587 = vmax.f32 %v518, 0.0
  %v588 = vmax.f32 %v522, 0.0
  %v589 = vmax.f32 %v524, 0.0
  %v590 = vmax.f32 %v528, 0.0
  %v591 = vmax.f32 %v530, 0.0
  %v592 = vmax.f32 %v534, 0.0
  %v593 = vmax.f32 %v536, 0.0
  %v594 = vmax.f32 %v540, 0.0
  %v595 = vmax.f32 %v542, 0.0
  %v596 = vmax.f32 %v546, 0.0
  %v597 = vmax.f32 %v548, 0.0
  %v598 = vmax.f32 %v552, 0.0
  %v599 = vmax.f32 %v554, 0.0
  %v600 = vmax.f32 %v558, 0.0
  %v601 = vmax.f32 %v560, 0.0
  %v602 = vmax.f32 %v564, 0.0
  %v603 = vmax.f32 %v566, 0.0
  %v604 = vmax.f32 %v570, 0.0
  %v605 = vmax.f32 %v572, 0.0
  %v606 = vld [vmem:[#allocation2] sm:$0xff]
  %v607 = vld [vmem:[#allocation2 + $0x8] sm:$0xff]
  %v608 = vld [vmem:[#allocation2 + $0x10] sm:$0xff]
  %v609 = vld [vmem:[#allocation2 + $0x18] sm:$0xff]
  %v610 = vld [vmem:[#allocation2 + $0x20] sm:$0xff]
  %v611 = vld [vmem:[#allocation2 + $0x28] sm:$0xff]
  %v612 = vld [vmem:[#allocation2 + $0x30] sm:$0xff]
  %v613 = vld [vmem:[#allocation2 + $0x38] sm:$0xff]
  %v614 = vld [vmem:[#allocation2 + $0x40] sm:$0xff]
  %v615 = vld [vmem:[#allocation2 + $0x48] sm:$0xff]
  %v616 = vld [vmem:[#allocation2 + $0x50] sm:$0xff]
  %v617 = vld [vmem:[#allocation2 + $0x58] sm:$0xff]
  %v618 = vld [vmem:[#allocation2 + $0x60] sm:$0xff]
  %v619 = vld [vmem:[#allocation2 + $0x68] sm:$0xff]
  %v620 = vld [vmem:[#allocation2 + $0x70] sm:$0xff]
  %v621 = vld [vmem:[#allocation2 + $0x78] sm:$0xff]
  %v622 = vld [vmem:[#allocation2 + $0x80] sm:$0xff]
  %v623 = vld [vmem:[#allocation2 + $0x88] sm:$0xff]
  %v624 = vld [vmem:[#allocation2 + $0x90] sm:$0xff]
  %v625 = vld [vmem:[#allocation2 + $0x98] sm:$0xff]
  %v626 = vld [vmem:[#allocation2 + $0xa0] sm:$0xff]
  %v627 = vld [vmem:[#allocation2 + $0xa8] sm:$0xff]
  %v628 = vld [vmem:[#allocation2 + $0xb0] sm:$0xff]
  %v629 = vld [vmem:[#allocation2 + $0xb8] sm:$0xff]
  %v630 = vld [vmem:[#allocation2 + $0xc0] sm:$0xff]
  %v631 = vld [vmem:[#allocation2 + $0xc8] sm:$0xff]
  %v632 = vld [vmem:[#allocation2 + $0xd0] sm:$0xff]
  %v633 = vld [vmem:[#allocation2 + $0xd8] sm:$0xff]
  %v634 = vld [vmem:[#allocation2 + $0xe0] sm:$0xff]
  %v635 = vld [vmem:[#allocation2 + $0xe8] sm:$0xff]
  %v636 = vld [vmem:[#allocation2 + $0xf0] sm:$0xff]
  %v637 = vld [vmem:[#allocation2 + $0xf8] sm:$0xff]
  %v638 = vmax.f32 %v606, %v574
  %v639 = vmax.f32 %v607, %v575
  %v640 = vmax.f32 %v608, %v576
  %v641 = vmax.f32 %v609, %v577
  %v642 = vmax.f32 %v610, %v578
  %v643 = vmax.f32 %v611, %v579
  %v644 = vmax.f32 %v612, %v580
  %v645 = vmax.f32 %v613, %v581
  %v646 = vmax.f32 %v614, %v582
  %v647 = vmax.f32 %v615, %v583
  %v648 = vmax.f32 %v616, %v584
  %v649 = vmax.f32 %v617, %v585
  %v650 = vmax.f32 %v618, %v586
  %v651 = vmax.f32 %v619, %v587
  %v652 = vmax.f32 %v620, %v588
  %v653 = vmax.f32 %v621, %v589
  %v654 = vmax.f32 %v622, %v590
  %v655 = vmax.f32 %v623, %v591
  %v656 = vmax.f32 %v624, %v592
  %v657 = vmax.f32 %v625, %v593
  %v658 = vmax.f32 %v626, %v594
  %v659 = vmax.f32 %v627, %v595
  %v660 = vmax.f32 %v628, %v596
  %v661 = vmax.f32 %v629, %v597
  %v662 = vmax.f32 %v630, %v598
  %v663 = vmax.f32 %v631, %v599
  %v664 = vmax.f32 %v632, %v600
  %v665 = vmax.f32 %v633, %v601
  %v666 = vmax.f32 %v634, %v602
  %v667 = vmax.f32 %v635, %v603
  %v668 = vmax.f32 %v636, %v604
  %v669 = vmax.f32 %v637, %v605
  %670 = vst [vmem:[#allocation2] sm:$0xff] %v638
  %671 = vst [vmem:[#allocation2 + $0x8] sm:$0xff] %v639
  %672 = vst [vmem:[#allocation2 + $0x10] sm:$0xff] %v640
  %673 = vst [vmem:[#allocation2 + $0x18] sm:$0xff] %v641
  %674 = vst [vmem:[#allocation2 + $0x20] sm:$0xff] %v642
  %675 = vst [vmem:[#allocation2 + $0x28] sm:$0xff] %v643
  %676 = vst [vmem:[#allocation2 + $0x30] sm:$0xff] %v644
  %677 = vst [vmem:[#allocation2 + $0x38] sm:$0xff] %v645
  %678 = vst [vmem:[#allocation2 + $0x40] sm:$0xff] %v646
  %679 = vst [vmem:[#allocation2 + $0x48] sm:$0xff] %v647
  %680 = vst [vmem:[#allocation2 + $0x50] sm:$0xff] %v648
  %681 = vst [vmem:[#allocation2 + $0x58] sm:$0xff] %v649
  %682 = vst [vmem:[#allocation2 + $0x60] sm:$0xff] %v650
  %683 = vst [vmem:[#allocation2 + $0x68] sm:$0xff] %v651
  %684 = vst [vmem:[#allocation2 + $0x70] sm:$0xff] %v652
  %685 = vst [vmem:[#allocation2 + $0x78] sm:$0xff] %v653
  %686 = vst [vmem:[#allocation2 + $0x80] sm:$0xff] %v654
  %687 = vst [vmem:[#allocation2 + $0x88] sm:$0xff] %v655
  %688 = vst [vmem:[#allocation2 + $0x90] sm:$0xff] %v656
  %689 = vst [vmem:[#allocation2 + $0x98] sm:$0xff] %v657
  %690 = vst [vmem:[#allocation2 + $0xa0] sm:$0xff] %v658
  %691 = vst [vmem:[#allocation2 + $0xa8] sm:$0xff] %v659
  %692 = vst [vmem:[#allocation2 + $0xb0] sm:$0xff] %v660
  %693 = vst [vmem:[#allocation2 + $0xb8] sm:$0xff] %v661
  %694 = vst [vmem:[#allocation2 + $0xc0] sm:$0xff] %v662
  %695 = vst [vmem:[#allocation2 + $0xc8] sm:$0xff] %v663
  %696 = vst [vmem:[#allocation2 + $0xd0] sm:$0xff] %v664
  %697 = vst [vmem:[#allocation2 + $0xd8] sm:$0xff] %v665
  %698 = vst [vmem:[#allocation2 + $0xe0] sm:$0xff] %v666
  %699 = vst [vmem:[#allocation2 + $0xe8] sm:$0xff] %v667
  %700 = vst [vmem:[#allocation2 + $0xf0] sm:$0xff] %v668
  %701 = vst [vmem:[#allocation2 + $0xf8] sm:$0xff] %v669
  %v702 = vld [vmem:[%s0 + $0x100] sm:$0xff]
  %v703 = vld [vmem:[%s0 + $0x108] sm:$0xff]
  %v704 = vld [vmem:[%s0 + $0x110] sm:$0xff]
  %v705 = vld [vmem:[%s0 + $0x118] sm:$0xff]
  %v706 = vld [vmem:[%s0 + $0x120] sm:$0xff]
  %v707 = vld [vmem:[%s0 + $0x128] sm:$0xff]
  %v708 = vld [vmem:[%s0 + $0x130] sm:$0xff]
  %v709 = vld [vmem:[%s0 + $0x138] sm:$0xff]
  %v710 = vld [vmem:[%s0 + $0x140] sm:$0xff]
  %v711 = vld [vmem:[%s0 + $0x148] sm:$0xff]
  %v712 = vld [vmem:[%s0 + $0x150] sm:$0xff]
  %v713 = vld [vmem:[%s0 + $0x158] sm:$0xff]
  %v714 = vld [vmem:[%s0 + $0x160] sm:$0xff]
  %v715 = vld [vmem:[%s0 + $0x168] sm:$0xff]
  %v716 = vld [vmem:[%s0 + $0x170] sm:$0xff]
  %v717 = vld [vmem:[%s0 + $0x178] sm:$0xff]
  %v719 = vsel %vm68, %v702, 0
  %v722 = vsel %vm68, %v703, 0
  %v725 = vsel %vm68, %v704, 0
  %v728 = vsel %vm68, %v705, 0
  %v731 = vsel %vm68, %v706, 0
  %v734 = vsel %vm68, %v707, 0
  %v737 = vsel %vm68, %v708, 0
  %v740 = vsel %vm68, %v709, 0
  %v743 = vsel %vm68, %v710, 0
  %v746 = vsel %vm68, %v711, 0
  %v749 = vsel %vm68, %v712, 0
  %v752 = vsel %vm68, %v713, 0
  %v755 = vsel %vm68, %v714, 0
  %v758 = vsel %vm68, %v715, 0
  %v761 = vsel %vm68, %v716, 0
  %v764 = vsel %vm68, %v717, 0
  %766 = vmatprep.subr.mxu0 %v33
  %767 = vmatpush1.msra.mxu0 %v32
  %768 = vmatprep.subr.mxu0 %v35
  %769 = vmatpush1.msra.mxu0 %v34
  %770 = vmatprep.subr.mxu0 %v37
  %771 = vmatpush1.msra.mxu0 %v36
  %772 = vmatprep.subr.mxu0 %v122
  %773 = vmatpush1.msra.mxu0 %v119
  %774 = vmatprep.subr.mxu0 0.0
  %775 = vmatpush1.msra.mxu0 0.0
  %776 = vmatprep.subr.mxu0 0.0
  %777 = vmatpush1.msra.mxu0 0.0
  %778 = vmatprep.subr.mxu0 0.0
  %779 = vmatpush1.msra.mxu0 0.0
  %780 = vmatprep.subr.mxu0 0.0
  %781 = vmatpush1.msra.mxu0 0.0
  %782 = vmatprep.subr.mxu0 0.0
  %783 = vmatpush1.msra.mxu0 0.0
  %784 = vmatprep.subr.mxu0 0.0
  %785 = vmatpush1.msra.mxu0 0.0
  %786 = vmatprep.subr.mxu0 0.0
  %787 = vmatpush1.msra.mxu0 0.0
  %788 = vmatprep.subr.mxu0 0.0
  %789 = vmatpush1.msra.mxu0 0.0
  %790 = vmatprep.subr.mxu0 0.0
  %791 = vmatpush1.msra.mxu0 0.0
  %792 = vmatprep.subr.mxu0 0.0
  %793 = vmatpush1.msra.mxu0 0.0
  %794 = vmatprep.subr.mxu0 0.0
  %795 = vmatpush1.msra.mxu0 0.0
  %796 = vmatprep.subr.mxu0 0.0
  %797 = vmatpush1.msra.mxu0 0.0
  %798 = vmatprep.subr.mxu0 0.0
  %799 = vmatpush1.msra.mxu0 0.0
  %800 = vmatprep.subr.mxu0 0.0
  %801 = vmatpush1.msra.mxu0 0.0
  %802 = vmatprep.subr.mxu0 0.0
  %803 = vmatpush1.msra.mxu0 0.0
  %804 = vmatprep.subr.mxu0 0.0
  %805 = vmatpush1.msra.mxu0 0.0
  %806 = vmatprep.subr.mxu0 0.0
  %807 = vmatpush1.msra.mxu0 0.0
  %808 = vmatprep.subr.mxu0 0.0
  %809 = vmatpush1.msra.mxu0 0.0
  %810 = vmatprep.subr.mxu0 0.0
  %811 = vmatpush1.msra.mxu0 0.0
  %812 = vmatprep.subr.mxu0 0.0
  %813 = vmatpush1.msra.mxu0 0.0
  %814 = vmatprep.subr.mxu0 0.0
  %815 = vmatpush1.msra.mxu0 0.0
  %816 = vmatprep.subr.mxu0 0.0
  %817 = vmatpush1.msra.mxu0 0.0
  %818 = vmatprep.subr.mxu0 0.0
  %819 = vmatpush1.msra.mxu0 0.0
  %820 = vmatprep.subr.mxu0 0.0
  %821 = vmatpush1.msra.mxu0 0.0
  %822 = vmatprep.subr.mxu0 0.0
  %823 = vmatpush1.msra.mxu0 0.0
  %824 = vmatprep.subr.mxu0 0.0
  %825 = vmatpush1.msra.mxu0 0.0
  %826 = vmatprep.subr.mxu0 0.0
  %827 = vmatpush1.msra.mxu0 0.0
  %828 = vmatprep.subr.mxu0 0.0
  %829 = vmatpush1.msra.mxu0 0.0
  %830 = vmatprep.mubr.f32.mxu0 0.0
  %831 = vmatmul.mubr.f32.gmra.mrb[0].mxu0 %v719
  %v832 = vpop.f32.mrb[0].mxu0
  %v833 = vadd.f32 %v61, %v832
  %v834 = vpop.f32.mrb[0].mxu0
  %v835 = vadd.f32 %v65, %v834
  %836 = vmatprep.mubr.f32.mxu0 0.0
  %837 = vmatmul.mubr.f32.gmra.mrb[0].mxu0 %v722
  %v838 = vpop.f32.mrb[0].mxu0
  %v839 = vadd.f32 %v61, %v838
  %v840 = vpop.f32.mrb[0].mxu0
  %v841 = vadd.f32 %v65, %v840
  %842 = vmatprep.mubr.f32.mxu0 0.0
  %843 = vmatmul.mubr.f32.gmra.mrb[0].mxu0 %v725
  %v844 = vpop.f32.mrb[0].mxu0
  %v845 = vadd.f32 %v61, %v844
  %v846 = vpop.f32.mrb[0].mxu0
  %v847 = vadd.f32 %v65, %v846
  %848 = vmatprep.mubr.f32.mxu0 0.0
  %849 = vmatmul.mubr.f32.gmra.mrb[0].mxu0 %v728
  %v850 = vpop.f32.mrb[0].mxu0
  %v851 = vadd.f32 %v61, %v850
  %v852 = vpop.f32.mrb[0].mxu0
  %v853 = vadd.f32 %v65, %v852
  %854 = vmatprep.mubr.f32.mxu0 0.0
  %855 = vmatmul.mubr.f32.gmra.mrb[0].mxu0 %v731
  %v856 = vpop.f32.mrb[0].mxu0
  %v857 = vadd.f32 %v61, %v856
  %v858 = vpop.f32.mrb[0].mxu0
  %v859 = vadd.f32 %v65, %v858
  %860 = vmatprep.mubr.f32.mxu0 0.0
  %861 = vmatmul.mubr.f32.gmra.mrb[0].mxu0 %v734
  %v862 = vpop.f32.mrb[0].mxu0
  %v863 = vadd.f32 %v61, %v862
  %v864 = vpop.f32.mrb[0].mxu0
  %v865 = vadd.f32 %v65, %v864
  %866 = vmatprep.mubr.f32.mxu0 0.0
  %867 = vmatmul.mubr.f32.gmra.mrb[0].mxu0 %v737
  %v868 = vpop.f32.mrb[0].mxu0
  %v869 = vadd.f32 %v61, %v868
  %v870 = vpop.f32.mrb[0].mxu0
  %v871 = vadd.f32 %v65, %v870
  %872 = vmatprep.mubr.f32.mxu0 0.0
  %873 = vmatmul.mubr.f32.gmra.mrb[0].mxu0 %v740
  %v874 = vpop.f32.mrb[0].mxu0
  %v875 = vadd.f32 %v61, %v874
  %v876 = vpop.f32.mrb[0].mxu0
  %v877 = vadd.f32 %v65, %v876
  %878 = vmatprep.mubr.f32.mxu0 0.0
  %879 = vmatmul.mubr.f32.gmra.mrb[0].mxu0 %v743
  %v880 = vpop.f32.mrb[0].mxu0
  %v881 = vadd.f32 %v61, %v880
  %v882 = vpop.f32.mrb[0].mxu0
  %v883 = vadd.f32 %v65, %v882
  %884 = vmatprep.mubr.f32.mxu0 0.0
  %885 = vmatmul.mubr.f32.gmra.mrb[0].mxu0 %v746
  %v886 = vpop.f32.mrb[0].mxu0
  %v887 = vadd.f32 %v61, %v886
  %v888 = vpop.f32.mrb[0].mxu0
  %v889 = vadd.f32 %v65, %v888
  %890 = vmatprep.mubr.f32.mxu0 0.0
  %891 = vmatmul.mubr.f32.gmra.mrb[0].mxu0 %v749
  %v892 = vpop.f32.mrb[0].mxu0
  %v893 = vadd.f32 %v61, %v892
  %v894 = vpop.f32.mrb[0].mxu0
  %v895 = vadd.f32 %v65, %v894
  %896 = vmatprep.mubr.f32.mxu0 0.0
  %897 = vmatmul.mubr.f32.gmra.mrb[0].mxu0 %v752
  %v898 = vpop.f32.mrb[0].mxu0
  %v899 = vadd.f32 %v61, %v898
  %v900 = vpop.f32.mrb[0].mxu0
  %v901 = vadd.f32 %v65, %v900
  %902 = vmatprep.mubr.f32.mxu0 0.0
  %903 = vmatmul.mubr.f32.gmra.mrb[0].mxu0 %v755
  %v904 = vpop.f32.mrb[0].mxu0
  %v905 = vadd.f32 %v61, %v904
  %v906 = vpop.f32.mrb[0].mxu0
  %v907 = vadd.f32 %v65, %v906
  %908 = vmatprep.mubr.f32.mxu0 0.0
  %909 = vmatmul.mubr.f32.gmra.mrb[0].mxu0 %v758
  %v910 = vpop.f32.mrb[0].mxu0
  %v911 = vadd.f32 %v61, %v910
  %v912 = vpop.f32.mrb[0].mxu0
  %v913 = vadd.f32 %v65, %v912
  %914 = vmatprep.mubr.f32.mxu0 0.0
  %915 = vmatmul.mubr.f32.gmra.mrb[0].mxu0 %v761
  %v916 = vpop.f32.mrb[0].mxu0
  %v917 = vadd.f32 %v61, %v916
  %v918 = vpop.f32.mrb[0].mxu0
  %v919 = vadd.f32 %v65, %v918
  %920 = vmatprep.mubr.f32.mxu0 0.0
  %921 = vmatmul.mubr.f32.gmra.mrb[0].mxu0 %v764
  %v922 = vpop.f32.mrb[0].mxu0
  %v923 = vadd.f32 %v61, %v922
  %v924 = vpop.f32.mrb[0].mxu0
  %v925 = vadd.f32 %v65, %v924
  %926 = vdwg.mxu0
  %v927 = vmax.f32 %v833, 0.0
  %v928 = vmax.f32 %v835, 0.0
  %v929 = vmax.f32 %v839, 0.0
  %v930 = vmax.f32 %v841, 0.0
  %v931 = vmax.f32 %v845, 0.0
  %v932 = vmax.f32 %v847, 0.0
  %v933 = vmax.f32 %v851, 0.0
  %v934 = vmax.f32 %v853, 0.0
  %v935 = vmax.f32 %v857, 0.0
  %v936 = vmax.f32 %v859, 0.0
  %v937 = vmax.f32 %v863, 0.0
  %v938 = vmax.f32 %v865, 0.0
  %v939 = vmax.f32 %v869, 0.0
  %v940 = vmax.f32 %v871, 0.0
  %v941 = vmax.f32 %v875, 0.0
  %v942 = vmax.f32 %v877, 0.0
  %v943 = vmax.f32 %v881, 0.0
  %v944 = vmax.f32 %v883, 0.0
  %v945 = vmax.f32 %v887, 0.0
  %v946 = vmax.f32 %v889, 0.0
  %v947 = vmax.f32 %v893, 0.0
  %v948 = vmax.f32 %v895, 0.0
  %v949 = vmax.f32 %v899, 0.0
  %v950 = vmax.f32 %v901, 0.0
  %v951 = vmax.f32 %v905, 0.0
  %v952 = vmax.f32 %v907, 0.0
  %v953 = vmax.f32 %v911, 0.0
  %v954 = vmax.f32 %v913, 0.0
  %v955 = vmax.f32 %v917, 0.0
  %v956 = vmax.f32 %v919, 0.0
  %v957 = vmax.f32 %v923, 0.0
  %v958 = vmax.f32 %v925, 0.0
  %v959 = vld [vmem:[#allocation2] sm:$0xff]
  %v960 = vld [vmem:[#allocation2 + $0x8] sm:$0xff]
  %v961 = vld [vmem:[#allocation2 + $0x10] sm:$0xff]
  %v962 = vld [vmem:[#allocation2 + $0x18] sm:$0xff]
  %v963 = vld [vmem:[#allocation2 + $0x20] sm:$0xff]
  %v964 = vld [vmem:[#allocation2 + $0x28] sm:$0xff]
  %v965 = vld [vmem:[#allocation2 + $0x30] sm:$0xff]
  %v966 = vld [vmem:[#allocation2 + $0x38] sm:$0xff]
  %v967 = vld [vmem:[#allocation2 + $0x40] sm:$0xff]
  %v968 = vld [vmem:[#allocation2 + $0x48] sm:$0xff]
  %v969 = vld [vmem:[#allocation2 + $0x50] sm:$0xff]
  %v970 = vld [vmem:[#allocation2 + $0x58] sm:$0xff]
  %v971 = vld [vmem:[#allocation2 + $0x60] sm:$0xff]
  %v972 = vld [vmem:[#allocation2 + $0x68] sm:$0xff]
  %v973 = vld [vmem:[#allocation2 + $0x70] sm:$0xff]
  %v974 = vld [vmem:[#allocation2 + $0x78] sm:$0xff]
  %v975 = vld [vmem:[#allocation2 + $0x80] sm:$0xff]
  %v976 = vld [vmem:[#allocation2 + $0x88] sm:$0xff]
  %v977 = vld [vmem:[#allocation2 + $0x90] sm:$0xff]
  %v978 = vld [vmem:[#allocation2 + $0x98] sm:$0xff]
  %v979 = vld [vmem:[#allocation2 + $0xa0] sm:$0xff]
  %v980 = vld [vmem:[#allocation2 + $0xa8] sm:$0xff]
  %v981 = vld [vmem:[#allocation2 + $0xb0] sm:$0xff]
  %v982 = vld [vmem:[#allocation2 + $0xb8] sm:$0xff]
  %v983 = vld [vmem:[#allocation2 + $0xc0] sm:$0xff]
  %v984 = vld [vmem:[#allocation2 + $0xc8] sm:$0xff]
  %v985 = vld [vmem:[#allocation2 + $0xd0] sm:$0xff]
  %v986 = vld [vmem:[#allocation2 + $0xd8] sm:$0xff]
  %v987 = vld [vmem:[#allocation2 + $0xe0] sm:$0xff]
  %v988 = vld [vmem:[#allocation2 + $0xe8] sm:$0xff]
  %v989 = vld [vmem:[#allocation2 + $0xf0] sm:$0xff]
  %v990 = vld [vmem:[#allocation2 + $0xf8] sm:$0xff]
  %v991 = vmax.f32 %v959, %v927
  %v992 = vmax.f32 %v960, %v928
  %v993 = vmax.f32 %v961, %v929
  %v994 = vmax.f32 %v962, %v930
  %v995 = vmax.f32 %v963, %v931
  %v996 = vmax.f32 %v964, %v932
  %v997 = vmax.f32 %v965, %v933
  %v998 = vmax.f32 %v966, %v934
  %v999 = vmax.f32 %v967, %v935
  %v1000 = vmax.f32 %v968, %v936
  %v1001 = vmax.f32 %v969, %v937
  %v1002 = vmax.f32 %v970, %v938
  %v1003 = vmax.f32 %v971, %v939
  %v1004 = vmax.f32 %v972, %v940
  %v1005 = vmax.f32 %v973, %v941
  %v1006 = vmax.f32 %v974, %v942
  %v1007 = vmax.f32 %v975, %v943
  %v1008 = vmax.f32 %v976, %v944
  %v1009 = vmax.f32 %v977, %v945
  %v1010 = vmax.f32 %v978, %v946
  %v1011 = vmax.f32 %v979, %v947
  %v1012 = vmax.f32 %v980, %v948
  %v1013 = vmax.f32 %v981, %v949
  %v1014 = vmax.f32 %v982, %v950
  %v1015 = vmax.f32 %v983, %v951
  %v1016 = vmax.f32 %v984, %v952
  %v1017 = vmax.f32 %v985, %v953
  %v1018 = vmax.f32 %v986, %v954
  %v1019 = vmax.f32 %v987, %v955
  %v1020 = vmax.f32 %v988, %v956
  %v1021 = vmax.f32 %v989, %v957
  %v1022 = vmax.f32 %v990, %v958
  %1023 = vst [vmem:[#allocation2] sm:$0xff] %v991
  %1024 = vst [vmem:[#allocation2 + $0x8] sm:$0xff] %v992
  %1025 = vst [vmem:[#allocation2 + $0x10] sm:$0xff] %v993
  %1026 = vst [vmem:[#allocation2 + $0x18] sm:$0xff] %v994
  %1027 = vst [vmem:[#allocation2 + $0x20] sm:$0xff] %v995
  %1028 = vst [vmem:[#allocation2 + $0x28] sm:$0xff] %v996
  %1029 = vst [vmem:[#allocation2 + $0x30] sm:$0xff] %v997
  %1030 = vst [vmem:[#allocation2 + $0x38] sm:$0xff] %v998
  %1031 = vst [vmem:[#allocation2 + $0x40] sm:$0xff] %v999
  %1032 = vst [vmem:[#allocation2 + $0x48] sm:$0xff] %v1000
  %1033 = vst [vmem:[#allocation2 + $0x50] sm:$0xff] %v1001
  %1034 = vst [vmem:[#allocation2 + $0x58] sm:$0xff] %v1002
  %1035 = vst [vmem:[#allocation2 + $0x60] sm:$0xff] %v1003
  %1036 = vst [vmem:[#allocation2 + $0x68] sm:$0xff] %v1004
  %1037 = vst [vmem:[#allocation2 + $0x70] sm:$0xff] %v1005
  %1038 = vst [vmem:[#allocation2 + $0x78] sm:$0xff] %v1006
  %1039 = vst [vmem:[#allocation2 + $0x80] sm:$0xff] %v1007
  %1040 = vst [vmem:[#allocation2 + $0x88] sm:$0xff] %v1008
  %1041 = vst [vmem:[#allocation2 + $0x90] sm:$0xff] %v1009
  %1042 = vst [vmem:[#allocation2 + $0x98] sm:$0xff] %v1010
  %1043 = vst [vmem:[#allocation2 + $0xa0] sm:$0xff] %v1011
  %1044 = vst [vmem:[#allocation2 + $0xa8] sm:$0xff] %v1012
  %1045 = vst [vmem:[#allocation2 + $0xb0] sm:$0xff] %v1013
  %1046 = vst [vmem:[#allocation2 + $0xb8] sm:$0xff] %v1014
  %1047 = vst [vmem:[#allocation2 + $0xc0] sm:$0xff] %v1015
  %1048 = vst [vmem:[#allocation2 + $0xc8] sm:$0xff] %v1016
  %1049 = vst [vmem:[#allocation2 + $0xd0] sm:$0xff] %v1017
  %1050 = vst [vmem:[#allocation2 + $0xd8] sm:$0xff] %v1018
  %1051 = vst [vmem:[#allocation2 + $0xe0] sm:$0xff] %v1019
  %1052 = vst [vmem:[#allocation2 + $0xe8] sm:$0xff] %v1020
  %1053 = vst [vmem:[#allocation2 + $0xf0] sm:$0xff] %v1021
  %1054 = vst [vmem:[#allocation2 + $0xf8] sm:$0xff] %v1022
  %v1055 = vld [vmem:[%s0 + $0x180] sm:$0xff]
  %v1056 = vld [vmem:[%s0 + $0x188] sm:$0xff]
  %v1057 = vld [vmem:[%s0 + $0x190] sm:$0xff]
  %v1058 = vld [vmem:[%s0 + $0x198] sm:$0xff]
  %v1059 = vld [vmem:[%s0 + $0x1a0] sm:$0xff]
  %v1060 = vld [vmem:[%s0 + $0x1a8] sm:$0xff]
  %v1061 = vld [vmem:[%s0 + $0x1b0] sm:$0xff]
  %v1062 = vld [vmem:[%s0 + $0x1b8] sm:$0xff]
  %v1063 = vld [vmem:[%s0 + $0x1c0] sm:$0xff]
  %v1064 = vld [vmem:[%s0 + $0x1c8] sm:$0xff]
  %v1065 = vld [vmem:[%s0 + $0x1d0] sm:$0xff]
  %v1066 = vld [vmem:[%s0 + $0x1d8] sm:$0xff]
  %v1067 = vld [vmem:[%s0 + $0x1e0] sm:$0xff]
  %v1068 = vld [vmem:[%s0 + $0x1e8] sm:$0xff]
  %v1069 = vld [vmem:[%s0 + $0x1f0] sm:$0xff]
  %v1070 = vld [vmem:[%s0 + $0x1f8] sm:$0xff]
  %v1072 = vsel %vm68, %v1055, 0
  %v1075 = vsel %vm68, %v1056, 0
  %v1078 = vsel %vm68, %v1057, 0
  %v1081 = vsel %vm68, %v1058, 0
  %v1084 = vsel %vm68, %v1059, 0
  %v1087 = vsel %vm68, %v1060, 0
  %v1090 = vsel %vm68, %v1061, 0
  %v1093 = vsel %vm68, %v1062, 0
  %v1096 = vsel %vm68, %v1063, 0
  %v1099 = vsel %vm68, %v1064, 0
  %v1102 = vsel %vm68, %v1065, 0
  %v1105 = vsel %vm68, %v1066, 0
  %v1108 = vsel %vm68, %v1067, 0
  %v1111 = vsel %vm68, %v1068, 0
  %v1114 = vsel %vm68, %v1069, 0
  %v1117 = vsel %vm68, %v1070, 0
  %1119 = vmatprep.subr.mxu0 %v33
  %1120 = vmatpush1.msra.mxu0 %v32
  %1121 = vmatprep.subr.mxu0 %v35
  %1122 = vmatpush1.msra.mxu0 %v34
  %1123 = vmatprep.subr.mxu0 %v37
  %1124 = vmatpush1.msra.mxu0 %v36
  %1125 = vmatprep.subr.mxu0 %v122
  %1126 = vmatpush1.msra.mxu0 %v119
  %1127 = vmatprep.subr.mxu0 0.0
  %1128 = vmatpush1.msra.mxu0 0.0
  %1129 = vmatprep.subr.mxu0 0.0
  %1130 = vmatpush1.msra.mxu0 0.0
  %1131 = vmatprep.subr.mxu0 0.0
  %1132 = vmatpush1.msra.mxu0 0.0
  %1133 = vmatprep.subr.mxu0 0.0
  %1134 = vmatpush1.msra.mxu0 0.0
  %1135 = vmatprep.subr.mxu0 0.0
  %1136 = vmatpush1.msra.mxu0 0.0
  %1137 = vmatprep.subr.mxu0 0.0
  %1138 = vmatpush1.msra.mxu0 0.0
  %1139 = vmatprep.subr.mxu0 0.0
  %1140 = vmatpush1.msra.mxu0 0.0
  %1141 = vmatprep.subr.mxu0 0.0
  %1142 = vmatpush1.msra.mxu0 0.0
  %1143 = vmatprep.subr.mxu0 0.0
  %1144 = vmatpush1.msra.mxu0 0.0
  %1145 = vmatprep.subr.mxu0 0.0
  %1146 = vmatpush1.msra.mxu0 0.0
  %1147 = vmatprep.subr.mxu0 0.0
  %1148 = vmatpush1.msra.mxu0 0.0
  %1149 = vmatprep.subr.mxu0 0.0
  %1150 = vmatpush1.msra.mxu0 0.0
  %1151 = vmatprep.subr.mxu0 0.0
  %1152 = vmatpush1.msra.mxu0 0.0
  %1153 = vmatprep.subr.mxu0 0.0
  %1154 = vmatpush1.msra.mxu0 0.0
  %1155 = vmatprep.subr.mxu0 0.0
  %1156 = vmatpush1.msra.mxu0 0.0
  %1157 = vmatprep.subr.mxu0 0.0
  %1158 = vmatpush1.msra.mxu0 0.0
  %1159 = vmatprep.subr.mxu0 0.0
  %1160 = vmatpush1.msra.mxu0 0.0
  %1161 = vmatprep.subr.mxu0 0.0
  %1162 = vmatpush1.msra.mxu0 0.0
  %1163 = vmatprep.subr.mxu0 0.0
  %1164 = vmatpush1.msra.mxu0 0.0
  %1165 = vmatprep.subr.mxu0 0.0
  %1166 = vmatpush1.msra.mxu0 0.0
  %1167 = vmatprep.subr.mxu0 0.0
  %1168 = vmatpush1.msra.mxu0 0.0
  %1169 = vmatprep.subr.mxu0 0.0
  %1170 = vmatpush1.msra.mxu0 0.0
  %1171 = vmatprep.subr.mxu0 0.0
  %1172 = vmatpush1.msra.mxu0 0.0
  %1173 = vmatprep.subr.mxu0 0.0
  %1174 = vmatpush1.msra.mxu0 0.0
  %1175 = vmatprep.subr.mxu0 0.0
  %1176 = vmatpush1.msra.mxu0 0.0
  %1177 = vmatprep.subr.mxu0 0.0
  %1178 = vmatpush1.msra.mxu0 0.0
  %1179 = vmatprep.subr.mxu0 0.0
  %1180 = vmatpush1.msra.mxu0 0.0
  %1181 = vmatprep.subr.mxu0 0.0
  %1182 = vmatpush1.msra.mxu0 0.0
  %1183 = vmatprep.mubr.f32.mxu0 0.0
  %1184 = vmatmul.mubr.f32.gmra.mrb[0].mxu0 %v1072
  %v1185 = vpop.f32.mrb[0].mxu0
  %v1186 = vadd.f32 %v61, %v1185
  %v1187 = vpop.f32.mrb[0].mxu0
  %v1188 = vadd.f32 %v65, %v1187
  %1189 = vmatprep.mubr.f32.mxu0 0.0
  %1190 = vmatmul.mubr.f32.gmra.mrb[0].mxu0 %v1075
  %v1191 = vpop.f32.mrb[0].mxu0
  %v1192 = vadd.f32 %v61, %v1191
  %v1193 = vpop.f32.mrb[0].mxu0
  %v1194 = vadd.f32 %v65, %v1193
  %1195 = vmatprep.mubr.f32.mxu0 0.0
  %1196 = vmatmul.mubr.f32.gmra.mrb[0].mxu0 %v1078
  %v1197 = vpop.f32.mrb[0].mxu0
  %v1198 = vadd.f32 %v61, %v1197
  %v1199 = vpop.f32.mrb[0].mxu0
  %v1200 = vadd.f32 %v65, %v1199
  %1201 = vmatprep.mubr.f32.mxu0 0.0
  %1202 = vmatmul.mubr.f32.gmra.mrb[0].mxu0 %v1081
  %v1203 = vpop.f32.mrb[0].mxu0
  %v1204 = vadd.f32 %v61, %v1203
  %v1205 = vpop.f32.mrb[0].mxu0
  %v1206 = vadd.f32 %v65, %v1205
  %1207 = vmatprep.mubr.f32.mxu0 0.0
  %1208 = vmatmul.mubr.f32.gmra.mrb[0].mxu0 %v1084
  %v1209 = vpop.f32.mrb[0].mxu0
  %v1210 = vadd.f32 %v61, %v1209
  %v1211 = vpop.f32.mrb[0].mxu0
  %v1212 = vadd.f32 %v65, %v1211
  %1213 = vmatprep.mubr.f32.mxu0 0.0
  %1214 = vmatmul.mubr.f32.gmra.mrb[0].mxu0 %v1087
  %v1215 = vpop.f32.mrb[0].mxu0
  %v1216 = vadd.f32 %v61, %v1215
  %v1217 = vpop.f32.mrb[0].mxu0
  %v1218 = vadd.f32 %v65, %v1217
  %1219 = vmatprep.mubr.f32.mxu0 0.0
  %1220 = vmatmul.mubr.f32.gmra.mrb[0].mxu0 %v1090
  %v1221 = vpop.f32.mrb[0].mxu0
  %v1222 = vadd.f32 %v61, %v1221
  %v1223 = vpop.f32.mrb[0].mxu0
  %v1224 = vadd.f32 %v65, %v1223
  %1225 = vmatprep.mubr.f32.mxu0 0.0
  %1226 = vmatmul.mubr.f32.gmra.mrb[0].mxu0 %v1093
  %v1227 = vpop.f32.mrb[0].mxu0
  %v1228 = vadd.f32 %v61, %v1227
  %v1229 = vpop.f32.mrb[0].mxu0
  %v1230 = vadd.f32 %v65, %v1229
  %1231 = vmatprep.mubr.f32.mxu0 0.0
  %1232 = vmatmul.mubr.f32.gmra.mrb[0].mxu0 %v1096
  %v1233 = vpop.f32.mrb[0].mxu0
  %v1234 = vadd.f32 %v61, %v1233
  %v1235 = vpop.f32.mrb[0].mxu0
  %v1236 = vadd.f32 %v65, %v1235
  %1237 = vmatprep.mubr.f32.mxu0 0.0
  %1238 = vmatmul.mubr.f32.gmra.mrb[0].mxu0 %v1099
  %v1239 = vpop.f32.mrb[0].mxu0
  %v1240 = vadd.f32 %v61, %v1239
  %v1241 = vpop.f32.mrb[0].mxu0
  %v1242 = vadd.f32 %v65, %v1241
  %1243 = vmatprep.mubr.f32.mxu0 0.0
  %1244 = vmatmul.mubr.f32.gmra.mrb[0].mxu0 %v1102
  %v1245 = vpop.f32.mrb[0].mxu0
  %v1246 = vadd.f32 %v61, %v1245
  %v1247 = vpop.f32.mrb[0].mxu0
  %v1248 = vadd.f32 %v65, %v1247
  %1249 = vmatprep.mubr.f32.mxu0 0.0
  %1250 = vmatmul.mubr.f32.gmra.mrb[0].mxu0 %v1105
  %v1251 = vpop.f32.mrb[0].mxu0
  %v1252 = vadd.f32 %v61, %v1251
  %v1253 = vpop.f32.mrb[0].mxu0
  %v1254 = vadd.f32 %v65, %v1253
  %1255 = vmatprep.mubr.f32.mxu0 0.0
  %1256 = vmatmul.mubr.f32.gmra.mrb[0].mxu0 %v1108
  %v1257 = vpop.f32.mrb[0].mxu0
  %v1258 = vadd.f32 %v61, %v1257
  %v1259 = vpop.f32.mrb[0].mxu0
  %v1260 = vadd.f32 %v65, %v1259
  %1261 = vmatprep.mubr.f32.mxu0 0.0
  %1262 = vmatmul.mubr.f32.gmra.mrb[0].mxu0 %v1111
  %v1263 = vpop.f32.mrb[0].mxu0
  %v1264 = vadd.f32 %v61, %v1263
  %v1265 = vpop.f32.mrb[0].mxu0
  %v1266 = vadd.f32 %v65, %v1265
  %1267 = vmatprep.mubr.f32.mxu0 0.0
  %1268 = vmatmul.mubr.f32.gmra.mrb[0].mxu0 %v1114
  %v1269 = vpop.f32.mrb[0].mxu0
  %v1270 = vadd.f32 %v61, %v1269
  %v1271 = vpop.f32.mrb[0].mxu0
  %v1272 = vadd.f32 %v65, %v1271
  %1273 = vmatprep.mubr.f32.mxu0 0.0
  %1274 = vmatmul.mubr.f32.gmra.mrb[0].mxu0 %v1117
  %v1275 = vpop.f32.mrb[0].mxu0
  %v1276 = vadd.f32 %v61, %v1275
  %v1277 = vpop.f32.mrb[0].mxu0
  %v1278 = vadd.f32 %v65, %v1277
  %1279 = vdwg.mxu0
  %v1280 = vmax.f32 %v1186, 0.0
  %v1281 = vmax.f32 %v1188, 0.0
  %v1282 = vmax.f32 %v1192, 0.0
  %v1283 = vmax.f32 %v1194, 0.0
  %v1284 = vmax.f32 %v1198, 0.0
  %v1285 = vmax.f32 %v1200, 0.0
  %v1286 = vmax.f32 %v1204, 0.0
  %v1287 = vmax.f32 %v1206, 0.0
  %v1288 = vmax.f32 %v1210, 0.0
  %v1289 = vmax.f32 %v1212, 0.0
  %v1290 = vmax.f32 %v1216, 0.0
  %v1291 = vmax.f32 %v1218, 0.0
  %v1292 = vmax.f32 %v1222, 0.0
  %v1293 = vmax.f32 %v1224, 0.0
  %v1294 = vmax.f32 %v1228, 0.0
  %v1295 = vmax.f32 %v1230, 0.0
  %v1296 = vmax.f32 %v1234, 0.0
  %v1297 = vmax.f32 %v1236, 0.0
  %v1298 = vmax.f32 %v1240, 0.0
  %v1299 = vmax.f32 %v1242, 0.0
  %v1300 = vmax.f32 %v1246, 0.0
  %v1301 = vmax.f32 %v1248, 0.0
  %v1302 = vmax.f32 %v1252, 0.0
  %v1303 = vmax.f32 %v1254, 0.0
  %v1304 = vmax.f32 %v1258, 0.0
  %v1305 = vmax.f32 %v1260, 0.0
  %v1306 = vmax.f32 %v1264, 0.0
  %v1307 = vmax.f32 %v1266, 0.0
  %v1308 = vmax.f32 %v1270, 0.0
  %v1309 = vmax.f32 %v1272, 0.0
  %v1310 = vmax.f32 %v1276, 0.0
  %v1311 = vmax.f32 %v1278, 0.0
  %v1312 = vld [vmem:[#allocation2] sm:$0xff]
  %v1313 = vld [vmem:[#allocation2 + $0x8] sm:$0xff]
  %v1314 = vld [vmem:[#allocation2 + $0x10] sm:$0xff]
  %v1315 = vld [vmem:[#allocation2 + $0x18] sm:$0xff]
  %v1316 = vld [vmem:[#allocation2 + $0x20] sm:$0xff]
  %v1317 = vld [vmem:[#allocation2 + $0x28] sm:$0xff]
  %v1318 = vld [vmem:[#allocation2 + $0x30] sm:$0xff]
  %v1319 = vld [vmem:[#allocation2 + $0x38] sm:$0xff]
  %v1320 = vld [vmem:[#allocation2 + $0x40] sm:$0xff]
  %v1321 = vld [vmem:[#allocation2 + $0x48] sm:$0xff]
  %v1322 = vld [vmem:[#allocation2 + $0x50] sm:$0xff]
  %v1323 = vld [vmem:[#allocation2 + $0x58] sm:$0xff]
  %v1324 = vld [vmem:[#allocation2 + $0x60] sm:$0xff]
  %v1325 = vld [vmem:[#allocation2 + $0x68] sm:$0xff]
  %v1326 = vld [vmem:[#allocation2 + $0x70] sm:$0xff]
  %v1327 = vld [vmem:[#allocation2 + $0x78] sm:$0xff]
  %v1328 = vld [vmem:[#allocation2 + $0x80] sm:$0xff]
  %v1329 = vld [vmem:[#allocation2 + $0x88] sm:$0xff]
  %v1330 = vld [vmem:[#allocation2 + $0x90] sm:$0xff]
  %v1331 = vld [vmem:[#allocation2 + $0x98] sm:$0xff]
  %v1332 = vld [vmem:[#allocation2 + $0xa0] sm:$0xff]
  %v1333 = vld [vmem:[#allocation2 + $0xa8] sm:$0xff]
  %v1334 = vld [vmem:[#allocation2 + $0xb0] sm:$0xff]
  %v1335 = vld [vmem:[#allocation2 + $0xb8] sm:$0xff]
  %v1336 = vld [vmem:[#allocation2 + $0xc0] sm:$0xff]
  %v1337 = vld [vmem:[#allocation2 + $0xc8] sm:$0xff]
  %v1338 = vld [vmem:[#allocation2 + $0xd0] sm:$0xff]
  %v1339 = vld [vmem:[#allocation2 + $0xd8] sm:$0xff]
  %v1340 = vld [vmem:[#allocation2 + $0xe0] sm:$0xff]
  %v1341 = vld [vmem:[#allocation2 + $0xe8] sm:$0xff]
  %v1342 = vld [vmem:[#allocation2 + $0xf0] sm:$0xff]
  %v1343 = vld [vmem:[#allocation2 + $0xf8] sm:$0xff]
  %v1344 = vmax.f32 %v1312, %v1280
  %v1345 = vmax.f32 %v1313, %v1281
  %v1346 = vmax.f32 %v1314, %v1282
  %v1347 = vmax.f32 %v1315, %v1283
  %v1348 = vmax.f32 %v1316, %v1284
  %v1349 = vmax.f32 %v1317, %v1285
  %v1350 = vmax.f32 %v1318, %v1286
  %v1351 = vmax.f32 %v1319, %v1287
  %v1352 = vmax.f32 %v1320, %v1288
  %v1353 = vmax.f32 %v1321, %v1289
  %v1354 = vmax.f32 %v1322, %v1290
  %v1355 = vmax.f32 %v1323, %v1291
  %v1356 = vmax.f32 %v1324, %v1292
  %v1357 = vmax.f32 %v1325, %v1293
  %v1358 = vmax.f32 %v1326, %v1294
  %v1359 = vmax.f32 %v1327, %v1295
  %v1360 = vmax.f32 %v1328, %v1296
  %v1361 = vmax.f32 %v1329, %v1297
  %v1362 = vmax.f32 %v1330, %v1298
  %v1363 = vmax.f32 %v1331, %v1299
  %v1364 = vmax.f32 %v1332, %v1300
  %v1365 = vmax.f32 %v1333, %v1301
  %v1366 = vmax.f32 %v1334, %v1302
  %v1367 = vmax.f32 %v1335, %v1303
  %v1368 = vmax.f32 %v1336, %v1304
  %v1369 = vmax.f32 %v1337, %v1305
  %v1370 = vmax.f32 %v1338, %v1306
  %v1371 = vmax.f32 %v1339, %v1307
  %v1372 = vmax.f32 %v1340, %v1308
  %v1373 = vmax.f32 %v1341, %v1309
  %v1374 = vmax.f32 %v1342, %v1310
  %v1375 = vmax.f32 %v1343, %v1311
  %1376 = vst [vmem:[#allocation2] sm:$0xff] %v1344
  %1377 = vst [vmem:[#allocation2 + $0x8] sm:$0xff] %v1345
  %1378 = vst [vmem:[#allocation2 + $0x10] sm:$0xff] %v1346
  %1379 = vst [vmem:[#allocation2 + $0x18] sm:$0xff] %v1347
  %1380 = vst [vmem:[#allocation2 + $0x20] sm:$0xff] %v1348
  %1381 = vst [vmem:[#allocation2 + $0x28] sm:$0xff] %v1349
  %1382 = vst [vmem:[#allocation2 + $0x30] sm:$0xff] %v1350
  %1383 = vst [vmem:[#allocation2 + $0x38] sm:$0xff] %v1351
  %1384 = vst [vmem:[#allocation2 + $0x40] sm:$0xff] %v1352
  %1385 = vst [vmem:[#allocation2 + $0x48] sm:$0xff] %v1353
  %1386 = vst [vmem:[#allocation2 + $0x50] sm:$0xff] %v1354
  %1387 = vst [vmem:[#allocation2 + $0x58] sm:$0xff] %v1355
  %1388 = vst [vmem:[#allocation2 + $0x60] sm:$0xff] %v1356
  %1389 = vst [vmem:[#allocation2 + $0x68] sm:$0xff] %v1357
  %1390 = vst [vmem:[#allocation2 + $0x70] sm:$0xff] %v1358
  %1391 = vst [vmem:[#allocation2 + $0x78] sm:$0xff] %v1359
  %1392 = vst [vmem:[#allocation2 + $0x80] sm:$0xff] %v1360
  %1393 = vst [vmem:[#allocation2 + $0x88] sm:$0xff] %v1361
  %1394 = vst [vmem:[#allocation2 + $0x90] sm:$0xff] %v1362
  %1395 = vst [vmem:[#allocation2 + $0x98] sm:$0xff] %v1363
  %1396 = vst [vmem:[#allocation2 + $0xa0] sm:$0xff] %v1364
  %1397 = vst [vmem:[#allocation2 + $0xa8] sm:$0xff] %v1365
  %1398 = vst [vmem:[#allocation2 + $0xb0] sm:$0xff] %v1366
  %1399 = vst [vmem:[#allocation2 + $0xb8] sm:$0xff] %v1367
  %1400 = vst [vmem:[#allocation2 + $0xc0] sm:$0xff] %v1368
  %1401 = vst [vmem:[#allocation2 + $0xc8] sm:$0xff] %v1369
  %1402 = vst [vmem:[#allocation2 + $0xd0] sm:$0xff] %v1370
  %1403 = vst [vmem:[#allocation2 + $0xd8] sm:$0xff] %v1371
  %1404 = vst [vmem:[#allocation2 + $0xe0] sm:$0xff] %v1372
  %1405 = vst [vmem:[#allocation2 + $0xe8] sm:$0xff] %v1373
  %1406 = vst [vmem:[#allocation2 + $0xf0] sm:$0xff] %v1374
  %1407 = vst [vmem:[#allocation2 + $0xf8] sm:$0xff] %v1375
  %v1408 = vld [vmem:[#allocation2] sm:$0xff]
  %v1409 = vld [vmem:[#allocation2 + $0x8] sm:$0xff]
  %v1410 = vld [vmem:[#allocation2 + $0x10] sm:$0xff]
  %v1411 = vld [vmem:[#allocation2 + $0x18] sm:$0xff]
  %v1412 = vld [vmem:[#allocation2 + $0x40] sm:$0xff]
  %v1413 = vld [vmem:[#allocation2 + $0x48] sm:$0xff]
  %v1414 = vld [vmem:[#allocation2 + $0x50] sm:$0xff]
  %v1415 = vld [vmem:[#allocation2 + $0x58] sm:$0xff]
  %v1416 = vld [vmem:[%s3] sm:$0xff]
  %v1417 = vld [vmem:[%s3 + $0x8] sm:$0xff]
  %v1418 = vld [vmem:[%s3 + $0x10] sm:$0xff]
  %v1419 = vld [vmem:[%s3 + $0x18] sm:$0xff]
  %v1420 = vld [vmem:[%s3 + $0x20] sm:$0xff]
  %v1421 = vld [vmem:[%s3 + $0x28] sm:$0xff]
  %v1422 = vld [vmem:[%s3 + $0x30] sm:$0xff]
  %v1423 = vld [vmem:[%s3 + $0x38] sm:$0xff]
  %v1424 = vld [vmem:[%s3 + $0x40] sm:$0xff]
  %v1425 = vld [vmem:[%s3 + $0x48] sm:$0xff]
  %v1426 = vld [vmem:[%s3 + $0x50] sm:$0xff]
  %v1427 = vld [vmem:[%s3 + $0x58] sm:$0xff]
  %v1428 = vld [vmem:[%s3 + $0x60] sm:$0xff]
  %v1429 = vld [vmem:[%s3 + $0x68] sm:$0xff]
  %v1430 = vld [vmem:[%s3 + $0x70] sm:$0xff]
  %v1431 = vld [vmem:[%s3 + $0x78] sm:$0xff]
  %v1432 = vld [vmem:[%s3 + $0x80] sm:$0xff]
  %v1433 = vld [vmem:[%s3 + $0x88] sm:$0xff]
  %v1434 = vld [vmem:[%s3 + $0x90] sm:$0xff]
  %v1435 = vld [vmem:[%s3 + $0x98] sm:$0xff]
  %v1436 = vld [vmem:[%s3 + $0xa0] sm:$0xff]
  %v1437 = vld [vmem:[%s3 + $0xa8] sm:$0xff]
  %v1438 = vld [vmem:[%s3 + $0xb0] sm:$0xff]
  %v1439 = vld [vmem:[%s3 + $0xb8] sm:$0xff]
  %v1440 = vld [vmem:[%s3 + $0xc0] sm:$0xff]
  %v1441 = vld [vmem:[%s3 + $0xc8] sm:$0xff]
  %v1442 = vld [vmem:[%s3 + $0xd0] sm:$0xff]
  %v1443 = vld [vmem:[%s3 + $0xd8] sm:$0xff]
  %v1444 = vld [vmem:[%s3 + $0xe0] sm:$0xff]
  %v1445 = vld [vmem:[%s3 + $0xe8] sm:$0xff]
  %v1446 = vld [vmem:[%s3 + $0xf0] sm:$0xff]
  %v1447 = vld [vmem:[%s3 + $0xf8] sm:$0xff]
  %v1448 = vld [vmem:[%s3 + $0x100] sm:$0xff]
  %v1449 = vld [vmem:[%s3 + $0x108] sm:$0xff]
  %v1450 = vld [vmem:[%s3 + $0x110] sm:$0xff]
  %v1451 = vld [vmem:[%s3 + $0x118] sm:$0xff]
  %v1452 = vld [vmem:[%s3 + $0x120] sm:$0xff]
  %v1453 = vld [vmem:[%s3 + $0x128] sm:$0xff]
  %v1454 = vld [vmem:[%s3 + $0x130] sm:$0xff]
  %v1455 = vld [vmem:[%s3 + $0x138] sm:$0xff]
  %v1456 = vld [vmem:[%s3 + $0x140] sm:$0xff]
  %v1457 = vld [vmem:[%s3 + $0x148] sm:$0xff]
  %v1458 = vld [vmem:[%s3 + $0x150] sm:$0xff]
  %v1459 = vld [vmem:[%s3 + $0x158] sm:$0xff]
  %v1460 = vld [vmem:[%s3 + $0x160] sm:$0xff]
  %v1461 = vld [vmem:[%s3 + $0x168] sm:$0xff]
  %v1462 = vld [vmem:[%s3 + $0x170] sm:$0xff]
  %v1463 = vld [vmem:[%s3 + $0x178] sm:$0xff]
  %v1464 = vld [vmem:[%s3 + $0x180] sm:$0xff]
  %v1465 = vld [vmem:[%s3 + $0x188] sm:$0xff]
  %v1466 = vld [vmem:[%s3 + $0x190] sm:$0xff]
  %v1467 = vld [vmem:[%s3 + $0x198] sm:$0xff]
  %v1468 = vld [vmem:[%s3 + $0x1a0] sm:$0xff]
  %v1469 = vld [vmem:[%s3 + $0x1a8] sm:$0xff]
  %v1470 = vld [vmem:[%s3 + $0x1b0] sm:$0xff]
  %v1471 = vld [vmem:[%s3 + $0x1b8] sm:$0xff]
  %v1472 = vld [vmem:[%s3 + $0x1c0] sm:$0xff]
  %v1473 = vld [vmem:[%s3 + $0x1c8] sm:$0xff]
  %v1474 = vld [vmem:[%s3 + $0x1d0] sm:$0xff]
  %v1475 = vld [vmem:[%s3 + $0x1d8] sm:$0xff]
  %v1476 = vld [vmem:[%s3 + $0x1e0] sm:$0xff]
  %v1477 = vld [vmem:[%s3 + $0x1e8] sm:$0xff]
  %v1478 = vld [vmem:[%s3 + $0x1f0] sm:$0xff]
  %v1479 = vld [vmem:[%s3 + $0x1f8] sm:$0xff]
  %v1480 = vld [vmem:[#allocation2 + $0x20] sm:$0xff]
  %v1481 = vld [vmem:[#allocation2 + $0x28] sm:$0xff]
  %v1482 = vld [vmem:[#allocation2 + $0x60] sm:$0xff]
  %v1483 = vld [vmem:[#allocation2 + $0x68] sm:$0xff]
  %v1484 = vld [vmem:[%s3 + $0x200] sm:$0xff]
  %v1485 = vld [vmem:[%s3 + $0x208] sm:$0xff]
  %v1486 = vld [vmem:[%s3 + $0x210] sm:$0xff]
  %v1487 = vld [vmem:[%s3 + $0x218] sm:$0xff]
  %v1488 = vld [vmem:[%s3 + $0x220] sm:$0xff]
  %v1489 = vld [vmem:[%s3 + $0x228] sm:$0xff]
  %v1490 = vld [vmem:[%s3 + $0x230] sm:$0xff]
  %v1491 = vld [vmem:[%s3 + $0x238] sm:$0xff]
  %v1492 = vld [vmem:[%s3 + $0x240] sm:$0xff]
  %v1493 = vld [vmem:[%s3 + $0x248] sm:$0xff]
  %v1494 = vld [vmem:[%s3 + $0x250] sm:$0xff]
  %v1495 = vld [vmem:[%s3 + $0x258] sm:$0xff]
  %v1496 = vld [vmem:[%s3 + $0x260] sm:$0xff]
  %v1497 = vld [vmem:[%s3 + $0x268] sm:$0xff]
  %v1498 = vld [vmem:[%s3 + $0x270] sm:$0xff]
  %v1499 = vld [vmem:[%s3 + $0x278] sm:$0xff]
  %v1500 = vld [vmem:[%s3 + $0x280] sm:$0xff]
  %v1501 = vld [vmem:[%s3 + $0x288] sm:$0xff]
  %v1502 = vld [vmem:[%s3 + $0x290] sm:$0xff]
  %v1503 = vld [vmem:[%s3 + $0x298] sm:$0xff]
  %v1504 = vld [vmem:[%s3 + $0x2a0] sm:$0xff]
  %v1505 = vld [vmem:[%s3 + $0x2a8] sm:$0xff]
  %v1506 = vld [vmem:[%s3 + $0x2b0] sm:$0xff]
  %v1507 = vld [vmem:[%s3 + $0x2b8] sm:$0xff]
  %v1508 = vld [vmem:[%s3 + $0x2c0] sm:$0xff]
  %v1509 = vld [vmem:[%s3 + $0x2c8] sm:$0xff]
  %v1510 = vld [vmem:[%s3 + $0x2d0] sm:$0xff]
  %v1511 = vld [vmem:[%s3 + $0x2d8] sm:$0xff]
  %v1512 = vld [vmem:[%s3 + $0x2e0] sm:$0xff]
  %v1513 = vld [vmem:[%s3 + $0x2e8] sm:$0xff]
  %v1514 = vld [vmem:[%s3 + $0x2f0] sm:$0xff]
  %v1515 = vld [vmem:[%s3 + $0x2f8] sm:$0xff]
  %v1516 = vld [vmem:[%s3 + $0x300] sm:$0xff]
  %v1517 = vld [vmem:[%s3 + $0x308] sm:$0xff]
  %v1518 = vld [vmem:[%s3 + $0x310] sm:$0xff]
  %v1519 = vld [vmem:[%s3 + $0x318] sm:$0xff]
  %v1520 = vld [vmem:[%s3 + $0x320] sm:$0xff]
  %v1521 = vld [vmem:[%s3 + $0x328] sm:$0xff]
  %v1522 = vld [vmem:[%s3 + $0x330] sm:$0xff]
  %v1523 = vld [vmem:[%s3 + $0x338] sm:$0xff]
  %v1524 = vld [vmem:[%s3 + $0x340] sm:$0xff]
  %v1525 = vld [vmem:[%s3 + $0x348] sm:$0xff]
  %v1526 = vld [vmem:[%s3 + $0x350] sm:$0xff]
  %v1527 = vld [vmem:[%s3 + $0x358] sm:$0xff]
  %v1528 = vld [vmem:[%s3 + $0x360] sm:$0xff]
  %v1529 = vld [vmem:[%s3 + $0x368] sm:$0xff]
  %v1530 = vld [vmem:[%s3 + $0x370] sm:$0xff]
  %v1531 = vld [vmem:[%s3 + $0x378] sm:$0xff]
  %v1532 = vld [vmem:[%s3 + $0x380] sm:$0xff]
  %v1533 = vld [vmem:[%s3 + $0x388] sm:$0xff]
  %v1534 = vld [vmem:[%s3 + $0x390] sm:$0xff]
  %v1535 = vld [vmem:[%s3 + $0x398] sm:$0xff]
  %v1536 = vld [vmem:[%s3 + $0x3a0] sm:$0xff]
  %v1537 = vld [vmem:[%s3 + $0x3a8] sm:$0xff]
  %v1538 = vld [vmem:[%s3 + $0x3b0] sm:$0xff]
  %v1539 = vld [vmem:[%s3 + $0x3b8] sm:$0xff]
  %v1540 = vld [vmem:[%s3 + $0x3c0] sm:$0xff]
  %v1541 = vld [vmem:[%s3 + $0x3c8] sm:$0xff]
  %v1542 = vld [vmem:[%s3 + $0x3d0] sm:$0xff]
  %v1543 = vld [vmem:[%s3 + $0x3d8] sm:$0xff]
  %v1544 = vld [vmem:[%s3 + $0x3e0] sm:$0xff]
  %v1545 = vld [vmem:[%s3 + $0x3e8] sm:$0xff]
  %v1546 = vld [vmem:[%s3 + $0x3f0] sm:$0xff]
  %v1547 = vld [vmem:[%s3 + $0x3f8] sm:$0xff]
  %1548 = vmatprep.subr.mxu0 %v1485
  %1549 = vmatpush1.msra.mxu0 %v1484
  %1550 = vmatprep.subr.mxu0 %v1487
  %1551 = vmatpush1.msra.mxu0 %v1486
  %1552 = vmatprep.subr.mxu0 %v1489
  %1553 = vmatpush1.msra.mxu0 %v1488
  %1554 = vmatprep.subr.mxu0 %v1491
  %1555 = vmatpush1.msra.mxu0 %v1490
  %1556 = vmatprep.subr.mxu0 %v1493
  %1557 = vmatpush1.msra.mxu0 %v1492
  %1558 = vmatprep.subr.mxu0 %v1495
  %1559 = vmatpush1.msra.mxu0 %v1494
  %1560 = vmatprep.subr.mxu0 %v1497
  %1561 = vmatpush1.msra.mxu0 %v1496
  %1562 = vmatprep.subr.mxu0 %v1499
  %1563 = vmatpush1.msra.mxu0 %v1498
  %1564 = vmatprep.subr.mxu0 %v1501
  %1565 = vmatpush1.msra.mxu0 %v1500
  %1566 = vmatprep.subr.mxu0 %v1503
  %1567 = vmatpush1.msra.mxu0 %v1502
  %1568 = vmatprep.subr.mxu0 %v1505
  %1569 = vmatpush1.msra.mxu0 %v1504
  %1570 = vmatprep.subr.mxu0 %v1507
  %1571 = vmatpush1.msra.mxu0 %v1506
  %1572 = vmatprep.subr.mxu0 %v1509
  %1573 = vmatpush1.msra.mxu0 %v1508
  %1574 = vmatprep.subr.mxu0 %v1511
  %1575 = vmatpush1.msra.mxu0 %v1510
  %1576 = vmatprep.subr.mxu0 %v1513
  %1577 = vmatpush1.msra.mxu0 %v1512
  %1578 = vmatprep.subr.mxu0 %v1515
  %1579 = vmatpush1.msra.mxu0 %v1514
  %1580 = vmatprep.subr.mxu0 %v1517
  %1581 = vmatpush1.msra.mxu0 %v1516
  %1582 = vmatprep.subr.mxu0 %v1519
  %1583 = vmatpush1.msra.mxu0 %v1518
  %1584 = vmatprep.subr.mxu0 %v1521
  %1585 = vmatpush1.msra.mxu0 %v1520
  %1586 = vmatprep.subr.mxu0 %v1523
  %1587 = vmatpush1.msra.mxu0 %v1522
  %1588 = vmatprep.subr.mxu0 %v1525
  %1589 = vmatpush1.msra.mxu0 %v1524
  %1590 = vmatprep.subr.mxu0 %v1527
  %1591 = vmatpush1.msra.mxu0 %v1526
  %1592 = vmatprep.subr.mxu0 %v1529
  %1593 = vmatpush1.msra.mxu0 %v1528
  %1594 = vmatprep.subr.mxu0 %v1531
  %1595 = vmatpush1.msra.mxu0 %v1530
  %1596 = vmatprep.subr.mxu0 %v1533
  %1597 = vmatpush1.msra.mxu0 %v1532
  %1598 = vmatprep.subr.mxu0 %v1535
  %1599 = vmatpush1.msra.mxu0 %v1534
  %1600 = vmatprep.subr.mxu0 %v1537
  %1601 = vmatpush1.msra.mxu0 %v1536
  %1602 = vmatprep.subr.mxu0 %v1539
  %1603 = vmatpush1.msra.mxu0 %v1538
  %1604 = vmatprep.subr.mxu0 %v1541
  %1605 = vmatpush1.msra.mxu0 %v1540
  %1606 = vmatprep.subr.mxu0 %v1543
  %1607 = vmatpush1.msra.mxu0 %v1542
  %1608 = vmatprep.subr.mxu0 %v1545
  %1609 = vmatpush1.msra.mxu0 %v1544
  %1610 = vmatprep.subr.mxu0 %v1547
  %1611 = vmatpush1.msra.mxu0 %v1546
  %1612 = vmatprep.mubr.f32.mxu0 %v1411
  %1613 = vmatmul.mubr.f32.gmra.mrb[0].mxu0 %v1410
  %v1614 = vpop.f32.mrb[0].mxu0
  %v1615 = vadd.f32 0.0, %v1614
  %v1616 = vpop.f32.mrb[0].mxu0
  %v1617 = vadd.f32 0.0, %v1616
  %1618 = vmatprep.mubr.f32.mxu0 %v1481
  %1619 = vmatmul.mubr.f32.gmra.mrb[0].mxu0 %v1480
  %v1620 = vpop.f32.mrb[0].mxu0
  %v1621 = vadd.f32 0.0, %v1620
  %v1622 = vpop.f32.mrb[0].mxu0
  %v1623 = vadd.f32 0.0, %v1622
  %1624 = vmatprep.mubr.f32.mxu0 %v1415
  %1625 = vmatmul.mubr.f32.gmra.mrb[0].mxu0 %v1414
  %v1626 = vpop.f32.mrb[0].mxu0
  %v1627 = vadd.f32 0.0, %v1626
  %v1628 = vpop.f32.mrb[0].mxu0
  %v1629 = vadd.f32 0.0, %v1628
  %1630 = vmatprep.mubr.f32.mxu0 %v1483
  %1631 = vmatmul.mubr.f32.gmra.mrb[0].mxu0 %v1482
  %v1632 = vpop.f32.mrb[0].mxu0
  %v1633 = vadd.f32 0.0, %v1632
  %v1634 = vpop.f32.mrb[0].mxu0
  %v1635 = vadd.f32 0.0, %v1634
  %1636 = vdwg.mxu0
  %1637 = vmatprep.subr.mxu0 %v1417
  %1638 = vmatpush1.msra.mxu0 %v1416
  %1639 = vmatprep.subr.mxu0 %v1419
  %1640 = vmatpush1.msra.mxu0 %v1418
  %1641 = vmatprep.subr.mxu0 %v1421
  %1642 = vmatpush1.msra.mxu0 %v1420
  %1643 = vmatprep.subr.mxu0 %v1423
  %1644 = vmatpush1.msra.mxu0 %v1422
  %1645 = vmatprep.subr.mxu0 %v1425
  %1646 = vmatpush1.msra.mxu0 %v1424
  %1647 = vmatprep.subr.mxu0 %v1427
  %1648 = vmatpush1.msra.mxu0 %v1426
  %1649 = vmatprep.subr.mxu0 %v1429
  %1650 = vmatpush1.msra.mxu0 %v1428
  %1651 = vmatprep.subr.mxu0 %v1431
  %1652 = vmatpush1.msra.mxu0 %v1430
  %1653 = vmatprep.subr.mxu0 %v1433
  %1654 = vmatpush1.msra.mxu0 %v1432
  %1655 = vmatprep.subr.mxu0 %v1435
  %1656 = vmatpush1.msra.mxu0 %v1434
  %1657 = vmatprep.subr.mxu0 %v1437
  %1658 = vmatpush1.msra.mxu0 %v1436
  %1659 = vmatprep.subr.mxu0 %v1439
  %1660 = vmatpush1.msra.mxu0 %v1438
  %1661 = vmatprep.subr.mxu0 %v1441
  %1662 = vmatpush1.msra.mxu0 %v1440
  %1663 = vmatprep.subr.mxu0 %v1443
  %1664 = vmatpush1.msra.mxu0 %v1442
  %1665 = vmatprep.subr.mxu0 %v1445
  %1666 = vmatpush1.msra.mxu0 %v1444
  %1667 = vmatprep.subr.mxu0 %v1447
  %1668 = vmatpush1.msra.mxu0 %v1446
  %1669 = vmatprep.subr.mxu0 %v1449
  %1670 = vmatpush1.msra.mxu0 %v1448
  %1671 = vmatprep.subr.mxu0 %v1451
  %1672 = vmatpush1.msra.mxu0 %v1450
  %1673 = vmatprep.subr.mxu0 %v1453
  %1674 = vmatpush1.msra.mxu0 %v1452
  %1675 = vmatprep.subr.mxu0 %v1455
  %1676 = vmatpush1.msra.mxu0 %v1454
  %1677 = vmatprep.subr.mxu0 %v1457
  %1678 = vmatpush1.msra.mxu0 %v1456
  %1679 = vmatprep.subr.mxu0 %v1459
  %1680 = vmatpush1.msra.mxu0 %v1458
  %1681 = vmatprep.subr.mxu0 %v1461
  %1682 = vmatpush1.msra.mxu0 %v1460
  %1683 = vmatprep.subr.mxu0 %v1463
  %1684 = vmatpush1.msra.mxu0 %v1462
  %1685 = vmatprep.subr.mxu0 %v1465
  %1686 = vmatpush1.msra.mxu0 %v1464
  %1687 = vmatprep.subr.mxu0 %v1467
  %1688 = vmatpush1.msra.mxu0 %v1466
  %1689 = vmatprep.subr.mxu0 %v1469
  %1690 = vmatpush1.msra.mxu0 %v1468
  %1691 = vmatprep.subr.mxu0 %v1471
  %1692 = vmatpush1.msra.mxu0 %v1470
  %1693 = vmatprep.subr.mxu0 %v1473
  %1694 = vmatpush1.msra.mxu0 %v1472
  %1695 = vmatprep.subr.mxu0 %v1475
  %1696 = vmatpush1.msra.mxu0 %v1474
  %1697 = vmatprep.subr.mxu0 %v1477
  %1698 = vmatpush1.msra.mxu0 %v1476
  %1699 = vmatprep.subr.mxu0 %v1479
  %1700 = vmatpush1.msra.mxu0 %v1478
  %1701 = vmatprep.mubr.f32.mxu0 %v1409
  %1702 = vmatmul.mubr.f32.gmra.mrb[0].mxu0 %v1408
  %v1703 = vpop.f32.mrb[0].mxu0
  %v1704 = vadd.f32 %v1615, %v1703
  %v1705 = vpop.f32.mrb[0].mxu0
  %v1706 = vadd.f32 %v1617, %v1705
  %1707 = vmatprep.mubr.f32.mxu0 %v1411
  %1708 = vmatmul.mubr.f32.gmra.mrb[0].mxu0 %v1410
  %v1709 = vpop.f32.mrb[0].mxu0
  %v1710 = vadd.f32 %v1621, %v1709
  %v1711 = vpop.f32.mrb[0].mxu0
  %v1712 = vadd.f32 %v1623, %v1711
  %1713 = vmatprep.mubr.f32.mxu0 %v1413
  %1714 = vmatmul.mubr.f32.gmra.mrb[0].mxu0 %v1412
  %v1715 = vpop.f32.mrb[0].mxu0
  %v1716 = vadd.f32 %v1627, %v1715
  %v1717 = vpop.f32.mrb[0].mxu0
  %v1718 = vadd.f32 %v1629, %v1717
  %1719 = vmatprep.mubr.f32.mxu0 %v1415
  %1720 = vmatmul.mubr.f32.gmra.mrb[0].mxu0 %v1414
  %v1721 = vpop.f32.mrb[0].mxu0
  %v1722 = vadd.f32 %v1633, %v1721
  %v1723 = vpop.f32.mrb[0].mxu0
  %v1724 = vadd.f32 %v1635, %v1723
  %1725 = vdwg.mxu0
  %v1726 = vld [vmem:[#allocation2 + $0x20] sm:$0xff]
  %v1727 = vld [vmem:[#allocation2 + $0x28] sm:$0xff]
  %v1728 = vld [vmem:[#allocation2 + $0x30] sm:$0xff]
  %v1729 = vld [vmem:[#allocation2 + $0x38] sm:$0xff]
  %v1730 = vld [vmem:[#allocation2 + $0x60] sm:$0xff]
  %v1731 = vld [vmem:[#allocation2 + $0x68] sm:$0xff]
  %v1732 = vld [vmem:[#allocation2 + $0x70] sm:$0xff]
  %v1733 = vld [vmem:[#allocation2 + $0x78] sm:$0xff]
  %v1734 = vld [vmem:[%s3 + $0x400] sm:$0xff]
  %v1735 = vld [vmem:[%s3 + $0x408] sm:$0xff]
  %v1736 = vld [vmem:[%s3 + $0x410] sm:$0xff]
  %v1737 = vld [vmem:[%s3 + $0x418] sm:$0xff]
  %v1738 = vld [vmem:[%s3 + $0x420] sm:$0xff]
  %v1739 = vld [vmem:[%s3 + $0x428] sm:$0xff]
  %v1740 = vld [vmem:[%s3 + $0x430] sm:$0xff]
  %v1741 = vld [vmem:[%s3 + $0x438] sm:$0xff]
  %v1742 = vld [vmem:[%s3 + $0x440] sm:$0xff]
  %v1743 = vld [vmem:[%s3 + $0x448] sm:$0xff]
  %v1744 = vld [vmem:[%s3 + $0x450] sm:$0xff]
  %v1745 = vld [vmem:[%s3 + $0x458] sm:$0xff]
  %v1746 = vld [vmem:[%s3 + $0x460] sm:$0xff]
  %v1747 = vld [vmem:[%s3 + $0x468] sm:$0xff]
  %v1748 = vld [vmem:[%s3 + $0x470] sm:$0xff]
  %v1749 = vld [vmem:[%s3 + $0x478] sm:$0xff]
  %v1750 = vld [vmem:[%s3 + $0x480] sm:$0xff]
  %v1751 = vld [vmem:[%s3 + $0x488] sm:$0xff]
  %v1752 = vld [vmem:[%s3 + $0x490] sm:$0xff]
  %v1753 = vld [vmem:[%s3 + $0x498] sm:$0xff]
  %v1754 = vld [vmem:[%s3 + $0x4a0] sm:$0xff]
  %v1755 = vld [vmem:[%s3 + $0x4a8] sm:$0xff]
  %v1756 = vld [vmem:[%s3 + $0x4b0] sm:$0xff]
  %v1757 = vld [vmem:[%s3 + $0x4b8] sm:$0xff]
  %v1758 = vld [vmem:[%s3 + $0x4c0] sm:$0xff]
  %v1759 = vld [vmem:[%s3 + $0x4c8] sm:$0xff]
  %v1760 = vld [vmem:[%s3 + $0x4d0] sm:$0xff]
  %v1761 = vld [vmem:[%s3 + $0x4d8] sm:$0xff]
  %v1762 = vld [vmem:[%s3 + $0x4e0] sm:$0xff]
  %v1763 = vld [vmem:[%s3 + $0x4e8] sm:$0xff]
  %v1764 = vld [vmem:[%s3 + $0x4f0] sm:$0xff]
  %v1765 = vld [vmem:[%s3 + $0x4f8] sm:$0xff]
  %v1766 = vld [vmem:[%s3 + $0x500] sm:$0xff]
  %v1767 = vld [vmem:[%s3 + $0x508] sm:$0xff]
  %v1768 = vld [vmem:[%s3 + $0x510] sm:$0xff]
  %v1769 = vld [vmem:[%s3 + $0x518] sm:$0xff]
  %v1770 = vld [vmem:[%s3 + $0x520] sm:$0xff]
  %v1771 = vld [vmem:[%s3 + $0x528] sm:$0xff]
  %v1772 = vld [vmem:[%s3 + $0x530] sm:$0xff]
  %v1773 = vld [vmem:[%s3 + $0x538] sm:$0xff]
  %v1774 = vld [vmem:[%s3 + $0x540] sm:$0xff]
  %v1775 = vld [vmem:[%s3 + $0x548] sm:$0xff]
  %v1776 = vld [vmem:[%s3 + $0x550] sm:$0xff]
  %v1777 = vld [vmem:[%s3 + $0x558] sm:$0xff]
  %v1778 = vld [vmem:[%s3 + $0x560] sm:$0xff]
  %v1779 = vld [vmem:[%s3 + $0x568] sm:$0xff]
  %v1780 = vld [vmem:[%s3 + $0x570] sm:$0xff]
  %v1781 = vld [vmem:[%s3 + $0x578] sm:$0xff]
  %v1782 = vld [vmem:[%s3 + $0x580] sm:$0xff]
  %v1783 = vld [vmem:[%s3 + $0x588] sm:$0xff]
  %v1784 = vld [vmem:[%s3 + $0x590] sm:$0xff]
  %v1785 = vld [vmem:[%s3 + $0x598] sm:$0xff]
  %v1786 = vld [vmem:[%s3 + $0x5a0] sm:$0xff]
  %v1787 = vld [vmem:[%s3 + $0x5a8] sm:$0xff]
  %v1788 = vld [vmem:[%s3 + $0x5b0] sm:$0xff]
  %v1789 = vld [vmem:[%s3 + $0x5b8] sm:$0xff]
  %v1790 = vld [vmem:[%s3 + $0x5c0] sm:$0xff]
  %v1791 = vld [vmem:[%s3 + $0x5c8] sm:$0xff]
  %v1792 = vld [vmem:[%s3 + $0x5d0] sm:$0xff]
  %v1793 = vld [vmem:[%s3 + $0x5d8] sm:$0xff]
  %v1794 = vld [vmem:[%s3 + $0x5e0] sm:$0xff]
  %v1795 = vld [vmem:[%s3 + $0x5e8] sm:$0xff]
  %v1796 = vld [vmem:[%s3 + $0x5f0] sm:$0xff]
  %v1797 = vld [vmem:[%s3 + $0x5f8] sm:$0xff]
  %1798 = vmatprep.subr.mxu0 %v1735
  %1799 = vmatpush1.msra.mxu0 %v1734
  %1800 = vmatprep.subr.mxu0 %v1737
  %1801 = vmatpush1.msra.mxu0 %v1736
  %1802 = vmatprep.subr.mxu0 %v1739
  %1803 = vmatpush1.msra.mxu0 %v1738
  %1804 = vmatprep.subr.mxu0 %v1741
  %1805 = vmatpush1.msra.mxu0 %v1740
  %1806 = vmatprep.subr.mxu0 %v1743
  %1807 = vmatpush1.msra.mxu0 %v1742
  %1808 = vmatprep.subr.mxu0 %v1745
  %1809 = vmatpush1.msra.mxu0 %v1744
  %1810 = vmatprep.subr.mxu0 %v1747
  %1811 = vmatpush1.msra.mxu0 %v1746
  %1812 = vmatprep.subr.mxu0 %v1749
  %1813 = vmatpush1.msra.mxu0 %v1748
  %1814 = vmatprep.subr.mxu0 %v1751
  %1815 = vmatpush1.msra.mxu0 %v1750
  %1816 = vmatprep.subr.mxu0 %v1753
  %1817 = vmatpush1.msra.mxu0 %v1752
  %1818 = vmatprep.subr.mxu0 %v1755
  %1819 = vmatpush1.msra.mxu0 %v1754
  %1820 = vmatprep.subr.mxu0 %v1757
  %1821 = vmatpush1.msra.mxu0 %v1756
  %1822 = vmatprep.subr.mxu0 %v1759
  %1823 = vmatpush1.msra.mxu0 %v1758
  %1824 = vmatprep.subr.mxu0 %v1761
  %1825 = vmatpush1.msra.mxu0 %v1760
  %1826 = vmatprep.subr.mxu0 %v1763
  %1827 = vmatpush1.msra.mxu0 %v1762
  %1828 = vmatprep.subr.mxu0 %v1765
  %1829 = vmatpush1.msra.mxu0 %v1764
  %1830 = vmatprep.subr.mxu0 %v1767
  %1831 = vmatpush1.msra.mxu0 %v1766
  %1832 = vmatprep.subr.mxu0 %v1769
  %1833 = vmatpush1.msra.mxu0 %v1768
  %1834 = vmatprep.subr.mxu0 %v1771
  %1835 = vmatpush1.msra.mxu0 %v1770
  %1836 = vmatprep.subr.mxu0 %v1773
  %1837 = vmatpush1.msra.mxu0 %v1772
  %1838 = vmatprep.subr.mxu0 %v1775
  %1839 = vmatpush1.msra.mxu0 %v1774
  %1840 = vmatprep.subr.mxu0 %v1777
  %1841 = vmatpush1.msra.mxu0 %v1776
  %1842 = vmatprep.subr.mxu0 %v1779
  %1843 = vmatpush1.msra.mxu0 %v1778
  %1844 = vmatprep.subr.mxu0 %v1781
  %1845 = vmatpush1.msra.mxu0 %v1780
  %1846 = vmatprep.subr.mxu0 %v1783
  %1847 = vmatpush1.msra.mxu0 %v1782
  %1848 = vmatprep.subr.mxu0 %v1785
  %1849 = vmatpush1.msra.mxu0 %v1784
  %1850 = vmatprep.subr.mxu0 %v1787
  %1851 = vmatpush1.msra.mxu0 %v1786
  %1852 = vmatprep.subr.mxu0 %v1789
  %1853 = vmatpush1.msra.mxu0 %v1788
  %1854 = vmatprep.subr.mxu0 %v1791
  %1855 = vmatpush1.msra.mxu0 %v1790
  %1856 = vmatprep.subr.mxu0 %v1793
  %1857 = vmatpush1.msra.mxu0 %v1792
  %1858 = vmatprep.subr.mxu0 %v1795
  %1859 = vmatpush1.msra.mxu0 %v1794
  %1860 = vmatprep.subr.mxu0 %v1797
  %1861 = vmatpush1.msra.mxu0 %v1796
  %1862 = vmatprep.mubr.f32.mxu0 %v1727
  %1863 = vmatmul.mubr.f32.gmra.mrb[0].mxu0 %v1726
  %v1864 = vpop.f32.mrb[0].mxu0
  %v1865 = vadd.f32 0.0, %v1864
  %v1866 = vpop.f32.mrb[0].mxu0
  %v1867 = vadd.f32 0.0, %v1866
  %1868 = vmatprep.mubr.f32.mxu0 %v1729
  %1869 = vmatmul.mubr.f32.gmra.mrb[0].mxu0 %v1728
  %v1870 = vpop.f32.mrb[0].mxu0
  %v1871 = vadd.f32 0.0, %v1870
  %v1872 = vpop.f32.mrb[0].mxu0
  %v1873 = vadd.f32 0.0, %v1872
  %1874 = vmatprep.mubr.f32.mxu0 %v1731
  %1875 = vmatmul.mubr.f32.gmra.mrb[0].mxu0 %v1730
  %v1876 = vpop.f32.mrb[0].mxu0
  %v1877 = vadd.f32 0.0, %v1876
  %v1878 = vpop.f32.mrb[0].mxu0
  %v1879 = vadd.f32 0.0, %v1878
  %1880 = vmatprep.mubr.f32.mxu0 %v1733
  %1881 = vmatmul.mubr.f32.gmra.mrb[0].mxu0 %v1732
  %v1882 = vpop.f32.mrb[0].mxu0
  %v1883 = vadd.f32 0.0, %v1882
  %v1884 = vpop.f32.mrb[0].mxu0
  %v1885 = vadd.f32 0.0, %v1884
  %1886 = vdwg.mxu0
  %v1887 = vadd.f32 %v1704, %v1865
  %v1888 = vadd.f32 %v1706, %v1867
  %v1889 = vadd.f32 %v1710, %v1871
  %v1890 = vadd.f32 %v1712, %v1873
  %v1891 = vadd.f32 %v1716, %v1877
  %v1892 = vadd.f32 %v1718, %v1879
  %v1893 = vadd.f32 %v1722, %v1883
  %v1894 = vadd.f32 %v1724, %v1885
  %v1895 = vld [vmem:[#allocation2 + $0x80] sm:$0xff]
  %v1896 = vld [vmem:[#allocation2 + $0x88] sm:$0xff]
  %v1897 = vld [vmem:[#allocation2 + $0x90] sm:$0xff]
  %v1898 = vld [vmem:[#allocation2 + $0x98] sm:$0xff]
  %v1899 = vld [vmem:[%s3 + $0x600] sm:$0xff]
  %v1900 = vld [vmem:[%s3 + $0x608] sm:$0xff]
  %v1901 = vld [vmem:[%s3 + $0x610] sm:$0xff]
  %v1902 = vld [vmem:[%s3 + $0x618] sm:$0xff]
  %v1903 = vld [vmem:[%s3 + $0x620] sm:$0xff]
  %v1904 = vld [vmem:[%s3 + $0x628] sm:$0xff]
  %v1905 = vld [vmem:[%s3 + $0x630] sm:$0xff]
  %v1906 = vld [vmem:[%s3 + $0x638] sm:$0xff]
  %v1907 = vld [vmem:[%s3 + $0x640] sm:$0xff]
  %v1908 = vld [vmem:[%s3 + $0x648] sm:$0xff]
  %v1909 = vld [vmem:[%s3 + $0x650] sm:$0xff]
  %v1910 = vld [vmem:[%s3 + $0x658] sm:$0xff]
  %v1911 = vld [vmem:[%s3 + $0x660] sm:$0xff]
  %v1912 = vld [vmem:[%s3 + $0x668] sm:$0xff]
  %v1913 = vld [vmem:[%s3 + $0x670] sm:$0xff]
  %v1914 = vld [vmem:[%s3 + $0x678] sm:$0xff]
  %v1915 = vld [vmem:[%s3 + $0x680] sm:$0xff]
  %v1916 = vld [vmem:[%s3 + $0x688] sm:$0xff]
  %v1917 = vld [vmem:[%s3 + $0x690] sm:$0xff]
  %v1918 = vld [vmem:[%s3 + $0x698] sm:$0xff]
  %v1919 = vld [vmem:[%s3 + $0x6a0] sm:$0xff]
  %v1920 = vld [vmem:[%s3 + $0x6a8] sm:$0xff]
  %v1921 = vld [vmem:[%s3 + $0x6b0] sm:$0xff]
  %v1922 = vld [vmem:[%s3 + $0x6b8] sm:$0xff]
  %v1923 = vld [vmem:[%s3 + $0x6c0] sm:$0xff]
  %v1924 = vld [vmem:[%s3 + $0x6c8] sm:$0xff]
  %v1925 = vld [vmem:[%s3 + $0x6d0] sm:$0xff]
  %v1926 = vld [vmem:[%s3 + $0x6d8] sm:$0xff]
  %v1927 = vld [vmem:[%s3 + $0x6e0] sm:$0xff]
  %v1928 = vld [vmem:[%s3 + $0x6e8] sm:$0xff]
  %v1929 = vld [vmem:[%s3 + $0x6f0] sm:$0xff]
  %v1930 = vld [vmem:[%s3 + $0x6f8] sm:$0xff]
  %v1931 = vld [vmem:[%s3 + $0x700] sm:$0xff]
  %v1932 = vld [vmem:[%s3 + $0x708] sm:$0xff]
  %v1933 = vld [vmem:[%s3 + $0x710] sm:$0xff]
  %v1934 = vld [vmem:[%s3 + $0x718] sm:$0xff]
  %v1935 = vld [vmem:[%s3 + $0x720] sm:$0xff]
  %v1936 = vld [vmem:[%s3 + $0x728] sm:$0xff]
  %v1937 = vld [vmem:[%s3 + $0x730] sm:$0xff]
  %v1938 = vld [vmem:[%s3 + $0x738] sm:$0xff]
  %v1939 = vld [vmem:[%s3 + $0x740] sm:$0xff]
  %v1940 = vld [vmem:[%s3 + $0x748] sm:$0xff]
  %v1941 = vld [vmem:[%s3 + $0x750] sm:$0xff]
  %v1942 = vld [vmem:[%s3 + $0x758] sm:$0xff]
  %v1943 = vld [vmem:[%s3 + $0x760] sm:$0xff]
  %v1944 = vld [vmem:[%s3 + $0x768] sm:$0xff]
  %v1945 = vld [vmem:[%s3 + $0x770] sm:$0xff]
  %v1946 = vld [vmem:[%s3 + $0x778] sm:$0xff]
  %v1947 = vld [vmem:[%s3 + $0x780] sm:$0xff]
  %v1948 = vld [vmem:[%s3 + $0x788] sm:$0xff]
  %v1949 = vld [vmem:[%s3 + $0x790] sm:$0xff]
  %v1950 = vld [vmem:[%s3 + $0x798] sm:$0xff]
  %v1951 = vld [vmem:[%s3 + $0x7a0] sm:$0xff]
  %v1952 = vld [vmem:[%s3 + $0x7a8] sm:$0xff]
  %v1953 = vld [vmem:[%s3 + $0x7b0] sm:$0xff]
  %v1954 = vld [vmem:[%s3 + $0x7b8] sm:$0xff]
  %v1955 = vld [vmem:[%s3 + $0x7c0] sm:$0xff]
  %v1956 = vld [vmem:[%s3 + $0x7c8] sm:$0xff]
  %v1957 = vld [vmem:[%s3 + $0x7d0] sm:$0xff]
  %v1958 = vld [vmem:[%s3 + $0x7d8] sm:$0xff]
  %v1959 = vld [vmem:[%s3 + $0x7e0] sm:$0xff]
  %v1960 = vld [vmem:[%s3 + $0x7e8] sm:$0xff]
  %v1961 = vld [vmem:[%s3 + $0x7f0] sm:$0xff]
  %v1962 = vld [vmem:[%s3 + $0x7f8] sm:$0xff]
  %1963 = vmatprep.subr.mxu0 %v1900
  %1964 = vmatpush1.msra.mxu0 %v1899
  %1965 = vmatprep.subr.mxu0 %v1902
  %1966 = vmatpush1.msra.mxu0 %v1901
  %1967 = vmatprep.subr.mxu0 %v1904
  %1968 = vmatpush1.msra.mxu0 %v1903
  %1969 = vmatprep.subr.mxu0 %v1906
  %1970 = vmatpush1.msra.mxu0 %v1905
  %1971 = vmatprep.subr.mxu0 %v1908
  %1972 = vmatpush1.msra.mxu0 %v1907
  %1973 = vmatprep.subr.mxu0 %v1910
  %1974 = vmatpush1.msra.mxu0 %v1909
  %1975 = vmatprep.subr.mxu0 %v1912
  %1976 = vmatpush1.msra.mxu0 %v1911
  %1977 = vmatprep.subr.mxu0 %v1914
  %1978 = vmatpush1.msra.mxu0 %v1913
  %1979 = vmatprep.subr.mxu0 %v1916
  %1980 = vmatpush1.msra.mxu0 %v1915
  %1981 = vmatprep.subr.mxu0 %v1918
  %1982 = vmatpush1.msra.mxu0 %v1917
  %1983 = vmatprep.subr.mxu0 %v1920
  %1984 = vmatpush1.msra.mxu0 %v1919
  %1985 = vmatprep.subr.mxu0 %v1922
  %1986 = vmatpush1.msra.mxu0 %v1921
  %1987 = vmatprep.subr.mxu0 %v1924
  %1988 = vmatpush1.msra.mxu0 %v1923
  %1989 = vmatprep.subr.mxu0 %v1926
  %1990 = vmatpush1.msra.mxu0 %v1925
  %1991 = vmatprep.subr.mxu0 %v1928
  %1992 = vmatpush1.msra.mxu0 %v1927
  %1993 = vmatprep.subr.mxu0 %v1930
  %1994 = vmatpush1.msra.mxu0 %v1929
  %1995 = vmatprep.subr.mxu0 %v1932
  %1996 = vmatpush1.msra.mxu0 %v1931
  %1997 = vmatprep.subr.mxu0 %v1934
  %1998 = vmatpush1.msra.mxu0 %v1933
  %1999 = vmatprep.subr.mxu0 %v1936
  %2000 = vmatpush1.msra.mxu0 %v1935
  %2001 = vmatprep.subr.mxu0 %v1938
  %2002 = vmatpush1.msra.mxu0 %v1937
  %2003 = vmatprep.subr.mxu0 %v1940
  %2004 = vmatpush1.msra.mxu0 %v1939
  %2005 = vmatprep.subr.mxu0 %v1942
  %2006 = vmatpush1.msra.mxu0 %v1941
  %2007 = vmatprep.subr.mxu0 %v1944
  %2008 = vmatpush1.msra.mxu0 %v1943
  %2009 = vmatprep.subr.mxu0 %v1946
  %2010 = vmatpush1.msra.mxu0 %v1945
  %2011 = vmatprep.subr.mxu0 %v1948
  %2012 = vmatpush1.msra.mxu0 %v1947
  %2013 = vmatprep.subr.mxu0 %v1950
  %2014 = vmatpush1.msra.mxu0 %v1949
  %2015 = vmatprep.subr.mxu0 %v1952
  %2016 = vmatpush1.msra.mxu0 %v1951
  %2017 = vmatprep.subr.mxu0 %v1954
  %2018 = vmatpush1.msra.mxu0 %v1953
  %2019 = vmatprep.subr.mxu0 %v1956
  %2020 = vmatpush1.msra.mxu0 %v1955
  %2021 = vmatprep.subr.mxu0 %v1958
  %2022 = vmatpush1.msra.mxu0 %v1957
  %2023 = vmatprep.subr.mxu0 %v1960
  %2024 = vmatpush1.msra.mxu0 %v1959
  %2025 = vmatprep.subr.mxu0 %v1962
  %2026 = vmatpush1.msra.mxu0 %v1961
  %2027 = vmatprep.mubr.f32.mxu0 %v1413
  %2028 = vmatmul.mubr.f32.gmra.mrb[0].mxu0 %v1412
  %v2029 = vpop.f32.mrb[0].mxu0
  %v2030 = vadd.f32 0.0, %v2029
  %v2031 = vpop.f32.mrb[0].mxu0
  %v2032 = vadd.f32 0.0, %v2031
  %2033 = vmatprep.mubr.f32.mxu0 %v1415
  %2034 = vmatmul.mubr.f32.gmra.mrb[0].mxu0 %v1414
  %v2035 = vpop.f32.mrb[0].mxu0
  %v2036 = vadd.f32 0.0, %v2035
  %v2037 = vpop.f32.mrb[0].mxu0
  %v2038 = vadd.f32 0.0, %v2037
  %2039 = vmatprep.mubr.f32.mxu0 %v1896
  %2040 = vmatmul.mubr.f32.gmra.mrb[0].mxu0 %v1895
  %v2041 = vpop.f32.mrb[0].mxu0
  %v2042 = vadd.f32 0.0, %v2041
  %v2043 = vpop.f32.mrb[0].mxu0
  %v2044 = vadd.f32 0.0, %v2043
  %2045 = vmatprep.mubr.f32.mxu0 %v1898
  %2046 = vmatmul.mubr.f32.gmra.mrb[0].mxu0 %v1897
  %v2047 = vpop.f32.mrb[0].mxu0
  %v2048 = vadd.f32 0.0, %v2047
  %v2049 = vpop.f32.mrb[0].mxu0
  %v2050 = vadd.f32 0.0, %v2049
  %2051 = vdwg.mxu0
  %v2052 = vadd.f32 %v1887, %v2030
  %v2053 = vadd.f32 %v1888, %v2032
  %v2054 = vadd.f32 %v1889, %v2036
  %v2055 = vadd.f32 %v1890, %v2038
  %v2056 = vadd.f32 %v1891, %v2042
  %v2057 = vadd.f32 %v1892, %v2044
  %v2058 = vadd.f32 %v1893, %v2048
  %v2059 = vadd.f32 %v1894, %v2050
  %v2060 = vld [vmem:[#allocation2 + $0x90] sm:$0xff]
  %v2061 = vld [vmem:[#allocation2 + $0x98] sm:$0xff]
  %v2062 = vld [vmem:[#allocation2 + $0xa0] sm:$0xff]
  %v2063 = vld [vmem:[#allocation2 + $0xa8] sm:$0xff]
  %v2064 = vld [vmem:[%s3 + $0x800] sm:$0xff]
  %v2065 = vld [vmem:[%s3 + $0x808] sm:$0xff]
  %v2066 = vld [vmem:[%s3 + $0x810] sm:$0xff]
  %v2067 = vld [vmem:[%s3 + $0x818] sm:$0xff]
  %v2068 = vld [vmem:[%s3 + $0x820] sm:$0xff]
  %v2069 = vld [vmem:[%s3 + $0x828] sm:$0xff]
  %v2070 = vld [vmem:[%s3 + $0x830] sm:$0xff]
  %v2071 = vld [vmem:[%s3 + $0x838] sm:$0xff]
  %v2072 = vld [vmem:[%s3 + $0x840] sm:$0xff]
  %v2073 = vld [vmem:[%s3 + $0x848] sm:$0xff]
  %v2074 = vld [vmem:[%s3 + $0x850] sm:$0xff]
  %v2075 = vld [vmem:[%s3 + $0x858] sm:$0xff]
  %v2076 = vld [vmem:[%s3 + $0x860] sm:$0xff]
  %v2077 = vld [vmem:[%s3 + $0x868] sm:$0xff]
  %v2078 = vld [vmem:[%s3 + $0x870] sm:$0xff]
  %v2079 = vld [vmem:[%s3 + $0x878] sm:$0xff]
  %v2080 = vld [vmem:[%s3 + $0x880] sm:$0xff]
  %v2081 = vld [vmem:[%s3 + $0x888] sm:$0xff]
  %v2082 = vld [vmem:[%s3 + $0x890] sm:$0xff]
  %v2083 = vld [vmem:[%s3 + $0x898] sm:$0xff]
  %v2084 = vld [vmem:[%s3 + $0x8a0] sm:$0xff]
  %v2085 = vld [vmem:[%s3 + $0x8a8] sm:$0xff]
  %v2086 = vld [vmem:[%s3 + $0x8b0] sm:$0xff]
  %v2087 = vld [vmem:[%s3 + $0x8b8] sm:$0xff]
  %v2088 = vld [vmem:[%s3 + $0x8c0] sm:$0xff]
  %v2089 = vld [vmem:[%s3 + $0x8c8] sm:$0xff]
  %v2090 = vld [vmem:[%s3 + $0x8d0] sm:$0xff]
  %v2091 = vld [vmem:[%s3 + $0x8d8] sm:$0xff]
  %v2092 = vld [vmem:[%s3 + $0x8e0] sm:$0xff]
  %v2093 = vld [vmem:[%s3 + $0x8e8] sm:$0xff]
  %v2094 = vld [vmem:[%s3 + $0x8f0] sm:$0xff]
  %v2095 = vld [vmem:[%s3 + $0x8f8] sm:$0xff]
  %v2096 = vld [vmem:[%s3 + $0x900] sm:$0xff]
  %v2097 = vld [vmem:[%s3 + $0x908] sm:$0xff]
  %v2098 = vld [vmem:[%s3 + $0x910] sm:$0xff]
  %v2099 = vld [vmem:[%s3 + $0x918] sm:$0xff]
  %v2100 = vld [vmem:[%s3 + $0x920] sm:$0xff]
  %v2101 = vld [vmem:[%s3 + $0x928] sm:$0xff]
  %v2102 = vld [vmem:[%s3 + $0x930] sm:$0xff]
  %v2103 = vld [vmem:[%s3 + $0x938] sm:$0xff]
  %v2104 = vld [vmem:[%s3 + $0x940] sm:$0xff]
  %v2105 = vld [vmem:[%s3 + $0x948] sm:$0xff]
  %v2106 = vld [vmem:[%s3 + $0x950] sm:$0xff]
  %v2107 = vld [vmem:[%s3 + $0x958] sm:$0xff]
  %v2108 = vld [vmem:[%s3 + $0x960] sm:$0xff]
  %v2109 = vld [vmem:[%s3 + $0x968] sm:$0xff]
  %v2110 = vld [vmem:[%s3 + $0x970] sm:$0xff]
  %v2111 = vld [vmem:[%s3 + $0x978] sm:$0xff]
  %v2112 = vld [vmem:[%s3 + $0x980] sm:$0xff]
  %v2113 = vld [vmem:[%s3 + $0x988] sm:$0xff]
  %v2114 = vld [vmem:[%s3 + $0x990] sm:$0xff]
  %v2115 = vld [vmem:[%s3 + $0x998] sm:$0xff]
  %v2116 = vld [vmem:[%s3 + $0x9a0] sm:$0xff]
  %v2117 = vld [vmem:[%s3 + $0x9a8] sm:$0xff]
  %v2118 = vld [vmem:[%s3 + $0x9b0] sm:$0xff]
  %v2119 = vld [vmem:[%s3 + $0x9b8] sm:$0xff]
  %v2120 = vld [vmem:[%s3 + $0x9c0] sm:$0xff]
  %v2121 = vld [vmem:[%s3 + $0x9c8] sm:$0xff]
  %v2122 = vld [vmem:[%s3 + $0x9d0] sm:$0xff]
  %v2123 = vld [vmem:[%s3 + $0x9d8] sm:$0xff]
  %v2124 = vld [vmem:[%s3 + $0x9e0] sm:$0xff]
  %v2125 = vld [vmem:[%s3 + $0x9e8] sm:$0xff]
  %v2126 = vld [vmem:[%s3 + $0x9f0] sm:$0xff]
  %v2127 = vld [vmem:[%s3 + $0x9f8] sm:$0xff]
  %2128 = vmatprep.subr.mxu0 %v2065
  %2129 = vmatpush1.msra.mxu0 %v2064
  %2130 = vmatprep.subr.mxu0 %v2067
  %2131 = vmatpush1.msra.mxu0 %v2066
  %2132 = vmatprep.subr.mxu0 %v2069
  %2133 = vmatpush1.msra.mxu0 %v2068
  %2134 = vmatprep.subr.mxu0 %v2071
  %2135 = vmatpush1.msra.mxu0 %v2070
  %2136 = vmatprep.subr.mxu0 %v2073
  %2137 = vmatpush1.msra.mxu0 %v2072
  %2138 = vmatprep.subr.mxu0 %v2075
  %2139 = vmatpush1.msra.mxu0 %v2074
  %2140 = vmatprep.subr.mxu0 %v2077
  %2141 = vmatpush1.msra.mxu0 %v2076
  %2142 = vmatprep.subr.mxu0 %v2079
  %2143 = vmatpush1.msra.mxu0 %v2078
  %2144 = vmatprep.subr.mxu0 %v2081
  %2145 = vmatpush1.msra.mxu0 %v2080
  %2146 = vmatprep.subr.mxu0 %v2083
  %2147 = vmatpush1.msra.mxu0 %v2082
  %2148 = vmatprep.subr.mxu0 %v2085
  %2149 = vmatpush1.msra.mxu0 %v2084
  %2150 = vmatprep.subr.mxu0 %v2087
  %2151 = vmatpush1.msra.mxu0 %v2086
  %2152 = vmatprep.subr.mxu0 %v2089
  %2153 = vmatpush1.msra.mxu0 %v2088
  %2154 = vmatprep.subr.mxu0 %v2091
  %2155 = vmatpush1.msra.mxu0 %v2090
  %2156 = vmatprep.subr.mxu0 %v2093
  %2157 = vmatpush1.msra.mxu0 %v2092
  %2158 = vmatprep.subr.mxu0 %v2095
  %2159 = vmatpush1.msra.mxu0 %v2094
  %2160 = vmatprep.subr.mxu0 %v2097
  %2161 = vmatpush1.msra.mxu0 %v2096
  %2162 = vmatprep.subr.mxu0 %v2099
  %2163 = vmatpush1.msra.mxu0 %v2098
  %2164 = vmatprep.subr.mxu0 %v2101
  %2165 = vmatpush1.msra.mxu0 %v2100
  %2166 = vmatprep.subr.mxu0 %v2103
  %2167 = vmatpush1.msra.mxu0 %v2102
  %2168 = vmatprep.subr.mxu0 %v2105
  %2169 = vmatpush1.msra.mxu0 %v2104
  %2170 = vmatprep.subr.mxu0 %v2107
  %2171 = vmatpush1.msra.mxu0 %v2106
  %2172 = vmatprep.subr.mxu0 %v2109
  %2173 = vmatpush1.msra.mxu0 %v2108
  %2174 = vmatprep.subr.mxu0 %v2111
  %2175 = vmatpush1.msra.mxu0 %v2110
  %2176 = vmatprep.subr.mxu0 %v2113
  %2177 = vmatpush1.msra.mxu0 %v2112
  %2178 = vmatprep.subr.mxu0 %v2115
  %2179 = vmatpush1.msra.mxu0 %v2114
  %2180 = vmatprep.subr.mxu0 %v2117
  %2181 = vmatpush1.msra.mxu0 %v2116
  %2182 = vmatprep.subr.mxu0 %v2119
  %2183 = vmatpush1.msra.mxu0 %v2118
  %2184 = vmatprep.subr.mxu0 %v2121
  %2185 = vmatpush1.msra.mxu0 %v2120
  %2186 = vmatprep.subr.mxu0 %v2123
  %2187 = vmatpush1.msra.mxu0 %v2122
  %2188 = vmatprep.subr.mxu0 %v2125
  %2189 = vmatpush1.msra.mxu0 %v2124
  %2190 = vmatprep.subr.mxu0 %v2127
  %2191 = vmatpush1.msra.mxu0 %v2126
  %2192 = vmatprep.mubr.f32.mxu0 %v1415
  %2193 = vmatmul.mubr.f32.gmra.mrb[0].mxu0 %v1414
  %v2194 = vpop.f32.mrb[0].mxu0
  %v2195 = vadd.f32 0.0, %v2194
  %v2196 = vpop.f32.mrb[0].mxu0
  %v2197 = vadd.f32 0.0, %v2196
  %2198 = vmatprep.mubr.f32.mxu0 %v1483
  %2199 = vmatmul.mubr.f32.gmra.mrb[0].mxu0 %v1482
  %v2200 = vpop.f32.mrb[0].mxu0
  %v2201 = vadd.f32 0.0, %v2200
  %v2202 = vpop.f32.mrb[0].mxu0
  %v2203 = vadd.f32 0.0, %v2202
  %2204 = vmatprep.mubr.f32.mxu0 %v2061
  %2205 = vmatmul.mubr.f32.gmra.mrb[0].mxu0 %v2060
  %v2206 = vpop.f32.mrb[0].mxu0
  %v2207 = vadd.f32 0.0, %v2206
  %v2208 = vpop.f32.mrb[0].mxu0
  %v2209 = vadd.f32 0.0, %v2208
  %2210 = vmatprep.mubr.f32.mxu0 %v2063
  %2211 = vmatmul.mubr.f32.gmra.mrb[0].mxu0 %v2062
  %v2212 = vpop.f32.mrb[0].mxu0
  %v2213 = vadd.f32 0.0, %v2212
  %v2214 = vpop.f32.mrb[0].mxu0
  %v2215 = vadd.f32 0.0, %v2214
  %2216 = vdwg.mxu0
  %v2217 = vadd.f32 %v2052, %v2195
  %v2218 = vadd.f32 %v2053, %v2197
  %v2219 = vadd.f32 %v2054, %v2201
  %v2220 = vadd.f32 %v2055, %v2203
  %v2221 = vadd.f32 %v2056, %v2207
  %v2222 = vadd.f32 %v2057, %v2209
  %v2223 = vadd.f32 %v2058, %v2213
  %v2224 = vadd.f32 %v2059, %v2215
  %v2225 = vld [vmem:[#allocation2 + $0xa0] sm:$0xff]
  %v2226 = vld [vmem:[#allocation2 + $0xa8] sm:$0xff]
  %v2227 = vld [vmem:[#allocation2 + $0xb0] sm:$0xff]
  %v2228 = vld [vmem:[#allocation2 + $0xb8] sm:$0xff]
  %v2229 = vld [vmem:[%s3 + $0xa00] sm:$0xff]
  %v2230 = vld [vmem:[%s3 + $0xa08] sm:$0xff]
  %v2231 = vld [vmem:[%s3 + $0xa10] sm:$0xff]
  %v2232 = vld [vmem:[%s3 + $0xa18] sm:$0xff]
  %v2233 = vld [vmem:[%s3 + $0xa20] sm:$0xff]
  %v2234 = vld [vmem:[%s3 + $0xa28] sm:$0xff]
  %v2235 = vld [vmem:[%s3 + $0xa30] sm:$0xff]
  %v2236 = vld [vmem:[%s3 + $0xa38] sm:$0xff]
  %v2237 = vld [vmem:[%s3 + $0xa40] sm:$0xff]
  %v2238 = vld [vmem:[%s3 + $0xa48] sm:$0xff]
  %v2239 = vld [vmem:[%s3 + $0xa50] sm:$0xff]
  %v2240 = vld [vmem:[%s3 + $0xa58] sm:$0xff]
  %v2241 = vld [vmem:[%s3 + $0xa60] sm:$0xff]
  %v2242 = vld [vmem:[%s3 + $0xa68] sm:$0xff]
  %v2243 = vld [vmem:[%s3 + $0xa70] sm:$0xff]
  %v2244 = vld [vmem:[%s3 + $0xa78] sm:$0xff]
  %v2245 = vld [vmem:[%s3 + $0xa80] sm:$0xff]
  %v2246 = vld [vmem:[%s3 + $0xa88] sm:$0xff]
  %v2247 = vld [vmem:[%s3 + $0xa90] sm:$0xff]
  %v2248 = vld [vmem:[%s3 + $0xa98] sm:$0xff]
  %v2249 = vld [vmem:[%s3 + $0xaa0] sm:$0xff]
  %v2250 = vld [vmem:[%s3 + $0xaa8] sm:$0xff]
  %v2251 = vld [vmem:[%s3 + $0xab0] sm:$0xff]
  %v2252 = vld [vmem:[%s3 + $0xab8] sm:$0xff]
  %v2253 = vld [vmem:[%s3 + $0xac0] sm:$0xff]
  %v2254 = vld [vmem:[%s3 + $0xac8] sm:$0xff]
  %v2255 = vld [vmem:[%s3 + $0xad0] sm:$0xff]
  %v2256 = vld [vmem:[%s3 + $0xad8] sm:$0xff]
  %v2257 = vld [vmem:[%s3 + $0xae0] sm:$0xff]
  %v2258 = vld [vmem:[%s3 + $0xae8] sm:$0xff]
  %v2259 = vld [vmem:[%s3 + $0xaf0] sm:$0xff]
  %v2260 = vld [vmem:[%s3 + $0xaf8] sm:$0xff]
  %v2261 = vld [vmem:[%s3 + $0xb00] sm:$0xff]
  %v2262 = vld [vmem:[%s3 + $0xb08] sm:$0xff]
  %v2263 = vld [vmem:[%s3 + $0xb10] sm:$0xff]
  %v2264 = vld [vmem:[%s3 + $0xb18] sm:$0xff]
  %v2265 = vld [vmem:[%s3 + $0xb20] sm:$0xff]
  %v2266 = vld [vmem:[%s3 + $0xb28] sm:$0xff]
  %v2267 = vld [vmem:[%s3 + $0xb30] sm:$0xff]
  %v2268 = vld [vmem:[%s3 + $0xb38] sm:$0xff]
  %v2269 = vld [vmem:[%s3 + $0xb40] sm:$0xff]
  %v2270 = vld [vmem:[%s3 + $0xb48] sm:$0xff]
  %v2271 = vld [vmem:[%s3 + $0xb50] sm:$0xff]
  %v2272 = vld [vmem:[%s3 + $0xb58] sm:$0xff]
  %v2273 = vld [vmem:[%s3 + $0xb60] sm:$0xff]
  %v2274 = vld [vmem:[%s3 + $0xb68] sm:$0xff]
  %v2275 = vld [vmem:[%s3 + $0xb70] sm:$0xff]
  %v2276 = vld [vmem:[%s3 + $0xb78] sm:$0xff]
  %v2277 = vld [vmem:[%s3 + $0xb80] sm:$0xff]
  %v2278 = vld [vmem:[%s3 + $0xb88] sm:$0xff]
  %v2279 = vld [vmem:[%s3 + $0xb90] sm:$0xff]
  %v2280 = vld [vmem:[%s3 + $0xb98] sm:$0xff]
  %v2281 = vld [vmem:[%s3 + $0xba0] sm:$0xff]
  %v2282 = vld [vmem:[%s3 + $0xba8] sm:$0xff]
  %v2283 = vld [vmem:[%s3 + $0xbb0] sm:$0xff]
  %v2284 = vld [vmem:[%s3 + $0xbb8] sm:$0xff]
  %v2285 = vld [vmem:[%s3 + $0xbc0] sm:$0xff]
  %v2286 = vld [vmem:[%s3 + $0xbc8] sm:$0xff]
  %v2287 = vld [vmem:[%s3 + $0xbd0] sm:$0xff]
  %v2288 = vld [vmem:[%s3 + $0xbd8] sm:$0xff]
  %v2289 = vld [vmem:[%s3 + $0xbe0] sm:$0xff]
  %v2290 = vld [vmem:[%s3 + $0xbe8] sm:$0xff]
  %v2291 = vld [vmem:[%s3 + $0xbf0] sm:$0xff]
  %v2292 = vld [vmem:[%s3 + $0xbf8] sm:$0xff]
  %2293 = vmatprep.subr.mxu0 %v2230
  %2294 = vmatpush1.msra.mxu0 %v2229
  %2295 = vmatprep.subr.mxu0 %v2232
  %2296 = vmatpush1.msra.mxu0 %v2231
  %2297 = vmatprep.subr.mxu0 %v2234
  %2298 = vmatpush1.msra.mxu0 %v2233
  %2299 = vmatprep.subr.mxu0 %v2236
  %2300 = vmatpush1.msra.mxu0 %v2235
  %2301 = vmatprep.subr.mxu0 %v2238
  %2302 = vmatpush1.msra.mxu0 %v2237
  %2303 = vmatprep.subr.mxu0 %v2240
  %2304 = vmatpush1.msra.mxu0 %v2239
  %2305 = vmatprep.subr.mxu0 %v2242
  %2306 = vmatpush1.msra.mxu0 %v2241
  %2307 = vmatprep.subr.mxu0 %v2244
  %2308 = vmatpush1.msra.mxu0 %v2243
  %2309 = vmatprep.subr.mxu0 %v2246
  %2310 = vmatpush1.msra.mxu0 %v2245
  %2311 = vmatprep.subr.mxu0 %v2248
  %2312 = vmatpush1.msra.mxu0 %v2247
  %2313 = vmatprep.subr.mxu0 %v2250
  %2314 = vmatpush1.msra.mxu0 %v2249
  %2315 = vmatprep.subr.mxu0 %v2252
  %2316 = vmatpush1.msra.mxu0 %v2251
  %2317 = vmatprep.subr.mxu0 %v2254
  %2318 = vmatpush1.msra.mxu0 %v2253
  %2319 = vmatprep.subr.mxu0 %v2256
  %2320 = vmatpush1.msra.mxu0 %v2255
  %2321 = vmatprep.subr.mxu0 %v2258
  %2322 = vmatpush1.msra.mxu0 %v2257
  %2323 = vmatprep.subr.mxu0 %v2260
  %2324 = vmatpush1.msra.mxu0 %v2259
  %2325 = vmatprep.subr.mxu0 %v2262
  %2326 = vmatpush1.msra.mxu0 %v2261
  %2327 = vmatprep.subr.mxu0 %v2264
  %2328 = vmatpush1.msra.mxu0 %v2263
  %2329 = vmatprep.subr.mxu0 %v2266
  %2330 = vmatpush1.msra.mxu0 %v2265
  %2331 = vmatprep.subr.mxu0 %v2268
  %2332 = vmatpush1.msra.mxu0 %v2267
  %2333 = vmatprep.subr.mxu0 %v2270
  %2334 = vmatpush1.msra.mxu0 %v2269
  %2335 = vmatprep.subr.mxu0 %v2272
  %2336 = vmatpush1.msra.mxu0 %v2271
  %2337 = vmatprep.subr.mxu0 %v2274
  %2338 = vmatpush1.msra.mxu0 %v2273
  %2339 = vmatprep.subr.mxu0 %v2276
  %2340 = vmatpush1.msra.mxu0 %v2275
  %2341 = vmatprep.subr.mxu0 %v2278
  %2342 = vmatpush1.msra.mxu0 %v2277
  %2343 = vmatprep.subr.mxu0 %v2280
  %2344 = vmatpush1.msra.mxu0 %v2279
  %2345 = vmatprep.subr.mxu0 %v2282
  %2346 = vmatpush1.msra.mxu0 %v2281
  %2347 = vmatprep.subr.mxu0 %v2284
  %2348 = vmatpush1.msra.mxu0 %v2283
  %2349 = vmatprep.subr.mxu0 %v2286
  %2350 = vmatpush1.msra.mxu0 %v2285
  %2351 = vmatprep.subr.mxu0 %v2288
  %2352 = vmatpush1.msra.mxu0 %v2287
  %2353 = vmatprep.subr.mxu0 %v2290
  %2354 = vmatpush1.msra.mxu0 %v2289
  %2355 = vmatprep.subr.mxu0 %v2292
  %2356 = vmatpush1.msra.mxu0 %v2291
  %2357 = vmatprep.mubr.f32.mxu0 %v1731
  %2358 = vmatmul.mubr.f32.gmra.mrb[0].mxu0 %v1730
  %v2359 = vpop.f32.mrb[0].mxu0
  %v2360 = vadd.f32 0.0, %v2359
  %v2361 = vpop.f32.mrb[0].mxu0
  %v2362 = vadd.f32 0.0, %v2361
  %2363 = vmatprep.mubr.f32.mxu0 %v1733
  %2364 = vmatmul.mubr.f32.gmra.mrb[0].mxu0 %v1732
  %v2365 = vpop.f32.mrb[0].mxu0
  %v2366 = vadd.f32 0.0, %v2365
  %v2367 = vpop.f32.mrb[0].mxu0
  %v2368 = vadd.f32 0.0, %v2367
  %2369 = vmatprep.mubr.f32.mxu0 %v2226
  %2370 = vmatmul.mubr.f32.gmra.mrb[0].mxu0 %v2225
  %v2371 = vpop.f32.mrb[0].mxu0
  %v2372 = vadd.f32 0.0, %v2371
  %v2373 = vpop.f32.mrb[0].mxu0
  %v2374 = vadd.f32 0.0, %v2373
  %2375 = vmatprep.mubr.f32.mxu0 %v2228
  %2376 = vmatmul.mubr.f32.gmra.mrb[0].mxu0 %v2227
  %v2377 = vpop.f32.mrb[0].mxu0
  %v2378 = vadd.f32 0.0, %v2377
  %v2379 = vpop.f32.mrb[0].mxu0
  %v2380 = vadd.f32 0.0, %v2379
  %2381 = vdwg.mxu0
  %v2382 = vadd.f32 %v2217, %v2360
  %v2383 = vadd.f32 %v2218, %v2362
  %v2384 = vadd.f32 %v2219, %v2366
  %v2385 = vadd.f32 %v2220, %v2368
  %v2386 = vadd.f32 %v2221, %v2372
  %v2387 = vadd.f32 %v2222, %v2374
  %v2388 = vadd.f32 %v2223, %v2378
  %v2389 = vadd.f32 %v2224, %v2380
  %v2390 = vld [vmem:[#allocation2 + $0xc0] sm:$0xff]
  %v2391 = vld [vmem:[#allocation2 + $0xc8] sm:$0xff]
  %v2392 = vld [vmem:[#allocation2 + $0xd0] sm:$0xff]
  %v2393 = vld [vmem:[#allocation2 + $0xd8] sm:$0xff]
  %v2394 = vld [vmem:[%s3 + $0xc00] sm:$0xff]
  %v2395 = vld [vmem:[%s3 + $0xc08] sm:$0xff]
  %v2396 = vld [vmem:[%s3 + $0xc10] sm:$0xff]
  %v2397 = vld [vmem:[%s3 + $0xc18] sm:$0xff]
  %v2398 = vld [vmem:[%s3 + $0xc20] sm:$0xff]
  %v2399 = vld [vmem:[%s3 + $0xc28] sm:$0xff]
  %v2400 = vld [vmem:[%s3 + $0xc30] sm:$0xff]
  %v2401 = vld [vmem:[%s3 + $0xc38] sm:$0xff]
  %v2402 = vld [vmem:[%s3 + $0xc40] sm:$0xff]
  %v2403 = vld [vmem:[%s3 + $0xc48] sm:$0xff]
  %v2404 = vld [vmem:[%s3 + $0xc50] sm:$0xff]
  %v2405 = vld [vmem:[%s3 + $0xc58] sm:$0xff]
  %v2406 = vld [vmem:[%s3 + $0xc60] sm:$0xff]
  %v2407 = vld [vmem:[%s3 + $0xc68] sm:$0xff]
  %v2408 = vld [vmem:[%s3 + $0xc70] sm:$0xff]
  %v2409 = vld [vmem:[%s3 + $0xc78] sm:$0xff]
  %v2410 = vld [vmem:[%s3 + $0xc80] sm:$0xff]
  %v2411 = vld [vmem:[%s3 + $0xc88] sm:$0xff]
  %v2412 = vld [vmem:[%s3 + $0xc90] sm:$0xff]
  %v2413 = vld [vmem:[%s3 + $0xc98] sm:$0xff]
  %v2414 = vld [vmem:[%s3 + $0xca0] sm:$0xff]
  %v2415 = vld [vmem:[%s3 + $0xca8] sm:$0xff]
  %v2416 = vld [vmem:[%s3 + $0xcb0] sm:$0xff]
  %v2417 = vld [vmem:[%s3 + $0xcb8] sm:$0xff]
  %v2418 = vld [vmem:[%s3 + $0xcc0] sm:$0xff]
  %v2419 = vld [vmem:[%s3 + $0xcc8] sm:$0xff]
  %v2420 = vld [vmem:[%s3 + $0xcd0] sm:$0xff]
  %v2421 = vld [vmem:[%s3 + $0xcd8] sm:$0xff]
  %v2422 = vld [vmem:[%s3 + $0xce0] sm:$0xff]
  %v2423 = vld [vmem:[%s3 + $0xce8] sm:$0xff]
  %v2424 = vld [vmem:[%s3 + $0xcf0] sm:$0xff]
  %v2425 = vld [vmem:[%s3 + $0xcf8] sm:$0xff]
  %v2426 = vld [vmem:[%s3 + $0xd00] sm:$0xff]
  %v2427 = vld [vmem:[%s3 + $0xd08] sm:$0xff]
  %v2428 = vld [vmem:[%s3 + $0xd10] sm:$0xff]
  %v2429 = vld [vmem:[%s3 + $0xd18] sm:$0xff]
  %v2430 = vld [vmem:[%s3 + $0xd20] sm:$0xff]
  %v2431 = vld [vmem:[%s3 + $0xd28] sm:$0xff]
  %v2432 = vld [vmem:[%s3 + $0xd30] sm:$0xff]
  %v2433 = vld [vmem:[%s3 + $0xd38] sm:$0xff]
  %v2434 = vld [vmem:[%s3 + $0xd40] sm:$0xff]
  %v2435 = vld [vmem:[%s3 + $0xd48] sm:$0xff]
  %v2436 = vld [vmem:[%s3 + $0xd50] sm:$0xff]
  %v2437 = vld [vmem:[%s3 + $0xd58] sm:$0xff]
  %v2438 = vld [vmem:[%s3 + $0xd60] sm:$0xff]
  %v2439 = vld [vmem:[%s3 + $0xd68] sm:$0xff]
  %v2440 = vld [vmem:[%s3 + $0xd70] sm:$0xff]
  %v2441 = vld [vmem:[%s3 + $0xd78] sm:$0xff]
  %v2442 = vld [vmem:[%s3 + $0xd80] sm:$0xff]
  %v2443 = vld [vmem:[%s3 + $0xd88] sm:$0xff]
  %v2444 = vld [vmem:[%s3 + $0xd90] sm:$0xff]
  %v2445 = vld [vmem:[%s3 + $0xd98] sm:$0xff]
  %v2446 = vld [vmem:[%s3 + $0xda0] sm:$0xff]
  %v2447 = vld [vmem:[%s3 + $0xda8] sm:$0xff]
  %v2448 = vld [vmem:[%s3 + $0xdb0] sm:$0xff]
  %v2449 = vld [vmem:[%s3 + $0xdb8] sm:$0xff]
  %v2450 = vld [vmem:[%s3 + $0xdc0] sm:$0xff]
  %v2451 = vld [vmem:[%s3 + $0xdc8] sm:$0xff]
  %v2452 = vld [vmem:[%s3 + $0xdd0] sm:$0xff]
  %v2453 = vld [vmem:[%s3 + $0xdd8] sm:$0xff]
  %v2454 = vld [vmem:[%s3 + $0xde0] sm:$0xff]
  %v2455 = vld [vmem:[%s3 + $0xde8] sm:$0xff]
  %v2456 = vld [vmem:[%s3 + $0xdf0] sm:$0xff]
  %v2457 = vld [vmem:[%s3 + $0xdf8] sm:$0xff]
  %2458 = vmatprep.subr.mxu0 %v2395
  %2459 = vmatpush1.msra.mxu0 %v2394
  %2460 = vmatprep.subr.mxu0 %v2397
  %2461 = vmatpush1.msra.mxu0 %v2396
  %2462 = vmatprep.subr.mxu0 %v2399
  %2463 = vmatpush1.msra.mxu0 %v2398
  %2464 = vmatprep.subr.mxu0 %v2401
  %2465 = vmatpush1.msra.mxu0 %v2400
  %2466 = vmatprep.subr.mxu0 %v2403
  %2467 = vmatpush1.msra.mxu0 %v2402
  %2468 = vmatprep.subr.mxu0 %v2405
  %2469 = vmatpush1.msra.mxu0 %v2404
  %2470 = vmatprep.subr.mxu0 %v2407
  %2471 = vmatpush1.msra.mxu0 %v2406
  %2472 = vmatprep.subr.mxu0 %v2409
  %2473 = vmatpush1.msra.mxu0 %v2408
  %2474 = vmatprep.subr.mxu0 %v2411
  %2475 = vmatpush1.msra.mxu0 %v2410
  %2476 = vmatprep.subr.mxu0 %v2413
  %2477 = vmatpush1.msra.mxu0 %v2412
  %2478 = vmatprep.subr.mxu0 %v2415
  %2479 = vmatpush1.msra.mxu0 %v2414
  %2480 = vmatprep.subr.mxu0 %v2417
  %2481 = vmatpush1.msra.mxu0 %v2416
  %2482 = vmatprep.subr.mxu0 %v2419
  %2483 = vmatpush1.msra.mxu0 %v2418
  %2484 = vmatprep.subr.mxu0 %v2421
  %2485 = vmatpush1.msra.mxu0 %v2420
  %2486 = vmatprep.subr.mxu0 %v2423
  %2487 = vmatpush1.msra.mxu0 %v2422
  %2488 = vmatprep.subr.mxu0 %v2425
  %2489 = vmatpush1.msra.mxu0 %v2424
  %2490 = vmatprep.subr.mxu0 %v2427
  %2491 = vmatpush1.msra.mxu0 %v2426
  %2492 = vmatprep.subr.mxu0 %v2429
  %2493 = vmatpush1.msra.mxu0 %v2428
  %2494 = vmatprep.subr.mxu0 %v2431
  %2495 = vmatpush1.msra.mxu0 %v2430
  %2496 = vmatprep.subr.mxu0 %v2433
  %2497 = vmatpush1.msra.mxu0 %v2432
  %2498 = vmatprep.subr.mxu0 %v2435
  %2499 = vmatpush1.msra.mxu0 %v2434
  %2500 = vmatprep.subr.mxu0 %v2437
  %2501 = vmatpush1.msra.mxu0 %v2436
  %2502 = vmatprep.subr.mxu0 %v2439
  %2503 = vmatpush1.msra.mxu0 %v2438
  %2504 = vmatprep.subr.mxu0 %v2441
  %2505 = vmatpush1.msra.mxu0 %v2440
  %2506 = vmatprep.subr.mxu0 %v2443
  %2507 = vmatpush1.msra.mxu0 %v2442
  %2508 = vmatprep.subr.mxu0 %v2445
  %2509 = vmatpush1.msra.mxu0 %v2444
  %2510 = vmatprep.subr.mxu0 %v2447
  %2511 = vmatpush1.msra.mxu0 %v2446
  %2512 = vmatprep.subr.mxu0 %v2449
  %2513 = vmatpush1.msra.mxu0 %v2448
  %2514 = vmatprep.subr.mxu0 %v2451
  %2515 = vmatpush1.msra.mxu0 %v2450
  %2516 = vmatprep.subr.mxu0 %v2453
  %2517 = vmatpush1.msra.mxu0 %v2452
  %2518 = vmatprep.subr.mxu0 %v2455
  %2519 = vmatpush1.msra.mxu0 %v2454
  %2520 = vmatprep.subr.mxu0 %v2457
  %2521 = vmatpush1.msra.mxu0 %v2456
  %2522 = vmatprep.mubr.f32.mxu0 %v1896
  %2523 = vmatmul.mubr.f32.gmra.mrb[0].mxu0 %v1895
  %v2524 = vpop.f32.mrb[0].mxu0
  %v2525 = vadd.f32 0.0, %v2524
  %v2526 = vpop.f32.mrb[0].mxu0
  %v2527 = vadd.f32 0.0, %v2526
  %2528 = vmatprep.mubr.f32.mxu0 %v1898
  %2529 = vmatmul.mubr.f32.gmra.mrb[0].mxu0 %v1897
  %v2530 = vpop.f32.mrb[0].mxu0
  %v2531 = vadd.f32 0.0, %v2530
  %v2532 = vpop.f32.mrb[0].mxu0
  %v2533 = vadd.f32 0.0, %v2532
  %2534 = vmatprep.mubr.f32.mxu0 %v2391
  %2535 = vmatmul.mubr.f32.gmra.mrb[0].mxu0 %v2390
  %v2536 = vpop.f32.mrb[0].mxu0
  %v2537 = vadd.f32 0.0, %v2536
  %v2538 = vpop.f32.mrb[0].mxu0
  %v2539 = vadd.f32 0.0, %v2538
  %2540 = vmatprep.mubr.f32.mxu0 %v2393
  %2541 = vmatmul.mubr.f32.gmra.mrb[0].mxu0 %v2392
  %v2542 = vpop.f32.mrb[0].mxu0
  %v2543 = vadd.f32 0.0, %v2542
  %v2544 = vpop.f32.mrb[0].mxu0
  %v2545 = vadd.f32 0.0, %v2544
  %2546 = vdwg.mxu0
  %v2547 = vadd.f32 %v2382, %v2525
  %v2548 = vadd.f32 %v2383, %v2527
  %v2549 = vadd.f32 %v2384, %v2531
  %v2550 = vadd.f32 %v2385, %v2533
  %v2551 = vadd.f32 %v2386, %v2537
  %v2552 = vadd.f32 %v2387, %v2539
  %v2553 = vadd.f32 %v2388, %v2543
  %v2554 = vadd.f32 %v2389, %v2545
  %v2555 = vld [vmem:[#allocation2 + $0xd0] sm:$0xff]
  %v2556 = vld [vmem:[#allocation2 + $0xd8] sm:$0xff]
  %v2557 = vld [vmem:[#allocation2 + $0xe0] sm:$0xff]
  %v2558 = vld [vmem:[#allocation2 + $0xe8] sm:$0xff]
  %v2559 = vld [vmem:[%s3 + $0xe00] sm:$0xff]
  %v2560 = vld [vmem:[%s3 + $0xe08] sm:$0xff]
  %v2561 = vld [vmem:[%s3 + $0xe10] sm:$0xff]
  %v2562 = vld [vmem:[%s3 + $0xe18] sm:$0xff]
  %v2563 = vld [vmem:[%s3 + $0xe20] sm:$0xff]
  %v2564 = vld [vmem:[%s3 + $0xe28] sm:$0xff]
  %v2565 = vld [vmem:[%s3 + $0xe30] sm:$0xff]
  %v2566 = vld [vmem:[%s3 + $0xe38] sm:$0xff]
  %v2567 = vld [vmem:[%s3 + $0xe40] sm:$0xff]
  %v2568 = vld [vmem:[%s3 + $0xe48] sm:$0xff]
  %v2569 = vld [vmem:[%s3 + $0xe50] sm:$0xff]
  %v2570 = vld [vmem:[%s3 + $0xe58] sm:$0xff]
  %v2571 = vld [vmem:[%s3 + $0xe60] sm:$0xff]
  %v2572 = vld [vmem:[%s3 + $0xe68] sm:$0xff]
  %v2573 = vld [vmem:[%s3 + $0xe70] sm:$0xff]
  %v2574 = vld [vmem:[%s3 + $0xe78] sm:$0xff]
  %v2575 = vld [vmem:[%s3 + $0xe80] sm:$0xff]
  %v2576 = vld [vmem:[%s3 + $0xe88] sm:$0xff]
  %v2577 = vld [vmem:[%s3 + $0xe90] sm:$0xff]
  %v2578 = vld [vmem:[%s3 + $0xe98] sm:$0xff]
  %v2579 = vld [vmem:[%s3 + $0xea0] sm:$0xff]
  %v2580 = vld [vmem:[%s3 + $0xea8] sm:$0xff]
  %v2581 = vld [vmem:[%s3 + $0xeb0] sm:$0xff]
  %v2582 = vld [vmem:[%s3 + $0xeb8] sm:$0xff]
  %v2583 = vld [vmem:[%s3 + $0xec0] sm:$0xff]
  %v2584 = vld [vmem:[%s3 + $0xec8] sm:$0xff]
  %v2585 = vld [vmem:[%s3 + $0xed0] sm:$0xff]
  %v2586 = vld [vmem:[%s3 + $0xed8] sm:$0xff]
  %v2587 = vld [vmem:[%s3 + $0xee0] sm:$0xff]
  %v2588 = vld [vmem:[%s3 + $0xee8] sm:$0xff]
  %v2589 = vld [vmem:[%s3 + $0xef0] sm:$0xff]
  %v2590 = vld [vmem:[%s3 + $0xef8] sm:$0xff]
  %v2591 = vld [vmem:[%s3 + $0xf00] sm:$0xff]
  %v2592 = vld [vmem:[%s3 + $0xf08] sm:$0xff]
  %v2593 = vld [vmem:[%s3 + $0xf10] sm:$0xff]
  %v2594 = vld [vmem:[%s3 + $0xf18] sm:$0xff]
  %v2595 = vld [vmem:[%s3 + $0xf20] sm:$0xff]
  %v2596 = vld [vmem:[%s3 + $0xf28] sm:$0xff]
  %v2597 = vld [vmem:[%s3 + $0xf30] sm:$0xff]
  %v2598 = vld [vmem:[%s3 + $0xf38] sm:$0xff]
  %v2599 = vld [vmem:[%s3 + $0xf40] sm:$0xff]
  %v2600 = vld [vmem:[%s3 + $0xf48] sm:$0xff]
  %v2601 = vld [vmem:[%s3 + $0xf50] sm:$0xff]
  %v2602 = vld [vmem:[%s3 + $0xf58] sm:$0xff]
  %v2603 = vld [vmem:[%s3 + $0xf60] sm:$0xff]
  %v2604 = vld [vmem:[%s3 + $0xf68] sm:$0xff]
  %v2605 = vld [vmem:[%s3 + $0xf70] sm:$0xff]
  %v2606 = vld [vmem:[%s3 + $0xf78] sm:$0xff]
  %v2607 = vld [vmem:[%s3 + $0xf80] sm:$0xff]
  %v2608 = vld [vmem:[%s3 + $0xf88] sm:$0xff]
  %v2609 = vld [vmem:[%s3 + $0xf90] sm:$0xff]
  %v2610 = vld [vmem:[%s3 + $0xf98] sm:$0xff]
  %v2611 = vld [vmem:[%s3 + $0xfa0] sm:$0xff]
  %v2612 = vld [vmem:[%s3 + $0xfa8] sm:$0xff]
  %v2613 = vld [vmem:[%s3 + $0xfb0] sm:$0xff]
  %v2614 = vld [vmem:[%s3 + $0xfb8] sm:$0xff]
  %v2615 = vld [vmem:[%s3 + $0xfc0] sm:$0xff]
  %v2616 = vld [vmem:[%s3 + $0xfc8] sm:$0xff]
  %v2617 = vld [vmem:[%s3 + $0xfd0] sm:$0xff]
  %v2618 = vld [vmem:[%s3 + $0xfd8] sm:$0xff]
  %v2619 = vld [vmem:[%s3 + $0xfe0] sm:$0xff]
  %v2620 = vld [vmem:[%s3 + $0xfe8] sm:$0xff]
  %v2621 = vld [vmem:[%s3 + $0xff0] sm:$0xff]
  %v2622 = vld [vmem:[%s3 + $0xff8] sm:$0xff]
  %2623 = vmatprep.subr.mxu0 %v2560
  %2624 = vmatpush1.msra.mxu0 %v2559
  %2625 = vmatprep.subr.mxu0 %v2562
  %2626 = vmatpush1.msra.mxu0 %v2561
  %2627 = vmatprep.subr.mxu0 %v2564
  %2628 = vmatpush1.msra.mxu0 %v2563
  %2629 = vmatprep.subr.mxu0 %v2566
  %2630 = vmatpush1.msra.mxu0 %v2565
  %2631 = vmatprep.subr.mxu0 %v2568
  %2632 = vmatpush1.msra.mxu0 %v2567
  %2633 = vmatprep.subr.mxu0 %v2570
  %2634 = vmatpush1.msra.mxu0 %v2569
  %2635 = vmatprep.subr.mxu0 %v2572
  %2636 = vmatpush1.msra.mxu0 %v2571
  %2637 = vmatprep.subr.mxu0 %v2574
  %2638 = vmatpush1.msra.mxu0 %v2573
  %2639 = vmatprep.subr.mxu0 %v2576
  %2640 = vmatpush1.msra.mxu0 %v2575
  %2641 = vmatprep.subr.mxu0 %v2578
  %2642 = vmatpush1.msra.mxu0 %v2577
  %2643 = vmatprep.subr.mxu0 %v2580
  %2644 = vmatpush1.msra.mxu0 %v2579
  %2645 = vmatprep.subr.mxu0 %v2582
  %2646 = vmatpush1.msra.mxu0 %v2581
  %2647 = vmatprep.subr.mxu0 %v2584
  %2648 = vmatpush1.msra.mxu0 %v2583
  %2649 = vmatprep.subr.mxu0 %v2586
  %2650 = vmatpush1.msra.mxu0 %v2585
  %2651 = vmatprep.subr.mxu0 %v2588
  %2652 = vmatpush1.msra.mxu0 %v2587
  %2653 = vmatprep.subr.mxu0 %v2590
  %2654 = vmatpush1.msra.mxu0 %v2589
  %2655 = vmatprep.subr.mxu0 %v2592
  %2656 = vmatpush1.msra.mxu0 %v2591
  %2657 = vmatprep.subr.mxu0 %v2594
  %2658 = vmatpush1.msra.mxu0 %v2593
  %2659 = vmatprep.subr.mxu0 %v2596
  %2660 = vmatpush1.msra.mxu0 %v2595
  %2661 = vmatprep.subr.mxu0 %v2598
  %2662 = vmatpush1.msra.mxu0 %v2597
  %2663 = vmatprep.subr.mxu0 %v2600
  %2664 = vmatpush1.msra.mxu0 %v2599
  %2665 = vmatprep.subr.mxu0 %v2602
  %2666 = vmatpush1.msra.mxu0 %v2601
  %2667 = vmatprep.subr.mxu0 %v2604
  %2668 = vmatpush1.msra.mxu0 %v2603
  %2669 = vmatprep.subr.mxu0 %v2606
  %2670 = vmatpush1.msra.mxu0 %v2605
  %2671 = vmatprep.subr.mxu0 %v2608
  %2672 = vmatpush1.msra.mxu0 %v2607
  %2673 = vmatprep.subr.mxu0 %v2610
  %2674 = vmatpush1.msra.mxu0 %v2609
  %2675 = vmatprep.subr.mxu0 %v2612
  %2676 = vmatpush1.msra.mxu0 %v2611
  %2677 = vmatprep.subr.mxu0 %v2614
  %2678 = vmatpush1.msra.mxu0 %v2613
  %2679 = vmatprep.subr.mxu0 %v2616
  %2680 = vmatpush1.msra.mxu0 %v2615
  %2681 = vmatprep.subr.mxu0 %v2618
  %2682 = vmatpush1.msra.mxu0 %v2617
  %2683 = vmatprep.subr.mxu0 %v2620
  %2684 = vmatpush1.msra.mxu0 %v2619
  %2685 = vmatprep.subr.mxu0 %v2622
  %2686 = vmatpush1.msra.mxu0 %v2621
  %2687 = vmatprep.mubr.f32.mxu0 %v2061
  %2688 = vmatmul.mubr.f32.gmra.mrb[0].mxu0 %v2060
  %v2689 = vpop.f32.mrb[0].mxu0
  %v2690 = vadd.f32 0.0, %v2689
  %v2691 = vpop.f32.mrb[0].mxu0
  %v2692 = vadd.f32 0.0, %v2691
  %2693 = vmatprep.mubr.f32.mxu0 %v2063
  %2694 = vmatmul.mubr.f32.gmra.mrb[0].mxu0 %v2062
  %v2695 = vpop.f32.mrb[0].mxu0
  %v2696 = vadd.f32 0.0, %v2695
  %v2697 = vpop.f32.mrb[0].mxu0
  %v2698 = vadd.f32 0.0, %v2697
  %2699 = vmatprep.mubr.f32.mxu0 %v2556
  %2700 = vmatmul.mubr.f32.gmra.mrb[0].mxu0 %v2555
  %v2701 = vpop.f32.mrb[0].mxu0
  %v2702 = vadd.f32 0.0, %v2701
  %v2703 = vpop.f32.mrb[0].mxu0
  %v2704 = vadd.f32 0.0, %v2703
  %2705 = vmatprep.mubr.f32.mxu0 %v2558
  %2706 = vmatmul.mubr.f32.gmra.mrb[0].mxu0 %v2557
  %v2707 = vpop.f32.mrb[0].mxu0
  %v2708 = vadd.f32 0.0, %v2707
  %v2709 = vpop.f32.mrb[0].mxu0
  %v2710 = vadd.f32 0.0, %v2709
  %2711 = vdwg.mxu0
  %v2712 = vadd.f32 %v2547, %v2690
  %v2713 = vadd.f32 %v2548, %v2692
  %v2714 = vadd.f32 %v2549, %v2696
  %v2715 = vadd.f32 %v2550, %v2698
  %v2716 = vadd.f32 %v2551, %v2702
  %v2717 = vadd.f32 %v2552, %v2704
  %v2718 = vadd.f32 %v2553, %v2708
  %v2719 = vadd.f32 %v2554, %v2710
  %v2720 = vld [vmem:[#allocation2 + $0xe0] sm:$0xff]
  %v2721 = vld [vmem:[#allocation2 + $0xe8] sm:$0xff]
  %v2722 = vld [vmem:[#allocation2 + $0xf0] sm:$0xff]
  %v2723 = vld [vmem:[#allocation2 + $0xf8] sm:$0xff]
  %v2724 = vld [vmem:[%s3 + $0x1000] sm:$0xff]
  %v2725 = vld [vmem:[%s3 + $0x1008] sm:$0xff]
  %v2726 = vld [vmem:[%s3 + $0x1010] sm:$0xff]
  %v2727 = vld [vmem:[%s3 + $0x1018] sm:$0xff]
  %v2728 = vld [vmem:[%s3 + $0x1020] sm:$0xff]
  %v2729 = vld [vmem:[%s3 + $0x1028] sm:$0xff]
  %v2730 = vld [vmem:[%s3 + $0x1030] sm:$0xff]
  %v2731 = vld [vmem:[%s3 + $0x1038] sm:$0xff]
  %v2732 = vld [vmem:[%s3 + $0x1040] sm:$0xff]
  %v2733 = vld [vmem:[%s3 + $0x1048] sm:$0xff]
  %v2734 = vld [vmem:[%s3 + $0x1050] sm:$0xff]
  %v2735 = vld [vmem:[%s3 + $0x1058] sm:$0xff]
  %v2736 = vld [vmem:[%s3 + $0x1060] sm:$0xff]
  %v2737 = vld [vmem:[%s3 + $0x1068] sm:$0xff]
  %v2738 = vld [vmem:[%s3 + $0x1070] sm:$0xff]
  %v2739 = vld [vmem:[%s3 + $0x1078] sm:$0xff]
  %v2740 = vld [vmem:[%s3 + $0x1080] sm:$0xff]
  %v2741 = vld [vmem:[%s3 + $0x1088] sm:$0xff]
  %v2742 = vld [vmem:[%s3 + $0x1090] sm:$0xff]
  %v2743 = vld [vmem:[%s3 + $0x1098] sm:$0xff]
  %v2744 = vld [vmem:[%s3 + $0x10a0] sm:$0xff]
  %v2745 = vld [vmem:[%s3 + $0x10a8] sm:$0xff]
  %v2746 = vld [vmem:[%s3 + $0x10b0] sm:$0xff]
  %v2747 = vld [vmem:[%s3 + $0x10b8] sm:$0xff]
  %v2748 = vld [vmem:[%s3 + $0x10c0] sm:$0xff]
  %v2749 = vld [vmem:[%s3 + $0x10c8] sm:$0xff]
  %v2750 = vld [vmem:[%s3 + $0x10d0] sm:$0xff]
  %v2751 = vld [vmem:[%s3 + $0x10d8] sm:$0xff]
  %v2752 = vld [vmem:[%s3 + $0x10e0] sm:$0xff]
  %v2753 = vld [vmem:[%s3 + $0x10e8] sm:$0xff]
  %v2754 = vld [vmem:[%s3 + $0x10f0] sm:$0xff]
  %v2755 = vld [vmem:[%s3 + $0x10f8] sm:$0xff]
  %v2756 = vld [vmem:[%s3 + $0x1100] sm:$0xff]
  %v2757 = vld [vmem:[%s3 + $0x1108] sm:$0xff]
  %v2758 = vld [vmem:[%s3 + $0x1110] sm:$0xff]
  %v2759 = vld [vmem:[%s3 + $0x1118] sm:$0xff]
  %v2760 = vld [vmem:[%s3 + $0x1120] sm:$0xff]
  %v2761 = vld [vmem:[%s3 + $0x1128] sm:$0xff]
  %v2762 = vld [vmem:[%s3 + $0x1130] sm:$0xff]
  %v2763 = vld [vmem:[%s3 + $0x1138] sm:$0xff]
  %v2764 = vld [vmem:[%s3 + $0x1140] sm:$0xff]
  %v2765 = vld [vmem:[%s3 + $0x1148] sm:$0xff]
  %v2766 = vld [vmem:[%s3 + $0x1150] sm:$0xff]
  %v2767 = vld [vmem:[%s3 + $0x1158] sm:$0xff]
  %v2768 = vld [vmem:[%s3 + $0x1160] sm:$0xff]
  %v2769 = vld [vmem:[%s3 + $0x1168] sm:$0xff]
  %v2770 = vld [vmem:[%s3 + $0x1170] sm:$0xff]
  %v2771 = vld [vmem:[%s3 + $0x1178] sm:$0xff]
  %v2772 = vld [vmem:[%s3 + $0x1180] sm:$0xff]
  %v2773 = vld [vmem:[%s3 + $0x1188] sm:$0xff]
  %v2774 = vld [vmem:[%s3 + $0x1190] sm:$0xff]
  %v2775 = vld [vmem:[%s3 + $0x1198] sm:$0xff]
  %v2776 = vld [vmem:[%s3 + $0x11a0] sm:$0xff]
  %v2777 = vld [vmem:[%s3 + $0x11a8] sm:$0xff]
  %v2778 = vld [vmem:[%s3 + $0x11b0] sm:$0xff]
  %v2779 = vld [vmem:[%s3 + $0x11b8] sm:$0xff]
  %v2780 = vld [vmem:[%s3 + $0x11c0] sm:$0xff]
  %v2781 = vld [vmem:[%s3 + $0x11c8] sm:$0xff]
  %v2782 = vld [vmem:[%s3 + $0x11d0] sm:$0xff]
  %v2783 = vld [vmem:[%s3 + $0x11d8] sm:$0xff]
  %v2784 = vld [vmem:[%s3 + $0x11e0] sm:$0xff]
  %v2785 = vld [vmem:[%s3 + $0x11e8] sm:$0xff]
  %v2786 = vld [vmem:[%s3 + $0x11f0] sm:$0xff]
  %v2787 = vld [vmem:[%s3 + $0x11f8] sm:$0xff]
  %2788 = vmatprep.subr.mxu0 %v2725
  %2789 = vmatpush1.msra.mxu0 %v2724
  %2790 = vmatprep.subr.mxu0 %v2727
  %2791 = vmatpush1.msra.mxu0 %v2726
  %2792 = vmatprep.subr.mxu0 %v2729
  %2793 = vmatpush1.msra.mxu0 %v2728
  %2794 = vmatprep.subr.mxu0 %v2731
  %2795 = vmatpush1.msra.mxu0 %v2730
  %2796 = vmatprep.subr.mxu0 %v2733
  %2797 = vmatpush1.msra.mxu0 %v2732
  %2798 = vmatprep.subr.mxu0 %v2735
  %2799 = vmatpush1.msra.mxu0 %v2734
  %2800 = vmatprep.subr.mxu0 %v2737
  %2801 = vmatpush1.msra.mxu0 %v2736
  %2802 = vmatprep.subr.mxu0 %v2739
  %2803 = vmatpush1.msra.mxu0 %v2738
  %2804 = vmatprep.subr.mxu0 %v2741
  %2805 = vmatpush1.msra.mxu0 %v2740
  %2806 = vmatprep.subr.mxu0 %v2743
  %2807 = vmatpush1.msra.mxu0 %v2742
  %2808 = vmatprep.subr.mxu0 %v2745
  %2809 = vmatpush1.msra.mxu0 %v2744
  %2810 = vmatprep.subr.mxu0 %v2747
  %2811 = vmatpush1.msra.mxu0 %v2746
  %2812 = vmatprep.subr.mxu0 %v2749
  %2813 = vmatpush1.msra.mxu0 %v2748
  %2814 = vmatprep.subr.mxu0 %v2751
  %2815 = vmatpush1.msra.mxu0 %v2750
  %2816 = vmatprep.subr.mxu0 %v2753
  %2817 = vmatpush1.msra.mxu0 %v2752
  %2818 = vmatprep.subr.mxu0 %v2755
  %2819 = vmatpush1.msra.mxu0 %v2754
  %2820 = vmatprep.subr.mxu0 %v2757
  %2821 = vmatpush1.msra.mxu0 %v2756
  %2822 = vmatprep.subr.mxu0 %v2759
  %2823 = vmatpush1.msra.mxu0 %v2758
  %2824 = vmatprep.subr.mxu0 %v2761
  %2825 = vmatpush1.msra.mxu0 %v2760
  %2826 = vmatprep.subr.mxu0 %v2763
  %2827 = vmatpush1.msra.mxu0 %v2762
  %2828 = vmatprep.subr.mxu0 %v2765
  %2829 = vmatpush1.msra.mxu0 %v2764
  %2830 = vmatprep.subr.mxu0 %v2767
  %2831 = vmatpush1.msra.mxu0 %v2766
  %2832 = vmatprep.subr.mxu0 %v2769
  %2833 = vmatpush1.msra.mxu0 %v2768
  %2834 = vmatprep.subr.mxu0 %v2771
  %2835 = vmatpush1.msra.mxu0 %v2770
  %2836 = vmatprep.subr.mxu0 %v2773
  %2837 = vmatpush1.msra.mxu0 %v2772
  %2838 = vmatprep.subr.mxu0 %v2775
  %2839 = vmatpush1.msra.mxu0 %v2774
  %2840 = vmatprep.subr.mxu0 %v2777
  %2841 = vmatpush1.msra.mxu0 %v2776
  %2842 = vmatprep.subr.mxu0 %v2779
  %2843 = vmatpush1.msra.mxu0 %v2778
  %2844 = vmatprep.subr.mxu0 %v2781
  %2845 = vmatpush1.msra.mxu0 %v2780
  %2846 = vmatprep.subr.mxu0 %v2783
  %2847 = vmatpush1.msra.mxu0 %v2782
  %2848 = vmatprep.subr.mxu0 %v2785
  %2849 = vmatpush1.msra.mxu0 %v2784
  %2850 = vmatprep.subr.mxu0 %v2787
  %2851 = vmatpush1.msra.mxu0 %v2786
  %2852 = vmatprep.mubr.f32.mxu0 %v2226
  %2853 = vmatmul.mubr.f32.gmra.mrb[0].mxu0 %v2225
  %v2854 = vpop.f32.mrb[0].mxu0
  %v2855 = vadd.f32 0.0, %v2854
  %v2856 = vpop.f32.mrb[0].mxu0
  %v2857 = vadd.f32 0.0, %v2856
  %2858 = vmatprep.mubr.f32.mxu0 %v2228
  %2859 = vmatmul.mubr.f32.gmra.mrb[0].mxu0 %v2227
  %v2860 = vpop.f32.mrb[0].mxu0
  %v2861 = vadd.f32 0.0, %v2860
  %v2862 = vpop.f32.mrb[0].mxu0
  %v2863 = vadd.f32 0.0, %v2862
  %2864 = vmatprep.mubr.f32.mxu0 %v2721
  %2865 = vmatmul.mubr.f32.gmra.mrb[0].mxu0 %v2720
  %v2866 = vpop.f32.mrb[0].mxu0
  %v2867 = vadd.f32 0.0, %v2866
  %v2868 = vpop.f32.mrb[0].mxu0
  %v2869 = vadd.f32 0.0, %v2868
  %2870 = vmatprep.mubr.f32.mxu0 %v2723
  %2871 = vmatmul.mubr.f32.gmra.mrb[0].mxu0 %v2722
  %v2872 = vpop.f32.mrb[0].mxu0
  %v2873 = vadd.f32 0.0, %v2872
  %v2874 = vpop.f32.mrb[0].mxu0
  %v2875 = vadd.f32 0.0, %v2874
  %2876 = vdwg.mxu0
  %v2877 = vadd.f32 %v2712, %v2855
  %v2878 = vadd.f32 %v2713, %v2857
  %v2879 = vadd.f32 %v2714, %v2861
  %v2880 = vadd.f32 %v2715, %v2863
  %v2881 = vadd.f32 %v2716, %v2867
  %v2882 = vadd.f32 %v2717, %v2869
  %v2883 = vadd.f32 %v2718, %v2873
  %v2884 = vadd.f32 %v2719, %v2875
  %v2885 = vld [vmem:[%s4] sm:$0x3]
  %v2887 = vlaneseq
  %v2888 = vshrl.u32 %v2887, 7
  %v2889 = vsub.s32 0, %v2888
  %v2890 = vrot.slane %v2885, %v2889
  %v2891 = vlaneseq
  %v2892 = vshrl.u32 %v2891, 7
  %v2893 = vsub.s32 1, %v2892
  %v2894 = vrot.slane %v2885, %v2893
  %v2897 = vadd.f32 %v2877, %v2890
  %v2898 = vadd.f32 %v2878, %v2894
  %v2899 = vadd.f32 %v2879, %v2890
  %v2900 = vadd.f32 %v2880, %v2894
  %v2901 = vadd.f32 %v2881, %v2890
  %v2902 = vadd.f32 %v2882, %v2894
  %v2903 = vadd.f32 %v2883, %v2890
  %v2904 = vadd.f32 %v2884, %v2894
  %v2905 = vmax.f32 %v2897, %v2899
  %v2906 = vmax.f32 %v2898, %v2900
  %v2907 = vmax.f32 %v2901, %v2903
  %v2908 = vmax.f32 %v2902, %v2904
  %v2909 = vmax.f32 %v2905, %v2907
  %v2910 = vmax.f32 %v2906, %v2908
  %v2911 = vld [vmem:[%s5] sm:$0xff]
  %v2912 = vld [vmem:[%s5 + $0x8] sm:$0xff]
  %v2913 = vld [vmem:[%s5 + $0x10] sm:$0xff]
  %v2914 = vld [vmem:[%s5 + $0x18] sm:$0xff]
  %v2915 = vld [vmem:[%s5 + $0x20] sm:$0xff]
  %v2916 = vld [vmem:[%s5 + $0x28] sm:$0xff]
  %v2917 = vld [vmem:[%s5 + $0x30] sm:$0xff]
  %v2918 = vld [vmem:[%s5 + $0x38] sm:$0xff]
  %v2919 = vld [vmem:[%s5 + $0x40] sm:$0xff]
  %v2920 = vld [vmem:[%s5 + $0x48] sm:$0xff]
  %v2921 = vld [vmem:[%s5 + $0x50] sm:$0xff]
  %v2922 = vld [vmem:[%s5 + $0x58] sm:$0xff]
  %v2923 = vld [vmem:[%s5 + $0x60] sm:$0xff]
  %v2924 = vld [vmem:[%s5 + $0x68] sm:$0xff]
  %v2925 = vld [vmem:[%s5 + $0x70] sm:$0xff]
  %v2926 = vld [vmem:[%s5 + $0x78] sm:$0xff]
  %v2927 = vld [vmem:[%s5 + $0x80] sm:$0xff]
  %v2928 = vld [vmem:[%s5 + $0x88] sm:$0xff]
  %v2929 = vld [vmem:[%s5 + $0x90] sm:$0xff]
  %v2930 = vld [vmem:[%s5 + $0x98] sm:$0xff]
  %v2931 = vld [vmem:[%s5 + $0xa0] sm:$0xff]
  %v2932 = vld [vmem:[%s5 + $0xa8] sm:$0xff]
  %v2933 = vld [vmem:[%s5 + $0xb0] sm:$0xff]
  %v2934 = vld [vmem:[%s5 + $0xb8] sm:$0xff]
  %v2935 = vld [vmem:[%s5 + $0xc0] sm:$0xff]
  %v2936 = vld [vmem:[%s5 + $0xc8] sm:$0xff]
  %v2937 = vld [vmem:[%s5 + $0xd0] sm:$0xff]
  %v2938 = vld [vmem:[%s5 + $0xd8] sm:$0xff]
  %v2939 = vld [vmem:[%s5 + $0xe0] sm:$0xff]
  %v2940 = vld [vmem:[%s5 + $0xe8] sm:$0xff]
  %v2941 = vld [vmem:[%s5 + $0xf0] sm:$0xff]
  %v2942 = vld [vmem:[%s5 + $0xf8] sm:$0xff]
  %v2943 = vld [vmem:[%s6] sm:$0x1]
  %v2945 = vlaneseq
  %v2946 = vshrl.u32 %v2945, 7
  %v2947 = vsub.s32 0, %v2946
  %v2948 = vrot.slane %v2943, %v2947
  %2950 = vmatprep.subr.mxu0 0.0
  %2951 = vmatpush1.msra.mxu0 %v2911
  %2952 = vmatprep.subr.mxu0 0.0
  %2953 = vmatpush1.msra.mxu0 %v2912
  %2954 = vmatprep.subr.mxu0 0.0
  %2955 = vmatpush1.msra.mxu0 %v2913
  %2956 = vmatprep.subr.mxu0 0.0
  %2957 = vmatpush1.msra.mxu0 %v2914
  %2958 = vmatprep.subr.mxu0 0.0
  %2959 = vmatpush1.msra.mxu0 %v2915
  %2960 = vmatprep.subr.mxu0 0.0
  %2961 = vmatpush1.msra.mxu0 %v2916
  %2962 = vmatprep.subr.mxu0 0.0
  %2963 = vmatpush1.msra.mxu0 %v2917
  %2964 = vmatprep.subr.mxu0 0.0
  %2965 = vmatpush1.msra.mxu0 %v2918
  %2966 = vmatprep.subr.mxu0 0.0
  %2967 = vmatpush1.msra.mxu0 %v2919
  %2968 = vmatprep.subr.mxu0 0.0
  %2969 = vmatpush1.msra.mxu0 %v2920
  %2970 = vmatprep.subr.mxu0 0.0
  %2971 = vmatpush1.msra.mxu0 %v2921
  %2972 = vmatprep.subr.mxu0 0.0
  %2973 = vmatpush1.msra.mxu0 %v2922
  %2974 = vmatprep.subr.mxu0 0.0
  %2975 = vmatpush1.msra.mxu0 %v2923
  %2976 = vmatprep.subr.mxu0 0.0
  %2977 = vmatpush1.msra.mxu0 %v2924
  %2978 = vmatprep.subr.mxu0 0.0
  %2979 = vmatpush1.msra.mxu0 %v2925
  %2980 = vmatprep.subr.mxu0 0.0
  %2981 = vmatpush1.msra.mxu0 %v2926
  %2982 = vmatprep.subr.mxu0 0.0
  %2983 = vmatpush1.msra.mxu0 %v2927
  %2984 = vmatprep.subr.mxu0 0.0
  %2985 = vmatpush1.msra.mxu0 %v2928
  %2986 = vmatprep.subr.mxu0 0.0
  %2987 = vmatpush1.msra.mxu0 %v2929
  %2988 = vmatprep.subr.mxu0 0.0
  %2989 = vmatpush1.msra.mxu0 %v2930
  %2990 = vmatprep.subr.mxu0 0.0
  %2991 = vmatpush1.msra.mxu0 %v2931
  %2992 = vmatprep.subr.mxu0 0.0
  %2993 = vmatpush1.msra.mxu0 %v2932
  %2994 = vmatprep.subr.mxu0 0.0
  %2995 = vmatpush1.msra.mxu0 %v2933
  %2996 = vmatprep.subr.mxu0 0.0
  %2997 = vmatpush1.msra.mxu0 %v2934
  %2998 = vmatprep.subr.mxu0 0.0
  %2999 = vmatpush1.msra.mxu0 %v2935
  %3000 = vmatprep.subr.mxu0 0.0
  %3001 = vmatpush1.msra.mxu0 %v2936
  %3002 = vmatprep.subr.mxu0 0.0
  %3003 = vmatpush1.msra.mxu0 %v2937
  %3004 = vmatprep.subr.mxu0 0.0
  %3005 = vmatpush1.msra.mxu0 %v2938
  %3006 = vmatprep.subr.mxu0 0.0
  %3007 = vmatpush1.msra.mxu0 %v2939
  %3008 = vmatprep.subr.mxu0 0.0
  %3009 = vmatpush1.msra.mxu0 %v2940
  %3010 = vmatprep.subr.mxu0 0.0
  %3011 = vmatpush1.msra.mxu0 %v2941
  %3012 = vmatprep.subr.mxu0 0.0
  %3013 = vmatpush1.msra.mxu0 %v2942
  %3014 = vmatprep.mubr.f32.mxu0 %v2910
  %3015 = vmatmul.mubr.f32.gmra.mrb[0].mxu0 %v2909
  %v3016 = vpop.f32.mrb[0].mxu0
  %v3017 = vadd.f32 %v2948, %v3016
  %v3018 = vpop.f32.mrb[0].mxu0
  %3019 = vdwg.mxu0
  %v3020 = vld [vmem:[%s7] sm:$0xff]
  %v3021 = vld [vmem:[%s7 + $0x8] sm:$0xff]
  %v3022 = vld [vmem:[%s7 + $0x10] sm:$0xff]
  %v3023 = vld [vmem:[%s7 + $0x18] sm:$0xff]
  %v3024 = vld [vmem:[%s7 + $0x20] sm:$0xff]
  %v3025 = vld [vmem:[%s7 + $0x28] sm:$0xff]
  %v3026 = vld [vmem:[%s7 + $0x30] sm:$0xff]
  %v3027 = vld [vmem:[%s7 + $0x38] sm:$0xff]
  %v3028 = vld [vmem:[%s8] sm:$0x1]
  %v3030 = vlaneseq
  %v3031 = vshrl.u32 %v3030, 7
  %v3032 = vsub.s32 0, %v3031
  %v3033 = vrot.slane %v3028, %v3032
  %vm3035 = vcmask 523264
  %v3037 = vsel %vm3035, %v3017, 0
  %3039 = vmatprep.subr.mxu0 0.0
  %3040 = vmatpush1.msra.mxu0 %v3020
  %3041 = vmatprep.subr.mxu0 0.0
  %3042 = vmatpush1.msra.mxu0 %v3021
  %3043 = vmatprep.subr.mxu0 0.0
  %3044 = vmatpush1.msra.mxu0 %v3022
  %3045 = vmatprep.subr.mxu0 0.0
  %3046 = vmatpush1.msra.mxu0 %v3023
  %3047 = vmatprep.subr.mxu0 0.0
  %3048 = vmatpush1.msra.mxu0 %v3024
  %3049 = vmatprep.subr.mxu0 0.0
  %3050 = vmatpush1.msra.mxu0 %v3025
  %3051 = vmatprep.subr.mxu0 0.0
  %3052 = vmatpush1.msra.mxu0 %v3026
  %3053 = vmatprep.subr.mxu0 0.0
  %3054 = vmatpush1.msra.mxu0 %v3027
  %3055 = vmatprep.subr.mxu0 0.0
  %3056 = vmatpush1.msra.mxu0 0.0
  %3057 = vmatprep.subr.mxu0 0.0
  %3058 = vmatpush1.msra.mxu0 0.0
  %3059 = vmatprep.subr.mxu0 0.0
  %3060 = vmatpush1.msra.mxu0 0.0
  %3061 = vmatprep.subr.mxu0 0.0
  %3062 = vmatpush1.msra.mxu0 0.0
  %3063 = vmatprep.subr.mxu0 0.0
  %3064 = vmatpush1.msra.mxu0 0.0
  %3065 = vmatprep.subr.mxu0 0.0
  %3066 = vmatpush1.msra.mxu0 0.0
  %3067 = vmatprep.subr.mxu0 0.0
  %3068 = vmatpush1.msra.mxu0 0.0
  %3069 = vmatprep.subr.mxu0 0.0
  %3070 = vmatpush1.msra.mxu0 0.0
  %3071 = vmatprep.subr.mxu0 0.0
  %3072 = vmatpush1.msra.mxu0 0.0
  %3073 = vmatprep.subr.mxu0 0.0
  %3074 = vmatpush1.msra.mxu0 0.0
  %3075 = vmatprep.subr.mxu0 0.0
  %3076 = vmatpush1.msra.mxu0 0.0
  %3077 = vmatprep.subr.mxu0 0.0
  %3078 = vmatpush1.msra.mxu0 0.0
  %3079 = vmatprep.subr.mxu0 0.0
  %3080 = vmatpush1.msra.mxu0 0.0
  %3081 = vmatprep.subr.mxu0 0.0
  %3082 = vmatpush1.msra.mxu0 0.0
  %3083 = vmatprep.subr.mxu0 0.0
  %3084 = vmatpush1.msra.mxu0 0.0
  %3085 = vmatprep.subr.mxu0 0.0
  %3086 = vmatpush1.msra.mxu0 0.0
  %3087 = vmatprep.subr.mxu0 0.0
  %3088 = vmatpush1.msra.mxu0 0.0
  %3089 = vmatprep.subr.mxu0 0.0
  %3090 = vmatpush1.msra.mxu0 0.0
  %3091 = vmatprep.subr.mxu0 0.0
  %3092 = vmatpush1.msra.mxu0 0.0
  %3093 = vmatprep.subr.mxu0 0.0
  %3094 = vmatpush1.msra.mxu0 0.0
  %3095 = vmatprep.subr.mxu0 0.0
  %3096 = vmatpush1.msra.mxu0 0.0
  %3097 = vmatprep.subr.mxu0 0.0
  %3098 = vmatpush1.msra.mxu0 0.0
  %3099 = vmatprep.subr.mxu0 0.0
  %3100 = vmatpush1.msra.mxu0 0.0
  %3101 = vmatprep.subr.mxu0 0.0
  %3102 = vmatpush1.msra.mxu0 0.0
  %3103 = vmatprep.mubr.f32.mxu0 0.0
  %3104 = vmatmul.mubr.f32.gmra.mrb[0].mxu0 %v3037
  %v3105 = vpop.f32.mrb[0].mxu0
  %v3106 = vadd.f32 %v3033, %v3105
  %v3107 = vpop.f32.mrb[0].mxu0
  %3108 = vdwg.mxu0
  %3109 = vst [vmem:[%s9] sm:$0xff] %v3106
  // Predicated region
  $region38: #{net_forward.1} parent=0 // pred_check
    _
  $region39: #{net_forward.1} parent=0 // pred_check_branch
    %3111 = sbr.rel (0) target = $region41
  $region40: #{net_forward.1} parent=0 // pred_region
    _
  $region41: #{net_forward.1} parent=0 // pred_fallthru
    _
  // Predicated region
  $region42: #{net_forward.1} parent=0 // pred_check
    _
  $region43: #{net_forward.1} parent=0 // pred_check_branch
    %3113 = sbr.rel (0) target = $region45
  $region44: #{net_forward.1} parent=0 // pred_region
    _
  $region45: #{net_forward.1} parent=0 // pred_fallthru
    _

</llo_original>
